<compile_context>
chip_gen: v7x
topology: tpu7x:2x2x1
jax: 0.10.0
libtpu: 0.0.40
codegen_flags: <defaults>
</compile_context>

<pallas_src>
import jax
import jax.numpy as jnp
from jax.experimental import pallas as pl
from jax.experimental.pallas import tpu as pltpu

KSIZE = 7
PAD = 3


def _make_fuser_kernel(H, W, C, Cr, lpad_lanes):
    WC = W * C
    inv_hw = 1.0 / float(H * W)

    def kernel(bconv_s, b1_s, x_ref, wt_ref, r_ref, e_ref, w1t_ref, w2t_ref,
               b2t_ref, out_ref, xpad_s):
        x = x_ref[0]                                      # (H, W*C), lane-dense

        # Zero-padded image lives only in VMEM scratch (no HBM pad round trip).
        # The interior starts at a 128-aligned lane offset -> unmasked store.
        xpad_s[...] = jnp.zeros_like(xpad_s)
        xpad_s[PAD:PAD + H, lpad_lanes:lpad_lanes + WC] = x

        # ---- 7x7 spatial conv: 49 VPU FMAs into one (H, W*C) accumulator ----
        acc = jnp.zeros((H, WC), jnp.float32)
        for kw in range(KSIZE):
            s = lpad_lanes - PAD * C + kw * C
            col_slab = xpad_s[:, s:s + WC]                # one strided load / kw
            for kh in range(KSIZE):
                patch = col_slab[kh:kh + H, :]            # sublane shift of slab
                tap = kh * KSIZE + kw
                acc = acc + patch * wt_ref[tap:tap + 1, :]

        # Single channel reduction after the tap loop: grouped sum -> (H, W),
        # add bias, sigmoid, then broadcast back to all C lanes of each pixel.
        # Both steps are tiny MXU matmuls with 0/1 matrices (MXU is idle and
        # this avoids 49 XLU lane-reductions and any vector reshapes).
        conv = jnp.dot(acc, r_ref[...], preferred_element_type=jnp.float32)
        spatial_hw = jax.nn.sigmoid(conv + bconv_s[0])                # (H, W)
        spatial = jnp.dot(spatial_hw, e_ref[...],
                          preferred_element_type=jnp.float32)         # (H, W*C)

        # ---- SE channel attention, VPU only (no degenerate M=1 matmuls) ----
        # avg-pool + squeeze collapse into Cr full reductions against W-tiled
        # squeeze weights; excite is Cr scalar * vector FMAs.
        ch = b2t_ref[...]                                              # (1, W*C)
        for j in range(Cr):
            t = jnp.sum(x * w1t_ref[j:j + 1, :]) * inv_hw + b1_s[j]
            ch = ch + jnp.maximum(t, 0.0) * w2t_ref[j:j + 1, :]
        channel = jax.nn.sigmoid(ch)                                   # (1, W*C)

        out_ref[0] = x * spatial * channel                 # lane-dense store

    return kernel


@jax.jit
def multimodal_feature_fuser(x_nchw, wconv, bconv, w1, b1, w2, b2):
    """x_nchw: (N, C, H, W) float32. Returns (N, C, H, W)."""
    N, C, H, W = x_nchw.shape
    Cr = w1.shape[1]
    WC = W * C
    HP = H + 2 * PAD
    # left lane-pad of the scratch rounded up so the interior store is aligned
    lpad_lanes = ((PAD * C + 127) // 128) * 128
    scratch_lanes = lpad_lanes + WC + PAD * C

    # layout glue: NCHW -> NHWC -> fold (W, C) onto the 128-lane axis.
    x_fold = jnp.transpose(x_nchw, (0, 2, 3, 1)).reshape(N, H, WC)

    # tap weights / SE weights pre-tiled along W so they broadcast on the
    # folded lane axis (lane index = w*C + c).
    wtile = jnp.tile(wconv.reshape(KSIZE * KSIZE, 1, C),
                     (1, W, 1)).reshape(KSIZE * KSIZE, WC)
    w1tile = jnp.tile(w1.T.reshape(Cr, 1, C), (1, W, 1)).reshape(Cr, WC)
    w2tile = jnp.tile(w2.reshape(Cr, 1, C), (1, W, 1)).reshape(Cr, WC)
    b2tile = jnp.tile(b2.reshape(1, 1, C), (1, W, 1)).reshape(1, WC)

    # 0/1 matrices: R sums every C-lane group -> (H, W); E broadcasts back.
    eye_w = jnp.eye(W, dtype=jnp.float32)
    r_mat = jnp.kron(eye_w, jnp.ones((C, 1), jnp.float32))    # (W*C, W)
    e_mat = jnp.kron(eye_w, jnp.ones((1, C), jnp.float32))    # (W, W*C)

    bconv_s = bconv.reshape(1).astype(jnp.float32)            # SMEM scalar
    b1_s = b1.reshape(Cr).astype(jnp.float32)                 # SMEM scalars

    kernel = _make_fuser_kernel(H, W, C, Cr, lpad_lanes)

    out_fold = pl.pallas_call(
        kernel,
        out_shape=jax.ShapeDtypeStruct((N, H, WC), jnp.float32),
        grid_spec=pltpu.PrefetchScalarGridSpec(
            num_scalar_prefetch=2,
            grid=(N,),
            in_specs=[
                pl.BlockSpec((1, H, WC), lambda n, *_: (n, 0, 0)),
                pl.BlockSpec((KSIZE * KSIZE, WC), lambda n, *_: (0, 0)),
                pl.BlockSpec((WC, W), lambda n, *_: (0, 0)),
                pl.BlockSpec((W, WC), lambda n, *_: (0, 0)),
                pl.BlockSpec((Cr, WC), lambda n, *_: (0, 0)),
                pl.BlockSpec((Cr, WC), lambda n, *_: (0, 0)),
                pl.BlockSpec((1, WC), lambda n, *_: (0, 0)),
            ],
            out_specs=pl.BlockSpec((1, H, WC), lambda n, *_: (n, 0, 0)),
            scratch_shapes=[pltpu.VMEM((HP, scratch_lanes), jnp.float32)],
        ),
        compiler_params=pltpu.CompilerParams(
            dimension_semantics=("parallel",)),
    )(bconv_s, b1_s, x_fold, wtile, r_mat, e_mat, w1tile, w2tile, b2tile)

    return jnp.transpose(out_fold.reshape(N, H, W, C), (0, 3, 1, 2))  # NCHW


def _reference(x_nchw, wconv, bconv, w1, b1, w2, b2):
    """Pure-JAX reference mirroring the PyTorch forward (NCHW)."""
    w_oihw = jnp.transpose(wconv, (2, 0, 1))[None]                    # (1,C,7,7)
    conv = jax.lax.conv_general_dilated(
        x_nchw, w_oihw, window_strides=(1, 1),
        padding=((PAD, PAD), (PAD, PAD)),
        dimension_numbers=("NCHW", "OIHW", "NCHW"))
    spatial_mask = jax.nn.sigmoid(conv + bconv[0, 0])                 # (N,1,H,W)
    pooled = jnp.mean(x_nchw, axis=(2, 3))                            # (N,C)
    h1 = jnp.maximum(pooled @ w1 + b1, 0.0)                           # (N,Cr)
    channel_mask = jax.nn.sigmoid(h1 @ w2 + b2)                       # (N,C)
    return x_nchw * spatial_mask * channel_mask[:, :, None, None]


if __name__ == "__main__":
    # small shapes consistent with the module: base_channels=8 -> C = 32,
    # squeeze channels Cr = C // 16 = 2
    N, C, H, W = 2, 32, 16, 16
    Cr = C // 16

    key = jax.random.PRNGKey(0)
    kx, kw0, kb0, kw1, kb1, kw2, kb2 = jax.random.split(key, 7)

    x = jax.random.normal(kx, (N, C, H, W), jnp.float32)

    # deterministic synthetic parameters (shapes follow the module __init__)
    wconv = jax.random.normal(kw0, (KSIZE, KSIZE, C), jnp.float32) * 0.05
    bconv = jax.random.normal(kb0, (1, 1), jnp.float32) * 0.05
    w1 = jax.random.normal(kw1, (C, Cr), jnp.float32) * 0.1
    b1 = jax.random.normal(kb1, (1, Cr), jnp.float32) * 0.1
    w2 = jax.random.normal(kw2, (Cr, C), jnp.float32) * 0.1
    b2 = jax.random.normal(kb2, (1, C), jnp.float32) * 0.1

    out = multimodal_feature_fuser(x, wconv, bconv, w1, b1, w2, b2)
    out = jax.block_until_ready(out)

    ref = _reference(x, wconv, bconv, w1, b1, w2, b2)
    assert out.shape == (N, C, H, W)
    assert jnp.allclose(out, ref, atol=1e-3, rtol=1e-3), "mismatch vs reference"

    print("KERNEL_OK")
</pallas_src>

<mosaic_0001>
module attributes {stable_mosaic.version = 11 : i64} {
  func.func @kernel(%arg0: i32, %arg1: memref<1xf32, #tpu.memory_space<smem>>, %arg2: memref<2xf32, #tpu.memory_space<smem>>, %arg3: memref<1x16x512xf32, #tpu.memory_space<vmem>>, %arg4: memref<49x512xf32, #tpu.memory_space<vmem>>, %arg5: memref<512x16xf32, #tpu.memory_space<vmem>>, %arg6: memref<16x512xf32, #tpu.memory_space<vmem>>, %arg7: memref<2x512xf32, #tpu.memory_space<vmem>>, %arg8: memref<2x512xf32, #tpu.memory_space<vmem>>, %arg9: memref<1x512xf32, #tpu.memory_space<vmem>>, %arg10: memref<1x16x512xf32, #tpu.memory_space<vmem>>, %arg11: memref<22x736xf32, #tpu.memory_space<vmem>>) attributes {dimension_semantics = [#tpu.dimension_semantics<parallel>], iteration_bounds = array<i64: 2>, scalar_prefetch = 2 : i64, scratch_operands = 1 : i64, tpu.core_type = #tpu.core_type<tc>, window_params = [{transform_indices = @transform_0, window_bounds = array<i64: 1, 16, 512>}, {pipeline_mode = #tpu.pipeline_mode<synchronous>, transform_indices = @transform_1, window_bounds = array<i64: 49, 512>}, {pipeline_mode = #tpu.pipeline_mode<synchronous>, transform_indices = @transform_2, window_bounds = array<i64: 512, 16>}, {pipeline_mode = #tpu.pipeline_mode<synchronous>, transform_indices = @transform_3, window_bounds = array<i64: 16, 512>}, {pipeline_mode = #tpu.pipeline_mode<synchronous>, transform_indices = @transform_4, window_bounds = array<i64: 2, 512>}, {pipeline_mode = #tpu.pipeline_mode<synchronous>, transform_indices = @transform_5, window_bounds = array<i64: 2, 512>}, {pipeline_mode = #tpu.pipeline_mode<synchronous>, transform_indices = @transform_6, window_bounds = array<i64: 1, 512>}, {transform_indices = @transform_7, window_bounds = array<i64: 1, 16, 512>}]} {
    %c0 = arith.constant 0 : index
    %c0_0 = arith.constant 0 : index
    %c0_1 = arith.constant 0 : index
    %0 = vector.load %arg3[%c0, %c0_0, %c0_1] : memref<1x16x512xf32, #tpu.memory_space<vmem>>, vector<1x16x512xf32>
    %1 = vector.shape_cast %0 : vector<1x16x512xf32> to vector<16x512xf32>
    %cst = arith.constant 0.000000e+00 : f32
    %2 = vector.broadcast %cst : f32 to vector<22x736xf32>
    %c0_2 = arith.constant 0 : index
    %c0_3 = arith.constant 0 : index
    %3 = vector.load %arg11[%c0_2, %c0_3] : memref<22x736xf32, #tpu.memory_space<vmem>>, vector<22x736xf32>
    tpu.vector_store %arg11[%c0_2, %c0_3], %2 {strides = array<i32>} : memref<22x736xf32, #tpu.memory_space<vmem>>, vector<22x736xf32>,
    %c3 = arith.constant 3 : index
    %c128 = arith.constant 128 : index
    %4 = vector.load %arg11[%c3, %c128] : memref<22x736xf32, #tpu.memory_space<vmem>>, vector<16x512xf32>
    tpu.vector_store %arg11[%c3, %c128], %1 {strides = array<i32>} : memref<22x736xf32, #tpu.memory_space<vmem>>, vector<16x512xf32>,
    %cst_4 = arith.constant 0.000000e+00 : f32
    %5 = vector.broadcast %cst_4 : f32 to vector<16x512xf32>
    %c0_5 = arith.constant 0 : index
    %c32 = arith.constant 32 : index
    %6 = vector.load %arg11[%c0_5, %c32] : memref<22x736xf32, #tpu.memory_space<vmem>>, vector<22x512xf32>
    %7 = vector.extract_strided_slice %6 {offsets = [0, 0], sizes = [16, 512], strides = [1, 1]} : vector<22x512xf32> to vector<16x512xf32>
    %c0_6 = arith.constant 0 : index
    %c0_7 = arith.constant 0 : index
    %8 = vector.load %arg4[%c0_6, %c0_7] : memref<49x512xf32, #tpu.memory_space<vmem>>, vector<1x512xf32>
    %9 = vector.broadcast %8 : vector<1x512xf32> to vector<16x512xf32>
    %10 = arith.mulf %7, %9 : vector<16x512xf32>
    %11 = arith.addf %5, %10 : vector<16x512xf32>
    %12 = vector.extract_strided_slice %6 {offsets = [1, 0], sizes = [16, 512], strides = [1, 1]} : vector<22x512xf32> to vector<16x512xf32>
    %c7 = arith.constant 7 : index
    %c0_8 = arith.constant 0 : index
    %13 = vector.load %arg4[%c7, %c0_8] : memref<49x512xf32, #tpu.memory_space<vmem>>, vector<1x512xf32>
    %14 = vector.broadcast %13 : vector<1x512xf32> to vector<16x512xf32>
    %15 = arith.mulf %12, %14 : vector<16x512xf32>
    %16 = arith.addf %11, %15 : vector<16x512xf32>
    %17 = vector.extract_strided_slice %6 {offsets = [2, 0], sizes = [16, 512], strides = [1, 1]} : vector<22x512xf32> to vector<16x512xf32>
    %c14 = arith.constant 14 : index
    %c0_9 = arith.constant 0 : index
    %18 = vector.load %arg4[%c14, %c0_9] : memref<49x512xf32, #tpu.memory_space<vmem>>, vector<1x512xf32>
    %19 = vector.broadcast %18 : vector<1x512xf32> to vector<16x512xf32>
    %20 = arith.mulf %17, %19 : vector<16x512xf32>
    %21 = arith.addf %16, %20 : vector<16x512xf32>
    %22 = vector.extract_strided_slice %6 {offsets = [3, 0], sizes = [16, 512], strides = [1, 1]} : vector<22x512xf32> to vector<16x512xf32>
    %c21 = arith.constant 21 : index
    %c0_10 = arith.constant 0 : index
    %23 = vector.load %arg4[%c21, %c0_10] : memref<49x512xf32, #tpu.memory_space<vmem>>, vector<1x512xf32>
    %24 = vector.broadcast %23 : vector<1x512xf32> to vector<16x512xf32>
    %25 = arith.mulf %22, %24 : vector<16x512xf32>
    %26 = arith.addf %21, %25 : vector<16x512xf32>
    %27 = vector.extract_strided_slice %6 {offsets = [4, 0], sizes = [16, 512], strides = [1, 1]} : vector<22x512xf32> to vector<16x512xf32>
    %c28 = arith.constant 28 : index
    %c0_11 = arith.constant 0 : index
    %28 = vector.load %arg4[%c28, %c0_11] : memref<49x512xf32, #tpu.memory_space<vmem>>, vector<1x512xf32>
    %29 = vector.broadcast %28 : vector<1x512xf32> to vector<16x512xf32>
    %30 = arith.mulf %27, %29 : vector<16x512xf32>
    %31 = arith.addf %26, %30 : vector<16x512xf32>
    %32 = vector.extract_strided_slice %6 {offsets = [5, 0], sizes = [16, 512], strides = [1, 1]} : vector<22x512xf32> to vector<16x512xf32>
    %c35 = arith.constant 35 : index
    %c0_12 = arith.constant 0 : index
    %33 = vector.load %arg4[%c35, %c0_12] : memref<49x512xf32, #tpu.memory_space<vmem>>, vector<1x512xf32>
    %34 = vector.broadcast %33 : vector<1x512xf32> to vector<16x512xf32>
    %35 = arith.mulf %32, %34 : vector<16x512xf32>
    %36 = arith.addf %31, %35 : vector<16x512xf32>
    %37 = vector.extract_strided_slice %6 {offsets = [6, 0], sizes = [16, 512], strides = [1, 1]} : vector<22x512xf32> to vector<16x512xf32>
    %c42 = arith.constant 42 : index
    %c0_13 = arith.constant 0 : index
    %38 = vector.load %arg4[%c42, %c0_13] : memref<49x512xf32, #tpu.memory_space<vmem>>, vector<1x512xf32>
    %39 = vector.broadcast %38 : vector<1x512xf32> to vector<16x512xf32>
    %40 = arith.mulf %37, %39 : vector<16x512xf32>
    %41 = arith.addf %36, %40 : vector<16x512xf32>
    %c0_14 = arith.constant 0 : index
    %c64 = arith.constant 64 : index
    %42 = vector.load %arg11[%c0_14, %c64] : memref<22x736xf32, #tpu.memory_space<vmem>>, vector<22x512xf32>
    %43 = vector.extract_strided_slice %42 {offsets = [0, 0], sizes = [16, 512], strides = [1, 1]} : vector<22x512xf32> to vector<16x512xf32>
    %c1 = arith.constant 1 : index
    %c0_15 = arith.constant 0 : index
    %44 = vector.load %arg4[%c1, %c0_15] : memref<49x512xf32, #tpu.memory_space<vmem>>, vector<1x512xf32>
    %45 = vector.broadcast %44 : vector<1x512xf32> to vector<16x512xf32>
    %46 = arith.mulf %43, %45 : vector<16x512xf32>
    %47 = arith.addf %41, %46 : vector<16x512xf32>
    %48 = vector.extract_strided_slice %42 {offsets = [1, 0], sizes = [16, 512], strides = [1, 1]} : vector<22x512xf32> to vector<16x512xf32>
    %c8 = arith.constant 8 : index
    %c0_16 = arith.constant 0 : index
    %49 = vector.load %arg4[%c8, %c0_16] : memref<49x512xf32, #tpu.memory_space<vmem>>, vector<1x512xf32>
    %50 = vector.broadcast %49 : vector<1x512xf32> to vector<16x512xf32>
    %51 = arith.mulf %48, %50 : vector<16x512xf32>
    %52 = arith.addf %47, %51 : vector<16x512xf32>
    %53 = vector.extract_strided_slice %42 {offsets = [2, 0], sizes = [16, 512], strides = [1, 1]} : vector<22x512xf32> to vector<16x512xf32>
    %c15 = arith.constant 15 : index
    %c0_17 = arith.constant 0 : index
    %54 = vector.load %arg4[%c15, %c0_17] : memref<49x512xf32, #tpu.memory_space<vmem>>, vector<1x512xf32>
    %55 = vector.broadcast %54 : vector<1x512xf32> to vector<16x512xf32>
    %56 = arith.mulf %53, %55 : vector<16x512xf32>
    %57 = arith.addf %52, %56 : vector<16x512xf32>
    %58 = vector.extract_strided_slice %42 {offsets = [3, 0], sizes = [16, 512], strides = [1, 1]} : vector<22x512xf32> to vector<16x512xf32>
    %c22 = arith.constant 22 : index
    %c0_18 = arith.constant 0 : index
    %59 = vector.load %arg4[%c22, %c0_18] : memref<49x512xf32, #tpu.memory_space<vmem>>, vector<1x512xf32>
    %60 = vector.broadcast %59 : vector<1x512xf32> to vector<16x512xf32>
    %61 = arith.mulf %58, %60 : vector<16x512xf32>
    %62 = arith.addf %57, %61 : vector<16x512xf32>
    %63 = vector.extract_strided_slice %42 {offsets = [4, 0], sizes = [16, 512], strides = [1, 1]} : vector<22x512xf32> to vector<16x512xf32>
    %c29 = arith.constant 29 : index
    %c0_19 = arith.constant 0 : index
    %64 = vector.load %arg4[%c29, %c0_19] : memref<49x512xf32, #tpu.memory_space<vmem>>, vector<1x512xf32>
    %65 = vector.broadcast %64 : vector<1x512xf32> to vector<16x512xf32>
    %66 = arith.mulf %63, %65 : vector<16x512xf32>
    %67 = arith.addf %62, %66 : vector<16x512xf32>
    %68 = vector.extract_strided_slice %42 {offsets = [5, 0], sizes = [16, 512], strides = [1, 1]} : vector<22x512xf32> to vector<16x512xf32>
    %c36 = arith.constant 36 : index
    %c0_20 = arith.constant 0 : index
    %69 = vector.load %arg4[%c36, %c0_20] : memref<49x512xf32, #tpu.memory_space<vmem>>, vector<1x512xf32>
    %70 = vector.broadcast %69 : vector<1x512xf32> to vector<16x512xf32>
    %71 = arith.mulf %68, %70 : vector<16x512xf32>
    %72 = arith.addf %67, %71 : vector<16x512xf32>
    %73 = vector.extract_strided_slice %42 {offsets = [6, 0], sizes = [16, 512], strides = [1, 1]} : vector<22x512xf32> to vector<16x512xf32>
    %c43 = arith.constant 43 : index
    %c0_21 = arith.constant 0 : index
    %74 = vector.load %arg4[%c43, %c0_21] : memref<49x512xf32, #tpu.memory_space<vmem>>, vector<1x512xf32>
    %75 = vector.broadcast %74 : vector<1x512xf32> to vector<16x512xf32>
    %76 = arith.mulf %73, %75 : vector<16x512xf32>
    %77 = arith.addf %72, %76 : vector<16x512xf32>
    %c0_22 = arith.constant 0 : index
    %c96 = arith.constant 96 : index
    %78 = vector.load %arg11[%c0_22, %c96] : memref<22x736xf32, #tpu.memory_space<vmem>>, vector<22x512xf32>
    %79 = vector.extract_strided_slice %78 {offsets = [0, 0], sizes = [16, 512], strides = [1, 1]} : vector<22x512xf32> to vector<16x512xf32>
    %c2 = arith.constant 2 : index
    %c0_23 = arith.constant 0 : index
    %80 = vector.load %arg4[%c2, %c0_23] : memref<49x512xf32, #tpu.memory_space<vmem>>, vector<1x512xf32>
    %81 = vector.broadcast %80 : vector<1x512xf32> to vector<16x512xf32>
    %82 = arith.mulf %79, %81 : vector<16x512xf32>
    %83 = arith.addf %77, %82 : vector<16x512xf32>
    %84 = vector.extract_strided_slice %78 {offsets = [1, 0], sizes = [16, 512], strides = [1, 1]} : vector<22x512xf32> to vector<16x512xf32>
    %c9 = arith.constant 9 : index
    %c0_24 = arith.constant 0 : index
    %85 = vector.load %arg4[%c9, %c0_24] : memref<49x512xf32, #tpu.memory_space<vmem>>, vector<1x512xf32>
    %86 = vector.broadcast %85 : vector<1x512xf32> to vector<16x512xf32>
    %87 = arith.mulf %84, %86 : vector<16x512xf32>
    %88 = arith.addf %83, %87 : vector<16x512xf32>
    %89 = vector.extract_strided_slice %78 {offsets = [2, 0], sizes = [16, 512], strides = [1, 1]} : vector<22x512xf32> to vector<16x512xf32>
    %c16 = arith.constant 16 : index
    %c0_25 = arith.constant 0 : index
    %90 = vector.load %arg4[%c16, %c0_25] : memref<49x512xf32, #tpu.memory_space<vmem>>, vector<1x512xf32>
    %91 = vector.broadcast %90 : vector<1x512xf32> to vector<16x512xf32>
    %92 = arith.mulf %89, %91 : vector<16x512xf32>
    %93 = arith.addf %88, %92 : vector<16x512xf32>
    %94 = vector.extract_strided_slice %78 {offsets = [3, 0], sizes = [16, 512], strides = [1, 1]} : vector<22x512xf32> to vector<16x512xf32>
    %c23 = arith.constant 23 : index
    %c0_26 = arith.constant 0 : index
    %95 = vector.load %arg4[%c23, %c0_26] : memref<49x512xf32, #tpu.memory_space<vmem>>, vector<1x512xf32>
    %96 = vector.broadcast %95 : vector<1x512xf32> to vector<16x512xf32>
    %97 = arith.mulf %94, %96 : vector<16x512xf32>
    %98 = arith.addf %93, %97 : vector<16x512xf32>
    %99 = vector.extract_strided_slice %78 {offsets = [4, 0], sizes = [16, 512], strides = [1, 1]} : vector<22x512xf32> to vector<16x512xf32>
    %c30 = arith.constant 30 : index
    %c0_27 = arith.constant 0 : index
    %100 = vector.load %arg4[%c30, %c0_27] : memref<49x512xf32, #tpu.memory_space<vmem>>, vector<1x512xf32>
    %101 = vector.broadcast %100 : vector<1x512xf32> to vector<16x512xf32>
    %102 = arith.mulf %99, %101 : vector<16x512xf32>
    %103 = arith.addf %98, %102 : vector<16x512xf32>
    %104 = vector.extract_strided_slice %78 {offsets = [5, 0], sizes = [16, 512], strides = [1, 1]} : vector<22x512xf32> to vector<16x512xf32>
    %c37 = arith.constant 37 : index
    %c0_28 = arith.constant 0 : index
    %105 = vector.load %arg4[%c37, %c0_28] : memref<49x512xf32, #tpu.memory_space<vmem>>, vector<1x512xf32>
    %106 = vector.broadcast %105 : vector<1x512xf32> to vector<16x512xf32>
    %107 = arith.mulf %104, %106 : vector<16x512xf32>
    %108 = arith.addf %103, %107 : vector<16x512xf32>
    %109 = vector.extract_strided_slice %78 {offsets = [6, 0], sizes = [16, 512], strides = [1, 1]} : vector<22x512xf32> to vector<16x512xf32>
    %c44 = arith.constant 44 : index
    %c0_29 = arith.constant 0 : index
    %110 = vector.load %arg4[%c44, %c0_29] : memref<49x512xf32, #tpu.memory_space<vmem>>, vector<1x512xf32>
    %111 = vector.broadcast %110 : vector<1x512xf32> to vector<16x512xf32>
    %112 = arith.mulf %109, %111 : vector<16x512xf32>
    %113 = arith.addf %108, %112 : vector<16x512xf32>
    %c0_30 = arith.constant 0 : index
    %c128_31 = arith.constant 128 : index
    %114 = vector.load %arg11[%c0_30, %c128_31] : memref<22x736xf32, #tpu.memory_space<vmem>>, vector<22x512xf32>
    %115 = vector.extract_strided_slice %114 {offsets = [0, 0], sizes = [16, 512], strides = [1, 1]} : vector<22x512xf32> to vector<16x512xf32>
    %c3_32 = arith.constant 3 : index
    %c0_33 = arith.constant 0 : index
    %116 = vector.load %arg4[%c3_32, %c0_33] : memref<49x512xf32, #tpu.memory_space<vmem>>, vector<1x512xf32>
    %117 = vector.broadcast %116 : vector<1x512xf32> to vector<16x512xf32>
    %118 = arith.mulf %115, %117 : vector<16x512xf32>
    %119 = arith.addf %113, %118 : vector<16x512xf32>
    %120 = vector.extract_strided_slice %114 {offsets = [1, 0], sizes = [16, 512], strides = [1, 1]} : vector<22x512xf32> to vector<16x512xf32>
    %c10 = arith.constant 10 : index
    %c0_34 = arith.constant 0 : index
    %121 = vector.load %arg4[%c10, %c0_34] : memref<49x512xf32, #tpu.memory_space<vmem>>, vector<1x512xf32>
    %122 = vector.broadcast %121 : vector<1x512xf32> to vector<16x512xf32>
    %123 = arith.mulf %120, %122 : vector<16x512xf32>
    %124 = arith.addf %119, %123 : vector<16x512xf32>
    %125 = vector.extract_strided_slice %114 {offsets = [2, 0], sizes = [16, 512], strides = [1, 1]} : vector<22x512xf32> to vector<16x512xf32>
    %c17 = arith.constant 17 : index
    %c0_35 = arith.constant 0 : index
    %126 = vector.load %arg4[%c17, %c0_35] : memref<49x512xf32, #tpu.memory_space<vmem>>, vector<1x512xf32>
    %127 = vector.broadcast %126 : vector<1x512xf32> to vector<16x512xf32>
    %128 = arith.mulf %125, %127 : vector<16x512xf32>
    %129 = arith.addf %124, %128 : vector<16x512xf32>
    %130 = vector.extract_strided_slice %114 {offsets = [3, 0], sizes = [16, 512], strides = [1, 1]} : vector<22x512xf32> to vector<16x512xf32>
    %c24 = arith.constant 24 : index
    %c0_36 = arith.constant 0 : index
    %131 = vector.load %arg4[%c24, %c0_36] : memref<49x512xf32, #tpu.memory_space<vmem>>, vector<1x512xf32>
    %132 = vector.broadcast %131 : vector<1x512xf32> to vector<16x512xf32>
    %133 = arith.mulf %130, %132 : vector<16x512xf32>
    %134 = arith.addf %129, %133 : vector<16x512xf32>
    %135 = vector.extract_strided_slice %114 {offsets = [4, 0], sizes = [16, 512], strides = [1, 1]} : vector<22x512xf32> to vector<16x512xf32>
    %c31 = arith.constant 31 : index
    %c0_37 = arith.constant 0 : index
    %136 = vector.load %arg4[%c31, %c0_37] : memref<49x512xf32, #tpu.memory_space<vmem>>, vector<1x512xf32>
    %137 = vector.broadcast %136 : vector<1x512xf32> to vector<16x512xf32>
    %138 = arith.mulf %135, %137 : vector<16x512xf32>
    %139 = arith.addf %134, %138 : vector<16x512xf32>
    %140 = vector.extract_strided_slice %114 {offsets = [5, 0], sizes = [16, 512], strides = [1, 1]} : vector<22x512xf32> to vector<16x512xf32>
    %c38 = arith.constant 38 : index
    %c0_38 = arith.constant 0 : index
    %141 = vector.load %arg4[%c38, %c0_38] : memref<49x512xf32, #tpu.memory_space<vmem>>, vector<1x512xf32>
    %142 = vector.broadcast %141 : vector<1x512xf32> to vector<16x512xf32>
    %143 = arith.mulf %140, %142 : vector<16x512xf32>
    %144 = arith.addf %139, %143 : vector<16x512xf32>
    %145 = vector.extract_strided_slice %114 {offsets = [6, 0], sizes = [16, 512], strides = [1, 1]} : vector<22x512xf32> to vector<16x512xf32>
    %c45 = arith.constant 45 : index
    %c0_39 = arith.constant 0 : index
    %146 = vector.load %arg4[%c45, %c0_39] : memref<49x512xf32, #tpu.memory_space<vmem>>, vector<1x512xf32>
    %147 = vector.broadcast %146 : vector<1x512xf32> to vector<16x512xf32>
    %148 = arith.mulf %145, %147 : vector<16x512xf32>
    %149 = arith.addf %144, %148 : vector<16x512xf32>
    %c0_40 = arith.constant 0 : index
    %c160 = arith.constant 160 : index
    %150 = vector.load %arg11[%c0_40, %c160] : memref<22x736xf32, #tpu.memory_space<vmem>>, vector<22x512xf32>
    %151 = vector.extract_strided_slice %150 {offsets = [0, 0], sizes = [16, 512], strides = [1, 1]} : vector<22x512xf32> to vector<16x512xf32>
    %c4 = arith.constant 4 : index
    %c0_41 = arith.constant 0 : index
    %152 = vector.load %arg4[%c4, %c0_41] : memref<49x512xf32, #tpu.memory_space<vmem>>, vector<1x512xf32>
    %153 = vector.broadcast %152 : vector<1x512xf32> to vector<16x512xf32>
    %154 = arith.mulf %151, %153 : vector<16x512xf32>
    %155 = arith.addf %149, %154 : vector<16x512xf32>
    %156 = vector.extract_strided_slice %150 {offsets = [1, 0], sizes = [16, 512], strides = [1, 1]} : vector<22x512xf32> to vector<16x512xf32>
    %c11 = arith.constant 11 : index
    %c0_42 = arith.constant 0 : index
    %157 = vector.load %arg4[%c11, %c0_42] : memref<49x512xf32, #tpu.memory_space<vmem>>, vector<1x512xf32>
    %158 = vector.broadcast %157 : vector<1x512xf32> to vector<16x512xf32>
    %159 = arith.mulf %156, %158 : vector<16x512xf32>
    %160 = arith.addf %155, %159 : vector<16x512xf32>
    %161 = vector.extract_strided_slice %150 {offsets = [2, 0], sizes = [16, 512], strides = [1, 1]} : vector<22x512xf32> to vector<16x512xf32>
    %c18 = arith.constant 18 : index
    %c0_43 = arith.constant 0 : index
    %162 = vector.load %arg4[%c18, %c0_43] : memref<49x512xf32, #tpu.memory_space<vmem>>, vector<1x512xf32>
    %163 = vector.broadcast %162 : vector<1x512xf32> to vector<16x512xf32>
    %164 = arith.mulf %161, %163 : vector<16x512xf32>
    %165 = arith.addf %160, %164 : vector<16x512xf32>
    %166 = vector.extract_strided_slice %150 {offsets = [3, 0], sizes = [16, 512], strides = [1, 1]} : vector<22x512xf32> to vector<16x512xf32>
    %c25 = arith.constant 25 : index
    %c0_44 = arith.constant 0 : index
    %167 = vector.load %arg4[%c25, %c0_44] : memref<49x512xf32, #tpu.memory_space<vmem>>, vector<1x512xf32>
    %168 = vector.broadcast %167 : vector<1x512xf32> to vector<16x512xf32>
    %169 = arith.mulf %166, %168 : vector<16x512xf32>
    %170 = arith.addf %165, %169 : vector<16x512xf32>
    %171 = vector.extract_strided_slice %150 {offsets = [4, 0], sizes = [16, 512], strides = [1, 1]} : vector<22x512xf32> to vector<16x512xf32>
    %c32_45 = arith.constant 32 : index
    %c0_46 = arith.constant 0 : index
    %172 = vector.load %arg4[%c32_45, %c0_46] : memref<49x512xf32, #tpu.memory_space<vmem>>, vector<1x512xf32>
    %173 = vector.broadcast %172 : vector<1x512xf32> to vector<16x512xf32>
    %174 = arith.mulf %171, %173 : vector<16x512xf32>
    %175 = arith.addf %170, %174 : vector<16x512xf32>
    %176 = vector.extract_strided_slice %150 {offsets = [5, 0], sizes = [16, 512], strides = [1, 1]} : vector<22x512xf32> to vector<16x512xf32>
    %c39 = arith.constant 39 : index
    %c0_47 = arith.constant 0 : index
    %177 = vector.load %arg4[%c39, %c0_47] : memref<49x512xf32, #tpu.memory_space<vmem>>, vector<1x512xf32>
    %178 = vector.broadcast %177 : vector<1x512xf32> to vector<16x512xf32>
    %179 = arith.mulf %176, %178 : vector<16x512xf32>
    %180 = arith.addf %175, %179 : vector<16x512xf32>
    %181 = vector.extract_strided_slice %150 {offsets = [6, 0], sizes = [16, 512], strides = [1, 1]} : vector<22x512xf32> to vector<16x512xf32>
    %c46 = arith.constant 46 : index
    %c0_48 = arith.constant 0 : index
    %182 = vector.load %arg4[%c46, %c0_48] : memref<49x512xf32, #tpu.memory_space<vmem>>, vector<1x512xf32>
    %183 = vector.broadcast %182 : vector<1x512xf32> to vector<16x512xf32>
    %184 = arith.mulf %181, %183 : vector<16x512xf32>
    %185 = arith.addf %180, %184 : vector<16x512xf32>
    %c0_49 = arith.constant 0 : index
    %c192 = arith.constant 192 : index
    %186 = vector.load %arg11[%c0_49, %c192] : memref<22x736xf32, #tpu.memory_space<vmem>>, vector<22x512xf32>
    %187 = vector.extract_strided_slice %186 {offsets = [0, 0], sizes = [16, 512], strides = [1, 1]} : vector<22x512xf32> to vector<16x512xf32>
    %c5 = arith.constant 5 : index
    %c0_50 = arith.constant 0 : index
    %188 = vector.load %arg4[%c5, %c0_50] : memref<49x512xf32, #tpu.memory_space<vmem>>, vector<1x512xf32>
    %189 = vector.broadcast %188 : vector<1x512xf32> to vector<16x512xf32>
    %190 = arith.mulf %187, %189 : vector<16x512xf32>
    %191 = arith.addf %185, %190 : vector<16x512xf32>
    %192 = vector.extract_strided_slice %186 {offsets = [1, 0], sizes = [16, 512], strides = [1, 1]} : vector<22x512xf32> to vector<16x512xf32>
    %c12 = arith.constant 12 : index
    %c0_51 = arith.constant 0 : index
    %193 = vector.load %arg4[%c12, %c0_51] : memref<49x512xf32, #tpu.memory_space<vmem>>, vector<1x512xf32>
    %194 = vector.broadcast %193 : vector<1x512xf32> to vector<16x512xf32>
    %195 = arith.mulf %192, %194 : vector<16x512xf32>
    %196 = arith.addf %191, %195 : vector<16x512xf32>
    %197 = vector.extract_strided_slice %186 {offsets = [2, 0], sizes = [16, 512], strides = [1, 1]} : vector<22x512xf32> to vector<16x512xf32>
    %c19 = arith.constant 19 : index
    %c0_52 = arith.constant 0 : index
    %198 = vector.load %arg4[%c19, %c0_52] : memref<49x512xf32, #tpu.memory_space<vmem>>, vector<1x512xf32>
    %199 = vector.broadcast %198 : vector<1x512xf32> to vector<16x512xf32>
    %200 = arith.mulf %197, %199 : vector<16x512xf32>
    %201 = arith.addf %196, %200 : vector<16x512xf32>
    %202 = vector.extract_strided_slice %186 {offsets = [3, 0], sizes = [16, 512], strides = [1, 1]} : vector<22x512xf32> to vector<16x512xf32>
    %c26 = arith.constant 26 : index
    %c0_53 = arith.constant 0 : index
    %203 = vector.load %arg4[%c26, %c0_53] : memref<49x512xf32, #tpu.memory_space<vmem>>, vector<1x512xf32>
    %204 = vector.broadcast %203 : vector<1x512xf32> to vector<16x512xf32>
    %205 = arith.mulf %202, %204 : vector<16x512xf32>
    %206 = arith.addf %201, %205 : vector<16x512xf32>
    %207 = vector.extract_strided_slice %186 {offsets = [4, 0], sizes = [16, 512], strides = [1, 1]} : vector<22x512xf32> to vector<16x512xf32>
    %c33 = arith.constant 33 : index
    %c0_54 = arith.constant 0 : index
    %208 = vector.load %arg4[%c33, %c0_54] : memref<49x512xf32, #tpu.memory_space<vmem>>, vector<1x512xf32>
    %209 = vector.broadcast %208 : vector<1x512xf32> to vector<16x512xf32>
    %210 = arith.mulf %207, %209 : vector<16x512xf32>
    %211 = arith.addf %206, %210 : vector<16x512xf32>
    %212 = vector.extract_strided_slice %186 {offsets = [5, 0], sizes = [16, 512], strides = [1, 1]} : vector<22x512xf32> to vector<16x512xf32>
    %c40 = arith.constant 40 : index
    %c0_55 = arith.constant 0 : index
    %213 = vector.load %arg4[%c40, %c0_55] : memref<49x512xf32, #tpu.memory_space<vmem>>, vector<1x512xf32>
    %214 = vector.broadcast %213 : vector<1x512xf32> to vector<16x512xf32>
    %215 = arith.mulf %212, %214 : vector<16x512xf32>
    %216 = arith.addf %211, %215 : vector<16x512xf32>
    %217 = vector.extract_strided_slice %186 {offsets = [6, 0], sizes = [16, 512], strides = [1, 1]} : vector<22x512xf32> to vector<16x512xf32>
    %c47 = arith.constant 47 : index
    %c0_56 = arith.constant 0 : index
    %218 = vector.load %arg4[%c47, %c0_56] : memref<49x512xf32, #tpu.memory_space<vmem>>, vector<1x512xf32>
    %219 = vector.broadcast %218 : vector<1x512xf32> to vector<16x512xf32>
    %220 = arith.mulf %217, %219 : vector<16x512xf32>
    %221 = arith.addf %216, %220 : vector<16x512xf32>
    %c0_57 = arith.constant 0 : index
    %c224 = arith.constant 224 : index
    %222 = vector.load %arg11[%c0_57, %c224] : memref<22x736xf32, #tpu.memory_space<vmem>>, vector<22x512xf32>
    %223 = vector.extract_strided_slice %222 {offsets = [0, 0], sizes = [16, 512], strides = [1, 1]} : vector<22x512xf32> to vector<16x512xf32>
    %c6 = arith.constant 6 : index
    %c0_58 = arith.constant 0 : index
    %224 = vector.load %arg4[%c6, %c0_58] : memref<49x512xf32, #tpu.memory_space<vmem>>, vector<1x512xf32>
    %225 = vector.broadcast %224 : vector<1x512xf32> to vector<16x512xf32>
    %226 = arith.mulf %223, %225 : vector<16x512xf32>
    %227 = arith.addf %221, %226 : vector<16x512xf32>
    %228 = vector.extract_strided_slice %222 {offsets = [1, 0], sizes = [16, 512], strides = [1, 1]} : vector<22x512xf32> to vector<16x512xf32>
    %c13 = arith.constant 13 : index
    %c0_59 = arith.constant 0 : index
    %229 = vector.load %arg4[%c13, %c0_59] : memref<49x512xf32, #tpu.memory_space<vmem>>, vector<1x512xf32>
    %230 = vector.broadcast %229 : vector<1x512xf32> to vector<16x512xf32>
    %231 = arith.mulf %228, %230 : vector<16x512xf32>
    %232 = arith.addf %227, %231 : vector<16x512xf32>
    %233 = vector.extract_strided_slice %222 {offsets = [2, 0], sizes = [16, 512], strides = [1, 1]} : vector<22x512xf32> to vector<16x512xf32>
    %c20 = arith.constant 20 : index
    %c0_60 = arith.constant 0 : index
    %234 = vector.load %arg4[%c20, %c0_60] : memref<49x512xf32, #tpu.memory_space<vmem>>, vector<1x512xf32>
    %235 = vector.broadcast %234 : vector<1x512xf32> to vector<16x512xf32>
    %236 = arith.mulf %233, %235 : vector<16x512xf32>
    %237 = arith.addf %232, %236 : vector<16x512xf32>
    %238 = vector.extract_strided_slice %222 {offsets = [3, 0], sizes = [16, 512], strides = [1, 1]} : vector<22x512xf32> to vector<16x512xf32>
    %c27 = arith.constant 27 : index
    %c0_61 = arith.constant 0 : index
    %239 = vector.load %arg4[%c27, %c0_61] : memref<49x512xf32, #tpu.memory_space<vmem>>, vector<1x512xf32>
    %240 = vector.broadcast %239 : vector<1x512xf32> to vector<16x512xf32>
    %241 = arith.mulf %238, %240 : vector<16x512xf32>
    %242 = arith.addf %237, %241 : vector<16x512xf32>
    %243 = vector.extract_strided_slice %222 {offsets = [4, 0], sizes = [16, 512], strides = [1, 1]} : vector<22x512xf32> to vector<16x512xf32>
    %c34 = arith.constant 34 : index
    %c0_62 = arith.constant 0 : index
    %244 = vector.load %arg4[%c34, %c0_62] : memref<49x512xf32, #tpu.memory_space<vmem>>, vector<1x512xf32>
    %245 = vector.broadcast %244 : vector<1x512xf32> to vector<16x512xf32>
    %246 = arith.mulf %243, %245 : vector<16x512xf32>
    %247 = arith.addf %242, %246 : vector<16x512xf32>
    %248 = vector.extract_strided_slice %222 {offsets = [5, 0], sizes = [16, 512], strides = [1, 1]} : vector<22x512xf32> to vector<16x512xf32>
    %c41 = arith.constant 41 : index
    %c0_63 = arith.constant 0 : index
    %249 = vector.load %arg4[%c41, %c0_63] : memref<49x512xf32, #tpu.memory_space<vmem>>, vector<1x512xf32>
    %250 = vector.broadcast %249 : vector<1x512xf32> to vector<16x512xf32>
    %251 = arith.mulf %248, %250 : vector<16x512xf32>
    %252 = arith.addf %247, %251 : vector<16x512xf32>
    %253 = vector.extract_strided_slice %222 {offsets = [6, 0], sizes = [16, 512], strides = [1, 1]} : vector<22x512xf32> to vector<16x512xf32>
    %c48 = arith.constant 48 : index
    %c0_64 = arith.constant 0 : index
    %254 = vector.load %arg4[%c48, %c0_64] : memref<49x512xf32, #tpu.memory_space<vmem>>, vector<1x512xf32>
    %255 = vector.broadcast %254 : vector<1x512xf32> to vector<16x512xf32>
    %256 = arith.mulf %253, %255 : vector<16x512xf32>
    %257 = arith.addf %252, %256 : vector<16x512xf32>
    %c0_65 = arith.constant 0 : index
    %c0_66 = arith.constant 0 : index
    %258 = vector.load %arg5[%c0_65, %c0_66] : memref<512x16xf32, #tpu.memory_space<vmem>>, vector<512x16xf32>
    %cst_67 = arith.constant dense<0.000000e+00> : vector<16x16xf32>
    %259 = tpu.matmul %257, %258, %cst_67 {dimension_numbers = #tpu.dot_dimension_numbers<[1], [0], [0], [1], [0, 0, 1, 1], [], []>} : vector<16x512xf32>, vector<512x16xf32>, vector<16x16xf32> -> vector<16x16xf32>
    %c0_68 = arith.constant 0 : index
    %260 = memref.load %arg1[%c0_68] : memref<1xf32, #tpu.memory_space<smem>>
    %261 = vector.broadcast %260 : f32 to vector<16x16xf32>
    %262 = arith.addf %259, %261 : vector<16x16xf32>
    %263 = arith.negf %262 : vector<16x16xf32>
    %264 = math.exp %263 : vector<16x16xf32>
    %cst_69 = arith.constant 1.000000e+00 : f32
    %265 = vector.broadcast %cst_69 : f32 to vector<16x16xf32>
    %266 = arith.addf %265, %264 : vector<16x16xf32>
    %267 = arith.divf %265, %266 : vector<16x16xf32>
    %c0_70 = arith.constant 0 : index
    %c0_71 = arith.constant 0 : index
    %268 = vector.load %arg6[%c0_70, %c0_71] : memref<16x512xf32, #tpu.memory_space<vmem>>, vector<16x512xf32>
    %cst_72 = arith.constant dense<0.000000e+00> : vector<16x512xf32>
    %269 = tpu.matmul %267, %268, %cst_72 {dimension_numbers = #tpu.dot_dimension_numbers<[1], [0], [0], [1], [0, 0, 1, 1], [], []>} : vector<16x16xf32>, vector<16x512xf32>, vector<16x512xf32> -> vector<16x512xf32>
    %c0_73 = arith.constant 0 : index
    %c0_74 = arith.constant 0 : index
    %270 = vector.load %arg9[%c0_73, %c0_74] : memref<1x512xf32, #tpu.memory_space<vmem>>, vector<1x512xf32>
    %c0_75 = arith.constant 0 : index
    %c0_76 = arith.constant 0 : index
    %271 = vector.load %arg7[%c0_75, %c0_76] : memref<2x512xf32, #tpu.memory_space<vmem>>, vector<1x512xf32>
    %272 = vector.broadcast %271 : vector<1x512xf32> to vector<16x512xf32>
    %273 = arith.mulf %1, %272 : vector<16x512xf32>
    %274 = vector.shape_cast %273 : vector<16x512xf32> to vector<1x16x512xf32>
    %cst_77 = arith.constant dense<0.000000e+00> : vector<1xf32>
    %275 = vector.multi_reduction <add>, %274, %cst_77 [1, 2] : vector<1x16x512xf32> to vector<1xf32>
    %276 = vector.shape_cast %275 : vector<1xf32> to vector<1x1x1xf32>
    %277 = vector.extract %276[0, 0, 0] : f32 from vector<1x1x1xf32>
    %cst_78 = arith.constant 3.906250e-03 : f32
    %278 = arith.mulf %277, %cst_78 : f32
    %c0_79 = arith.constant 0 : index
    %279 = memref.load %arg2[%c0_79] : memref<2xf32, #tpu.memory_space<smem>>
    %280 = arith.addf %278, %279 : f32
    %cst_80 = arith.constant 0.000000e+00 : f32
    %281 = arith.maximumf %280, %cst_80 : f32
    %c0_81 = arith.constant 0 : index
    %c0_82 = arith.constant 0 : index
    %282 = vector.load %arg8[%c0_81, %c0_82] : memref<2x512xf32, #tpu.memory_space<vmem>>, vector<1x512xf32>
    %283 = vector.broadcast %281 : f32 to vector<1x512xf32>
    %284 = arith.mulf %283, %282 : vector<1x512xf32>
    %285 = arith.addf %270, %284 : vector<1x512xf32>
    %c1_83 = arith.constant 1 : index
    %c0_84 = arith.constant 0 : index
    %286 = vector.load %arg7[%c1_83, %c0_84] : memref<2x512xf32, #tpu.memory_space<vmem>>, vector<1x512xf32>
    %287 = vector.broadcast %286 : vector<1x512xf32> to vector<16x512xf32>
    %288 = arith.mulf %1, %287 : vector<16x512xf32>
    %289 = vector.shape_cast %288 : vector<16x512xf32> to vector<1x16x512xf32>
    %cst_85 = arith.constant dense<0.000000e+00> : vector<1xf32>
    %290 = vector.multi_reduction <add>, %289, %cst_85 [1, 2] : vector<1x16x512xf32> to vector<1xf32>
    %291 = vector.shape_cast %290 : vector<1xf32> to vector<1x1x1xf32>
    %292 = vector.extract %291[0, 0, 0] : f32 from vector<1x1x1xf32>
    %cst_86 = arith.constant 3.906250e-03 : f32
    %293 = arith.mulf %292, %cst_86 : f32
    %c1_87 = arith.constant 1 : index
    %294 = memref.load %arg2[%c1_87] : memref<2xf32, #tpu.memory_space<smem>>
    %295 = arith.addf %293, %294 : f32
    %cst_88 = arith.constant 0.000000e+00 : f32
    %296 = arith.maximumf %295, %cst_88 : f32
    %c1_89 = arith.constant 1 : index
    %c0_90 = arith.constant 0 : index
    %297 = vector.load %arg8[%c1_89, %c0_90] : memref<2x512xf32, #tpu.memory_space<vmem>>, vector<1x512xf32>
    %298 = vector.broadcast %296 : f32 to vector<1x512xf32>
    %299 = arith.mulf %298, %297 : vector<1x512xf32>
    %300 = arith.addf %285, %299 : vector<1x512xf32>
    %301 = arith.negf %300 : vector<1x512xf32>
    %302 = math.exp %301 : vector<1x512xf32>
    %cst_91 = arith.constant 1.000000e+00 : f32
    %303 = vector.broadcast %cst_91 : f32 to vector<1x512xf32>
    %304 = arith.addf %303, %302 : vector<1x512xf32>
    %305 = arith.divf %303, %304 : vector<1x512xf32>
    %306 = arith.mulf %1, %269 : vector<16x512xf32>
    %307 = vector.broadcast %305 : vector<1x512xf32> to vector<16x512xf32>
    %308 = arith.mulf %306, %307 : vector<16x512xf32>
    %c0_92 = arith.constant 0 : index
    %c0_93 = arith.constant 0 : index
    %c0_94 = arith.constant 0 : index
    %309 = vector.load %arg10[%c0_92, %c0_93, %c0_94] : memref<1x16x512xf32, #tpu.memory_space<vmem>>, vector<1x16x512xf32>
    %310 = vector.shape_cast %309 : vector<1x16x512xf32> to vector<16x512xf32>
    %311 = vector.shape_cast %308 : vector<16x512xf32> to vector<1x16x512xf32>
    tpu.vector_store %arg10[%c0_92, %c0_93, %c0_94], %311 {strides = array<i32>} : memref<1x16x512xf32, #tpu.memory_space<vmem>>, vector<1x16x512xf32>,
    return
  }
  func.func @transform_0(%arg0: i32, %arg1: memref<1xf32, #tpu.memory_space<smem>>, %arg2: memref<2xf32, #tpu.memory_space<smem>>) -> (i32, i32, i32) {
    %c0_i32 = arith.constant 0 : i32
    %c0_i32_0 = arith.constant 0 : i32
    %c0_i32_1 = arith.constant 0 : i32
    return %arg0, %c0_i32, %c0_i32_0 : i32, i32, i32
  }
  func.func @transform_1(%arg0: i32, %arg1: memref<1xf32, #tpu.memory_space<smem>>, %arg2: memref<2xf32, #tpu.memory_space<smem>>) -> (i32, i32) {
    %c0_i32 = arith.constant 0 : i32
    %c0_i32_0 = arith.constant 0 : i32
    %c0_i32_1 = arith.constant 0 : i32
    return %c0_i32, %c0_i32_0 : i32, i32
  }
  func.func @transform_2(%arg0: i32, %arg1: memref<1xf32, #tpu.memory_space<smem>>, %arg2: memref<2xf32, #tpu.memory_space<smem>>) -> (i32, i32) {
    %c0_i32 = arith.constant 0 : i32
    %c0_i32_0 = arith.constant 0 : i32
    %c0_i32_1 = arith.constant 0 : i32
    return %c0_i32, %c0_i32_0 : i32, i32
  }
  func.func @transform_3(%arg0: i32, %arg1: memref<1xf32, #tpu.memory_space<smem>>, %arg2: memref<2xf32, #tpu.memory_space<smem>>) -> (i32, i32) {
    %c0_i32 = arith.constant 0 : i32
    %c0_i32_0 = arith.constant 0 : i32
    %c0_i32_1 = arith.constant 0 : i32
    return %c0_i32, %c0_i32_0 : i32, i32
  }
  func.func @transform_4(%arg0: i32, %arg1: memref<1xf32, #tpu.memory_space<smem>>, %arg2: memref<2xf32, #tpu.memory_space<smem>>) -> (i32, i32) {
    %c0_i32 = arith.constant 0 : i32
    %c0_i32_0 = arith.constant 0 : i32
    %c0_i32_1 = arith.constant 0 : i32
    return %c0_i32, %c0_i32_0 : i32, i32
  }
  func.func @transform_5(%arg0: i32, %arg1: memref<1xf32, #tpu.memory_space<smem>>, %arg2: memref<2xf32, #tpu.memory_space<smem>>) -> (i32, i32) {
    %c0_i32 = arith.constant 0 : i32
    %c0_i32_0 = arith.constant 0 : i32
    %c0_i32_1 = arith.constant 0 : i32
    return %c0_i32, %c0_i32_0 : i32, i32
  }
  func.func @transform_6(%arg0: i32, %arg1: memref<1xf32, #tpu.memory_space<smem>>, %arg2: memref<2xf32, #tpu.memory_space<smem>>) -> (i32, i32) {
    %c0_i32 = arith.constant 0 : i32
    %c0_i32_0 = arith.constant 0 : i32
    %c0_i32_1 = arith.constant 0 : i32
    return %c0_i32, %c0_i32_0 : i32, i32
  }
  func.func @transform_7(%arg0: i32, %arg1: memref<1xf32, #tpu.memory_space<smem>>, %arg2: memref<2xf32, #tpu.memory_space<smem>>) -> (i32, i32, i32) {
    %c0_i32 = arith.constant 0 : i32
    %c0_i32_0 = arith.constant 0 : i32
    %c0_i32_1 = arith.constant 0 : i32
    return %arg0, %c0_i32, %c0_i32_0 : i32, i32, i32
  }
}

</mosaic_0001>

<llo_original>
// kernel: tile.23
$region0: #{tile.23}
  %s0 = inlined_call_operand.vmem [shape: f32[2,16,1,1,32], index: 0, kind: input, shape index: {}]
  %s1 = inlined_call_operand.vmem [shape: f32[2,512], index: 1, kind: output, shape index: {}]
  $region1: #{tile.23} parent=0
    #allocation0 [shape = 'u8[16384]{0}', space=vmem, size = 0x4000, scoped, tag = 'scoped mem for output reshape']
    %v2 = vld [vmem:[%s0] ss:$4 sm:$0xff]
    %vm3 = vcmask 261120
    %4 = vst.msk [vmem:[#allocation0] ss:$8 sm:$0xf] %vm3, %v2
    %s5 = scalar_lea.vmem [#allocation0], 4294967265
    %6 = vst.msk [vmem:[%s5] ss:$8 sm:$0xf0] %vm3, %v2
    %s7 = scalar_lea.vmem %s0, 3
    %s8 = smov 3
    %v9 = vld [vmem:[%s7] ss:$16 sm:%s8]
    %s10 = scalar_lea.vmem %s0, 4294967271
    %s11 = smov 12
    %v12 = vld [vmem:[%s10] ss:$16 sm:%s11]
    %vm13 = vcmask 1043458
    %v14 = vsel %vm13, %v12, %v9
    %s15 = scalar_lea.vmem %s0, 4294967243
    %s16 = smov 48
    %v17 = vld [vmem:[%s15] ss:$16 sm:%s16]
    %vm18 = vcmask 1045508
    %v19 = vsel %vm18, %v17, %v14
    %s20 = scalar_lea.vmem %s0, 4294967215
    %s21 = smov 192
    %v22 = vld [vmem:[%s20] ss:$16 sm:%s21]
    %vm23 = vcmask 1047558
    %v24 = vsel %vm23, %v22, %v19
    %25 = vrot.lane.b32.xlu0 %v24, 96
    %v26 = vpop.permute.xlu0 %25
    %vm27 = vcmask 1048320
    %28 = vst.msk [vmem:[#allocation0] sm:$0x3] %vm27, %v26
    %s29 = scalar_lea.vmem [#allocation0], 6
    %30 = vst.msk [vmem:[%s29] sm:$0xc] %vm27, %v26
    %s31 = scalar_lea.vmem [#allocation0], 12
    %32 = vst.msk [vmem:[%s31] sm:$0x30] %vm27, %v26
    %s33 = scalar_lea.vmem [#allocation0], 18
    %34 = vst.msk [vmem:[%s33] sm:$0xc0] %vm27, %v26
    %s35 = scalar_lea.vmem %s0, 2
    %s36 = smov 3
    %v37 = vld [vmem:[%s35] ss:$16 sm:%s36]
    %s38 = scalar_lea.vmem %s0, 4294967270
    %s39 = smov 12
    %v40 = vld [vmem:[%s38] ss:$16 sm:%s39]
    %vm41 = vcmask 1043458
    %v42 = vsel %vm41, %v40, %v37
    %s43 = scalar_lea.vmem %s0, 4294967242
    %s44 = smov 48
    %v45 = vld [vmem:[%s43] ss:$16 sm:%s44]
    %vm46 = vcmask 1045508
    %v47 = vsel %vm46, %v45, %v42
    %s48 = scalar_lea.vmem %s0, 4294967214
    %s49 = smov 192
    %v50 = vld [vmem:[%s48] ss:$16 sm:%s49]
    %vm51 = vcmask 1047558
    %v52 = vsel %vm51, %v50, %v47
    %53 = vrot.lane.b32.xlu0 %v52, 64
    %v54 = vpop.permute.xlu0 %53
    %vm55 = vcmask 785920
    %56 = vst.msk [vmem:[#allocation0] sm:$0x3] %vm55, %v54
    %s57 = scalar_lea.vmem [#allocation0], 6
    %58 = vst.msk [vmem:[%s57] sm:$0xc] %vm55, %v54
    %s59 = scalar_lea.vmem [#allocation0], 12
    %60 = vst.msk [vmem:[%s59] sm:$0x30] %vm55, %v54
    %s61 = scalar_lea.vmem [#allocation0], 18
    %62 = vst.msk [vmem:[%s61] sm:$0xc0] %vm55, %v54
    %s63 = scalar_lea.vmem %s0, 1
    %s64 = smov 3
    %v65 = vld [vmem:[%s63] ss:$16 sm:%s64]
    %s66 = scalar_lea.vmem %s0, 4294967269
    %s67 = smov 12
    %v68 = vld [vmem:[%s66] ss:$16 sm:%s67]
    %vm69 = vcmask 1043458
    %v70 = vsel %vm69, %v68, %v65
    %s71 = scalar_lea.vmem %s0, 4294967241
    %s72 = smov 48
    %v73 = vld [vmem:[%s71] ss:$16 sm:%s72]
    %vm74 = vcmask 1045508
    %v75 = vsel %vm74, %v73, %v70
    %s76 = scalar_lea.vmem %s0, 4294967213
    %s77 = smov 192
    %v78 = vld [vmem:[%s76] ss:$16 sm:%s77]
    %vm79 = vcmask 1047558
    %v80 = vsel %vm79, %v78, %v75
    %81 = vrot.lane.b32.xlu0 %v80, 32
    %v82 = vpop.permute.xlu0 %81
    %vm83 = vcmask 523520
    %84 = vst.msk [vmem:[#allocation0] sm:$0x3] %vm83, %v82
    %s85 = scalar_lea.vmem [#allocation0], 6
    %86 = vst.msk [vmem:[%s85] sm:$0xc] %vm83, %v82
    %s87 = scalar_lea.vmem [#allocation0], 12
    %88 = vst.msk [vmem:[%s87] sm:$0x30] %vm83, %v82
    %s89 = scalar_lea.vmem [#allocation0], 18
    %90 = vst.msk [vmem:[%s89] sm:$0xc0] %vm83, %v82
    %s92 = sshllo.u32 0, 2
    %v94 = vld [vmem:[#allocation0] sm:%s92]
    %s95 = sshllo.u32 0, 2
    %96 = vst [vmem:[%s1] sm:%s95] %v94
    %s97 = scalar_lea.vmem [#allocation0], 8
    %v98 = vld [vmem:[%s97] sm:%s92]
    %s99 = sshllo.u32 0, 2
    %s100 = scalar_lea.vmem %s1, 2
    %101 = vst [vmem:[%s100] sm:%s99] %v98
    %s102 = scalar_lea.vmem [#allocation0], 16
    %v103 = vld [vmem:[%s102] sm:%s92]
    %s104 = sshllo.u32 0, 2
    %s105 = smul.addr 2, 2
    %s106 = scalar_lea.vmem %s1, %s105
    %107 = vst [vmem:[%s106] sm:%s104] %v103
    %s108 = scalar_lea.vmem [#allocation0], 24
    %v109 = vld [vmem:[%s108] sm:%s92]
    %s110 = sshllo.u32 0, 2
    %s111 = smul.addr 2, 3
    %s112 = scalar_lea.vmem %s1, %s111
    %113 = vst [vmem:[%s112] sm:%s110] %v109

// kernel: multimodal_feature_fuser.1
$region0: #{multimodal_feature_fuser.1}
  #allocation0 [shape = 'u32[]', space=smem, size = 0x4, offset = 0x4, fixed_abs, tag = 'smem constant byte address 0x4 - core index']
  #allocation1 [shape = 'u32[144,128]{1,0:T(1,128)}', space=vmem, size = 0x12000, scoped, tag = 'internal scratch']
  #allocation2 [shape = 'f32[22,736]{1,0:T(8,128)}', space=vmem, size = 0x12000, scoped, tag = 'scratch operand']
  #allocation3 [shape = 's32[1]{0}', space=sflag, size = 0x4, scoped, tag = 'scoped memory for multimodal_feature_fuser.1']
  #allocation4 [shape = 'f32[1]{0:T(128)S(6)}', space=smem, size = 0x200, scoped, tag = 'prefetched SMEM operand 0']
  #allocation5 [shape = 'u8[512]{0}', space=smem, size = 0x200, scoped, tag = 'prefetched SMEM operand 1']
  %s0 = inlined_call_operand.<no memory space> [shape: f32[1], index: 0, kind: input, shape index: {}]
  %s1 = inlined_call_operand.vmem [shape: f32[2], index: 1, kind: input, shape index: {}]
  %s2 = inlined_call_operand.vmem [shape: f32[2,16,512], index: 2, kind: input, shape index: {}]
  %s3 = inlined_call_operand.vmem [shape: f32[49,512], index: 3, kind: input, shape index: {}]
  %s4 = inlined_call_operand.vmem [shape: f32[512,16], index: 4, kind: input, shape index: {}]
  %s5 = inlined_call_operand.vmem [shape: f32[16,512], index: 5, kind: input, shape index: {}]
  %s6 = inlined_call_operand.vmem [shape: f32[2,512], index: 6, kind: input, shape index: {}]
  %s7 = inlined_call_operand.vmem [shape: f32[2,512], index: 7, kind: input, shape index: {}]
  %s8 = inlined_call_operand.vmem [shape: f32[1,512], index: 8, kind: input, shape index: {}]
  %s9 = inlined_call_operand.vmem [shape: f32[2,16,512], index: 9, kind: output, shape index: {}]
  %s10 = sld [smem:[#allocation0]]
  $region61: #{multimodal_feature_fuser.1} parent=0
    _
  %s12 = ssub.s32 1, %s10
  %s13 = scalar_select 0, %s12, %s10
  %14 = sst [smem:[#allocation4]] %s0
  %s15 = sshll.u32 %s1, 4
  %s16 = int_to_ptr.vmem [resolvable:$true] %s15
  %18 = dma.vmem_to_smem %s16, 16, [#allocation5], [#allocation3]
  %19 = dma.done [#allocation3], 16
  %20 = sfence
  loop: start=0, step=1, limit=4
  $region2: #{multimodal_feature_fuser.1} parent=0 // loop_pre_header
    _
  $region3: #{multimodal_feature_fuser.1} parent=0 // loop_header
    %s22 = sphi 0, %s26
    %p23 = scmp.ge.s32.totalorder %s22, 4
    %s32 = sphi 0, %s34
    %s35 = sphi 0, %s32
    %s36 = sphi 0, %s35
    %s52 = sphi 0, %s36
    %s56 = sphi 0, %s56
    %s58 = sphi 0, %s56
    %s59 = sphi 0, %s58
    %s73 = sphi 0, %s59
    %s77 = sphi 0, %s77
    %s79 = sphi 0, %s77
    %s80 = sphi 0, %s79
    %s94 = sphi 0, %s80
    %s98 = sphi 0, %s98
    %s100 = sphi 0, %s98
    %s101 = sphi 0, %s100
    %s115 = sphi 0, %s101
    %s119 = sphi 0, %s119
    %s121 = sphi 0, %s119
    %s122 = sphi 0, %s121
    %s136 = sphi 0, %s122
    %s140 = sphi 0, %s140
    %s142 = sphi 0, %s140
    %s143 = sphi 0, %s142
    %s157 = sphi 0, %s143
    %s161 = sphi 0, %s161
    %s163 = sphi 0, %s161
    %s164 = sphi 0, %s163
    %s178 = sphi 0, %s164
    %s184 = sphi 0, %s186
    %s187 = sphi 0, %s184
    %s188 = sphi 0, %s187
    %s204 = sphi 0, %s188
  $region4: #{multimodal_feature_fuser.1} parent=0 // loop_header_branch
    %25 = sbr.rel (%p23) target = $region8
  $region5: #{multimodal_feature_fuser.1} parent=0 // loop_body
    %s27 = ssub.s32 %s22, 1
    %s28 = ssub.s32 %s22, 2
    %s29 = sadd.s32 %s22, 1
    %s30 = ssub.s32 %s22, %s29
    %p31 = scmp.eq.s32.totalorder %s30, 0
    %s33 = sadd.s32 %s32, 1
    %s34 = scalar_select %p31, %s32, %s33
    %p37 = pneg %p31
    %p38 = scmp.eq.s32.totalorder %s22, 1
    %p39 = por %p37, %p38
    %p40 = scmp.ne.s32.totalorder %s32, %s35
    %p41 = scmp.eq.s32.totalorder %s22, 0
    %p42 = por %p40, %p41
    %p43 = scmp.ne.s32.totalorder %s32, %s35
    %p44 = scmp.eq.s32.totalorder %s27, 1
    %p45 = por %p43, %p44
    %p46 = scmp.ne.s32.totalorder %s35, %s36
    %p47 = scmp.eq.s32.totalorder %s27, 0
    %p48 = por %p46, %p47
    %p49 = scmp.ne.s32.totalorder %s35, %s36
    %p50 = scmp.eq.s32.totalorder %s28, 1
    %p51 = por %p49, %p50
    %p53 = scmp.ne.s32.totalorder %s36, %s52
    %p54 = scmp.eq.s32.totalorder %s28, 0
    %p55 = por %p53, %p54
    %s57 = sadd.s32 %s56, 1
    %p60 = scmp.eq.s32.totalorder %s22, 1
    %p61 = scmp.ne.s32.totalorder %s56, %s58
    %p62 = scmp.eq.s32.totalorder %s22, 0
    %p63 = por %p61, %p62
    %p64 = scmp.ne.s32.totalorder %s56, %s58
    %p65 = scmp.eq.s32.totalorder %s27, 1
    %p66 = por %p64, %p65
    %p67 = scmp.ne.s32.totalorder %s58, %s59
    %p68 = scmp.eq.s32.totalorder %s27, 0
    %p69 = por %p67, %p68
    %p70 = scmp.ne.s32.totalorder %s58, %s59
    %p71 = scmp.eq.s32.totalorder %s28, 1
    %p72 = por %p70, %p71
    %p74 = scmp.ne.s32.totalorder %s59, %s73
    %p75 = scmp.eq.s32.totalorder %s28, 0
    %p76 = por %p74, %p75
    %s78 = sadd.s32 %s77, 1
    %p81 = scmp.eq.s32.totalorder %s22, 1
    %p82 = scmp.ne.s32.totalorder %s77, %s79
    %p83 = scmp.eq.s32.totalorder %s22, 0
    %p84 = por %p82, %p83
    %p85 = scmp.ne.s32.totalorder %s77, %s79
    %p86 = scmp.eq.s32.totalorder %s27, 1
    %p87 = por %p85, %p86
    %p88 = scmp.ne.s32.totalorder %s79, %s80
    %p89 = scmp.eq.s32.totalorder %s27, 0
    %p90 = por %p88, %p89
    %p91 = scmp.ne.s32.totalorder %s79, %s80
    %p92 = scmp.eq.s32.totalorder %s28, 1
    %p93 = por %p91, %p92
    %p95 = scmp.ne.s32.totalorder %s80, %s94
    %p96 = scmp.eq.s32.totalorder %s28, 0
    %p97 = por %p95, %p96
    %s99 = sadd.s32 %s98, 1
    %p102 = scmp.eq.s32.totalorder %s22, 1
    %p103 = scmp.ne.s32.totalorder %s98, %s100
    %p104 = scmp.eq.s32.totalorder %s22, 0
    %p105 = por %p103, %p104
    %p106 = scmp.ne.s32.totalorder %s98, %s100
    %p107 = scmp.eq.s32.totalorder %s27, 1
    %p108 = por %p106, %p107
    %p109 = scmp.ne.s32.totalorder %s100, %s101
    %p110 = scmp.eq.s32.totalorder %s27, 0
    %p111 = por %p109, %p110
    %p112 = scmp.ne.s32.totalorder %s100, %s101
    %p113 = scmp.eq.s32.totalorder %s28, 1
    %p114 = por %p112, %p113
    %p116 = scmp.ne.s32.totalorder %s101, %s115
    %p117 = scmp.eq.s32.totalorder %s28, 0
    %p118 = por %p116, %p117
    %s120 = sadd.s32 %s119, 1
    %p123 = scmp.eq.s32.totalorder %s22, 1
    %p124 = scmp.ne.s32.totalorder %s119, %s121
    %p125 = scmp.eq.s32.totalorder %s22, 0
    %p126 = por %p124, %p125
    %p127 = scmp.ne.s32.totalorder %s119, %s121
    %p128 = scmp.eq.s32.totalorder %s27, 1
    %p129 = por %p127, %p128
    %p130 = scmp.ne.s32.totalorder %s121, %s122
    %p131 = scmp.eq.s32.totalorder %s27, 0
    %p132 = por %p130, %p131
    %p133 = scmp.ne.s32.totalorder %s121, %s122
    %p134 = scmp.eq.s32.totalorder %s28, 1
    %p135 = por %p133, %p134
    %p137 = scmp.ne.s32.totalorder %s122, %s136
    %p138 = scmp.eq.s32.totalorder %s28, 0
    %p139 = por %p137, %p138
    %s141 = sadd.s32 %s140, 1
    %p144 = scmp.eq.s32.totalorder %s22, 1
    %p145 = scmp.ne.s32.totalorder %s140, %s142
    %p146 = scmp.eq.s32.totalorder %s22, 0
    %p147 = por %p145, %p146
    %p148 = scmp.ne.s32.totalorder %s140, %s142
    %p149 = scmp.eq.s32.totalorder %s27, 1
    %p150 = por %p148, %p149
    %p151 = scmp.ne.s32.totalorder %s142, %s143
    %p152 = scmp.eq.s32.totalorder %s27, 0
    %p153 = por %p151, %p152
    %p154 = scmp.ne.s32.totalorder %s142, %s143
    %p155 = scmp.eq.s32.totalorder %s28, 1
    %p156 = por %p154, %p155
    %p158 = scmp.ne.s32.totalorder %s143, %s157
    %p159 = scmp.eq.s32.totalorder %s28, 0
    %p160 = por %p158, %p159
    %s162 = sadd.s32 %s161, 1
    %p165 = scmp.eq.s32.totalorder %s22, 1
    %p166 = scmp.ne.s32.totalorder %s161, %s163
    %p167 = scmp.eq.s32.totalorder %s22, 0
    %p168 = por %p166, %p167
    %p169 = scmp.ne.s32.totalorder %s161, %s163
    %p170 = scmp.eq.s32.totalorder %s27, 1
    %p171 = por %p169, %p170
    %p172 = scmp.ne.s32.totalorder %s163, %s164
    %p173 = scmp.eq.s32.totalorder %s27, 0
    %p174 = por %p172, %p173
    %p175 = scmp.ne.s32.totalorder %s163, %s164
    %p176 = scmp.eq.s32.totalorder %s28, 1
    %p177 = por %p175, %p176
    %p179 = scmp.ne.s32.totalorder %s164, %s178
    %p180 = scmp.eq.s32.totalorder %s28, 0
    %p181 = por %p179, %p180
    %s182 = ssub.s32 %s22, %s29
    %p183 = scmp.eq.s32.totalorder %s182, 0
    %s185 = sadd.s32 %s184, 1
    %s186 = scalar_select %p183, %s184, %s185
    %p189 = pneg %p183
    %p190 = scmp.eq.s32.totalorder %s22, 1
    %p191 = por %p189, %p190
    %p192 = scmp.ne.s32.totalorder %s184, %s187
    %p193 = scmp.eq.s32.totalorder %s22, 0
    %p194 = por %p192, %p193
    %p195 = scmp.ne.s32.totalorder %s184, %s187
    %p196 = scmp.eq.s32.totalorder %s27, 1
    %p197 = por %p195, %p196
    %p198 = scmp.ne.s32.totalorder %s187, %s188
    %p199 = scmp.eq.s32.totalorder %s27, 0
    %p200 = por %p198, %p199
    %p201 = scmp.ne.s32.totalorder %s187, %s188
    %p202 = scmp.eq.s32.totalorder %s28, 1
    %p203 = por %p201, %p202
    %p205 = scmp.ne.s32.totalorder %s188, %s204
    %p206 = scmp.eq.s32.totalorder %s28, 0
    %p207 = por %p205, %p206
    %p208 = scmp.le.s32.totalorder 1, %s22
    %p209 = scmp.lt.s32.totalorder %s22, 3
    %p210 = pnand %p208, %p209
    %p211 = pneg %p210
    // Predicated region
    $region9: #{multimodal_feature_fuser.1} parent=5 // pred_check
      _
    $region10: #{multimodal_feature_fuser.1} parent=5 // pred_check_branch
      %213 = sbr.rel (%p210) target = $region12
    $region11: #{multimodal_feature_fuser.1} parent=5 // pred_region
      %s214 = ssub.s32 %s22, 1
      // Predicated region
      $region13: #{multimodal_feature_fuser.1} parent=11 // pred_check
        %p215 = pneg %p69
      $region14: #{multimodal_feature_fuser.1} parent=11 // pred_check_branch
        %217 = sbr.rel (%p215) target = $region16
      $region15: #{multimodal_feature_fuser.1} parent=11 // pred_region
        _
      $region16: #{multimodal_feature_fuser.1} parent=11 // pred_fallthru
        _
      // Predicated region
      $region17: #{multimodal_feature_fuser.1} parent=11 // pred_check
        %p218 = pneg %p90
      $region18: #{multimodal_feature_fuser.1} parent=11 // pred_check_branch
        %220 = sbr.rel (%p218) target = $region20
      $region19: #{multimodal_feature_fuser.1} parent=11 // pred_region
        _
      $region20: #{multimodal_feature_fuser.1} parent=11 // pred_fallthru
        _
      // Predicated region
      $region21: #{multimodal_feature_fuser.1} parent=11 // pred_check
        %p221 = pneg %p111
      $region22: #{multimodal_feature_fuser.1} parent=11 // pred_check_branch
        %223 = sbr.rel (%p221) target = $region24
      $region23: #{multimodal_feature_fuser.1} parent=11 // pred_region
        _
      $region24: #{multimodal_feature_fuser.1} parent=11 // pred_fallthru
        _
      // Predicated region
      $region25: #{multimodal_feature_fuser.1} parent=11 // pred_check
        %p224 = pneg %p132
      $region26: #{multimodal_feature_fuser.1} parent=11 // pred_check_branch
        %226 = sbr.rel (%p224) target = $region28
      $region27: #{multimodal_feature_fuser.1} parent=11 // pred_region
        _
      $region28: #{multimodal_feature_fuser.1} parent=11 // pred_fallthru
        _
      // Predicated region
      $region29: #{multimodal_feature_fuser.1} parent=11 // pred_check
        %p227 = pneg %p153
      $region30: #{multimodal_feature_fuser.1} parent=11 // pred_check_branch
        %229 = sbr.rel (%p227) target = $region32
      $region31: #{multimodal_feature_fuser.1} parent=11 // pred_region
        _
      $region32: #{multimodal_feature_fuser.1} parent=11 // pred_fallthru
        _
      // Predicated region
      $region33: #{multimodal_feature_fuser.1} parent=11 // pred_check
        %p230 = pneg %p174
      $region34: #{multimodal_feature_fuser.1} parent=11 // pred_check_branch
        %232 = sbr.rel (%p230) target = $region36
      $region35: #{multimodal_feature_fuser.1} parent=11 // pred_region
        _
      $region36: #{multimodal_feature_fuser.1} parent=11 // pred_fallthru
        _
    $region12: #{multimodal_feature_fuser.1} parent=5 // pred_fallthru
      _
    %p233 = scmp.lt.s32.totalorder %s22, 2
    // Predicated region
    $region37: #{multimodal_feature_fuser.1} parent=5 // pred_check
      %p234 = pneg %p233
    $region38: #{multimodal_feature_fuser.1} parent=5 // pred_check_branch
      %236 = sbr.rel (%p234) target = $region40
    $region39: #{multimodal_feature_fuser.1} parent=5 // pred_region
      // Predicated region
      $region41: #{multimodal_feature_fuser.1} parent=39 // pred_check
        %p237 = pneg %p42
      $region42: #{multimodal_feature_fuser.1} parent=39 // pred_check_branch
        %239 = sbr.rel (%p237) target = $region44
      $region43: #{multimodal_feature_fuser.1} parent=39 // pred_region
        %p240 = scmp.lt.s32.totalorder %s22, 1
        %s241 = scalar_select %p240, %s22, 1
        %s242 = smul.addr %s241, 8
        %s243 = smul.addr %s242, 8
        %s244 = scalar_lea.vmem %s2, %s243
      $region44: #{multimodal_feature_fuser.1} parent=39 // pred_fallthru
        _
    $region40: #{multimodal_feature_fuser.1} parent=5 // pred_fallthru
      _
    %p245 = scmp.le.s32.totalorder 1, %s22
    %p246 = scmp.lt.s32.totalorder %s22, 3
    %p247 = pnand %p245, %p246
    %p248 = pneg %p247
    // Predicated region
    $region45: #{multimodal_feature_fuser.1} parent=5 // pred_check
      _
    $region46: #{multimodal_feature_fuser.1} parent=5 // pred_check_branch
      %250 = sbr.rel (%p247) target = $region48
    $region47: #{multimodal_feature_fuser.1} parent=5 // pred_region
      %s251 = ssub.s32 %s22, 1
      %p252 = scmp.lt.s32.totalorder %s27, 1
      %s253 = scalar_select %p252, %s27, 1
      %s254 = smul.addr %s253, 8
      %s255 = smul.addr %s254, 8
      %s256 = scalar_lea.vmem %s2, %s255
      %p257 = pneg %p48
      %p258 = pneg %p45
      %p259 = pneg %p69
      %p260 = pneg %p66
      %p261 = pneg %p90
      %p262 = pneg %p87
      %p263 = pneg %p111
      %p264 = pneg %p108
      %p265 = pneg %p132
      %p266 = pneg %p129
      %p267 = pneg %p153
      %p268 = pneg %p150
      %p269 = pneg %p174
      %p270 = pneg %p171
      %p271 = pneg %p200
      %p272 = pneg %p197
      %p273 = scmp.lt.s32.totalorder %s27, 1
      %s274 = scalar_select %p273, %s27, 1
      %s275 = smul.addr %s274, 8
      %s276 = smul.addr %s275, 8
      %s277 = scalar_lea.vmem %s9, %s276
      %p278 = scmp.lt.s32.totalorder %s27, 1
      %s279 = scalar_select %p278, %s27, 1
      %s280 = smul.addr %s279, 8
      %s281 = smul.addr %s280, 8
      %s282 = scalar_lea.vmem %s2, %s281
      %p283 = scmp.lt.s32.totalorder %s27, 1
      %s284 = scalar_select %p283, %s27, 1
      %s285 = smul.addr %s284, 8
      %s286 = smul.addr %s285, 8
      %s287 = scalar_lea.vmem %s9, %s286
      %v288 = vld [vmem:[%s282] sm:$0xff]
      %v289 = vld [vmem:[%s282 + $0x8] sm:$0xff]
      %v290 = vld [vmem:[%s282 + $0x10] sm:$0xff]
      %v291 = vld [vmem:[%s282 + $0x18] sm:$0xff]
      %v292 = vld [vmem:[%s282 + $0x20] sm:$0xff]
      %v293 = vld [vmem:[%s282 + $0x28] sm:$0xff]
      %v294 = vld [vmem:[%s282 + $0x30] sm:$0xff]
      %v295 = vld [vmem:[%s282 + $0x38] sm:$0xff]
      %296 = vst [vmem:[#allocation2] sm:$0xff] 0.0
      %297 = vst [vmem:[#allocation2 + $0x8] sm:$0xff] 0.0
      %298 = vst [vmem:[#allocation2 + $0x10] sm:$0xff] 0.0
      %299 = vst [vmem:[#allocation2 + $0x18] sm:$0xff] 0.0
      %300 = vst [vmem:[#allocation2 + $0x20] sm:$0xff] 0.0
      %vm301 = vcmask 785408
      %302 = vst.msk [vmem:[#allocation2 + $0x28] sm:$0xff] %vm301, 0.0
      %303 = vst [vmem:[#allocation2 + $0x30] sm:$0xff] 0.0
      %304 = vst [vmem:[#allocation2 + $0x38] sm:$0xff] 0.0
      %305 = vst [vmem:[#allocation2 + $0x40] sm:$0xff] 0.0
      %306 = vst [vmem:[#allocation2 + $0x48] sm:$0xff] 0.0
      %307 = vst [vmem:[#allocation2 + $0x50] sm:$0xff] 0.0
      %308 = vst.msk [vmem:[#allocation2 + $0x58] sm:$0xff] %vm301, 0.0
      %309 = vst [vmem:[#allocation2 + $0x60] sm:$0x3f] 0.0
      %310 = vst [vmem:[#allocation2 + $0x68] sm:$0x3f] 0.0
      %311 = vst [vmem:[#allocation2 + $0x70] sm:$0x3f] 0.0
      %312 = vst [vmem:[#allocation2 + $0x78] sm:$0x3f] 0.0
      %313 = vst [vmem:[#allocation2 + $0x80] sm:$0x3f] 0.0
      %vm314 = vcmask 783360
      %315 = vst.msk [vmem:[#allocation2 + $0x88] sm:$0x3f] %vm314, 0.0
      %vm324 = vcmask 1042432
      %v325 = vrot.slane %v288, 5
      %v326 = vrot.slane %v289, 5
      %v327 = vrot.slane %v290, 5
      %v328 = vrot.slane %v291, 5
      %v329 = vrot.slane %v292, 5
      %v330 = vsel %vm324, %v325, %v329
      %v331 = vrot.slane %v293, 5
      %v332 = vsel %vm324, %v326, %v331
      %v333 = vrot.slane %v294, 5
      %v334 = vsel %vm324, %v327, %v333
      %v335 = vrot.slane %v295, 5
      %v336 = vsel %vm324, %v328, %v335
      %349 = vst [vmem:[#allocation2 + $0x8] sm:$0xf8] %v325
      %350 = vst [vmem:[#allocation2 + $0x10] sm:$0xf8] %v326
      %351 = vst [vmem:[#allocation2 + $0x18] sm:$0xf8] %v327
      %352 = vst [vmem:[#allocation2 + $0x20] sm:$0xf8] %v328
      %353 = vst [vmem:[#allocation2 + $0x38] sm:$0xff] %v330
      %354 = vst [vmem:[#allocation2 + $0x40] sm:$0xff] %v332
      %355 = vst [vmem:[#allocation2 + $0x48] sm:$0xff] %v334
      %356 = vst [vmem:[#allocation2 + $0x50] sm:$0xff] %v336
      %357 = vst [vmem:[#allocation2 + $0x68] sm:$0x7] %v329
      %358 = vst [vmem:[#allocation2 + $0x70] sm:$0x7] %v331
      %359 = vst [vmem:[#allocation2 + $0x78] sm:$0x7] %v333
      %360 = vst [vmem:[#allocation2 + $0x80] sm:$0x7] %v335
      %v361 = vld [vmem:[#allocation2] sm:$0xff]
      %v362 = vld [vmem:[#allocation2 + $0x8] sm:$0xff]
      %v363 = vld [vmem:[#allocation2 + $0x10] sm:$0xff]
      %v364 = vld [vmem:[#allocation2 + $0x18] sm:$0xff]
      %v365 = vld [vmem:[#allocation2 + $0x20] sm:$0xff]
      %v366 = vld [vmem:[#allocation2 + $0x30] sm:$0xff]
      %v367 = vld [vmem:[#allocation2 + $0x38] sm:$0xff]
      %v368 = vld [vmem:[#allocation2 + $0x40] sm:$0xff]
      %v369 = vld [vmem:[#allocation2 + $0x48] sm:$0xff]
      %v370 = vld [vmem:[#allocation2 + $0x50] sm:$0xff]
      %v371 = vld [vmem:[#allocation2 + $0x60] sm:$0x3f]
      %v372 = vld [vmem:[#allocation2 + $0x68] sm:$0x3f]
      %v373 = vld [vmem:[#allocation2 + $0x70] sm:$0x3f]
      %v374 = vld [vmem:[#allocation2 + $0x78] sm:$0x3f]
      %v375 = vld [vmem:[#allocation2 + $0x80] sm:$0x3f]
      %v376 = vld [vmem:[%s3] ss:$8 sm:$0xf]
      %v378 = vlaneseq
      %v379 = vshrl.u32 %v378, 7
      %v380 = vsub.s32 0, %v379
      %v381 = vrot.slane %v376, %v380
      %v382 = vlaneseq
      %v383 = vshrl.u32 %v382, 7
      %v384 = vsub.s32 1, %v383
      %v385 = vrot.slane %v376, %v384
      %v386 = vlaneseq
      %v387 = vshrl.u32 %v386, 7
      %v388 = vsub.s32 2, %v387
      %v389 = vrot.slane %v376, %v388
      %v390 = vlaneseq
      %v391 = vshrl.u32 %v390, 7
      %v392 = vsub.s32 3, %v391
      %v393 = vrot.slane %v376, %v392
      %394 = vrot.lane.b32.xlu0 %v381, 32
      %v395 = vpop.permute.xlu0 %394
      %396 = vrot.lane.b32.xlu0 %v385, 32
      %v397 = vpop.permute.xlu0 %396
      %398 = vrot.lane.b32.xlu0 %v389, 32
      %v399 = vpop.permute.xlu0 %398
      %400 = vrot.lane.b32.xlu0 %v393, 32
      %v401 = vpop.permute.xlu0 %400
      %vm402 = vcmask 261120
      %v403 = vsel %vm402, %v395, %v397
      %v404 = vsel %vm402, %v397, %v399
      %v405 = vsel %vm402, %v399, %v401
      %v411 = vmul.f32 %v361, %v395
      %v412 = vmul.f32 %v362, %v403
      %v413 = vmul.f32 %v363, %v404
      %v414 = vmul.f32 %v364, %v405
      %v415 = vmul.f32 %v365, %v401
      %v416 = vmul.f32 %v366, %v395
      %v417 = vmul.f32 %v367, %v403
      %v418 = vmul.f32 %v368, %v404
      %v419 = vmul.f32 %v369, %v405
      %v420 = vmul.f32 %v370, %v401
      %v421 = vadd.f32 %v411, 0.0
      %v422 = vadd.f32 %v412, 0.0
      %v423 = vadd.f32 %v413, 0.0
      %v424 = vadd.f32 %v414, 0.0
      %v425 = vadd.f32 %v415, 0.0
      %v426 = vadd.f32 %v416, 0.0
      %v427 = vadd.f32 %v417, 0.0
      %v428 = vadd.f32 %v418, 0.0
      %v429 = vadd.f32 %v419, 0.0
      %v430 = vadd.f32 %v420, 0.0
      %s431 = scalar_lea.vmem %s3, 7
      %v432 = vld [vmem:[%s431] ss:$8 sm:$0xf]
      %v434 = vlaneseq
      %v435 = vshrl.u32 %v434, 7
      %v436 = vsub.s32 0, %v435
      %v437 = vrot.slane %v432, %v436
      %v438 = vlaneseq
      %v439 = vshrl.u32 %v438, 7
      %v440 = vsub.s32 1, %v439
      %v441 = vrot.slane %v432, %v440
      %v442 = vlaneseq
      %v443 = vshrl.u32 %v442, 7
      %v444 = vsub.s32 2, %v443
      %v445 = vrot.slane %v432, %v444
      %v446 = vlaneseq
      %v447 = vshrl.u32 %v446, 7
      %v448 = vsub.s32 3, %v447
      %v449 = vrot.slane %v432, %v448
      %450 = vrot.lane.b32.xlu0 %v437, 32
      %v451 = vpop.permute.xlu0 %450
      %452 = vrot.lane.b32.xlu0 %v441, 32
      %v453 = vpop.permute.xlu0 %452
      %454 = vrot.lane.b32.xlu0 %v445, 32
      %v455 = vpop.permute.xlu0 %454
      %456 = vrot.lane.b32.xlu0 %v449, 32
      %v457 = vpop.permute.xlu0 %456
      %v458 = vsel %vm402, %v451, %v453
      %v459 = vsel %vm402, %v453, %v455
      %v460 = vsel %vm402, %v455, %v457
      %v466 = vmul.f32 %v361, %v451
      %v467 = vmul.f32 %v362, %v458
      %v468 = vmul.f32 %v363, %v459
      %v469 = vmul.f32 %v364, %v460
      %v470 = vmul.f32 %v365, %v457
      %v471 = vmul.f32 %v366, %v451
      %v472 = vmul.f32 %v367, %v458
      %v473 = vmul.f32 %v368, %v459
      %v474 = vmul.f32 %v369, %v460
      %v475 = vmul.f32 %v370, %v457
      %v476 = vmul.f32 %v371, %v451
      %v477 = vmul.f32 %v372, %v458
      %v478 = vmul.f32 %v373, %v459
      %v479 = vmul.f32 %v374, %v460
      %v480 = vmul.f32 %v375, %v457
      %vm496 = vcmask 1046528
      %v497 = vrot.slane %v466, 1
      %v498 = vrot.slane %v471, 1
      %v499 = vsel %vm496, %v497, %v498
      %v500 = vrot.slane %v467, 1
      %v501 = vrot.slane %v472, 1
      %v502 = vsel %vm496, %v500, %v501
      %v503 = vrot.slane %v468, 1
      %v504 = vrot.slane %v473, 1
      %v505 = vsel %vm496, %v503, %v504
      %v506 = vrot.slane %v469, 1
      %v507 = vrot.slane %v474, 1
      %v508 = vsel %vm496, %v506, %v507
      %v509 = vrot.slane %v470, 1
      %v510 = vrot.slane %v475, 1
      %v511 = vsel %vm496, %v509, %v510
      %v512 = vrot.slane %v476, 1
      %v513 = vsel %vm496, %v498, %v512
      %v514 = vrot.slane %v477, 1
      %v515 = vsel %vm496, %v501, %v514
      %v516 = vrot.slane %v478, 1
      %v517 = vsel %vm496, %v504, %v516
      %v518 = vrot.slane %v479, 1
      %v519 = vsel %vm496, %v507, %v518
      %v520 = vrot.slane %v480, 1
      %v521 = vsel %vm496, %v510, %v520
      %v532 = vadd.f32 %v421, %v499
      %v533 = vadd.f32 %v422, %v502
      %v534 = vadd.f32 %v423, %v505
      %v535 = vadd.f32 %v424, %v508
      %v536 = vadd.f32 %v425, %v511
      %v537 = vadd.f32 %v426, %v513
      %v538 = vadd.f32 %v427, %v515
      %v539 = vadd.f32 %v428, %v517
      %v540 = vadd.f32 %v429, %v519
      %v541 = vadd.f32 %v430, %v521
      %s542 = scalar_lea.vmem %s3, 38
      %v543 = vld [vmem:[%s542] ss:$8 sm:$0xf]
      %v545 = vlaneseq
      %v546 = vshrl.u32 %v545, 7
      %v547 = vsub.s32 0, %v546
      %v548 = vrot.slane %v543, %v547
      %v549 = vlaneseq
      %v550 = vshrl.u32 %v549, 7
      %v551 = vsub.s32 1, %v550
      %v552 = vrot.slane %v543, %v551
      %v553 = vlaneseq
      %v554 = vshrl.u32 %v553, 7
      %v555 = vsub.s32 2, %v554
      %v556 = vrot.slane %v543, %v555
      %v557 = vlaneseq
      %v558 = vshrl.u32 %v557, 7
      %v559 = vsub.s32 3, %v558
      %v560 = vrot.slane %v543, %v559
      %561 = vrot.lane.b32.xlu0 %v548, 32
      %v562 = vpop.permute.xlu0 %561
      %563 = vrot.lane.b32.xlu0 %v552, 32
      %v564 = vpop.permute.xlu0 %563
      %565 = vrot.lane.b32.xlu0 %v556, 32
      %v566 = vpop.permute.xlu0 %565
      %567 = vrot.lane.b32.xlu0 %v560, 32
      %v568 = vpop.permute.xlu0 %567
      %v569 = vsel %vm402, %v562, %v564
      %v570 = vsel %vm402, %v564, %v566
      %v571 = vsel %vm402, %v566, %v568
      %v577 = vmul.f32 %v361, %v562
      %v578 = vmul.f32 %v362, %v569
      %v579 = vmul.f32 %v363, %v570
      %v580 = vmul.f32 %v364, %v571
      %v581 = vmul.f32 %v365, %v568
      %v582 = vmul.f32 %v366, %v562
      %v583 = vmul.f32 %v367, %v569
      %v584 = vmul.f32 %v368, %v570
      %v585 = vmul.f32 %v369, %v571
      %v586 = vmul.f32 %v370, %v568
      %v587 = vmul.f32 %v371, %v562
      %v588 = vmul.f32 %v372, %v569
      %v589 = vmul.f32 %v373, %v570
      %v590 = vmul.f32 %v374, %v571
      %v591 = vmul.f32 %v375, %v568
      %vm607 = vcmask 1045504
      %v608 = vrot.slane %v577, 2
      %v609 = vrot.slane %v582, 2
      %v610 = vsel %vm607, %v608, %v609
      %v611 = vrot.slane %v578, 2
      %v612 = vrot.slane %v583, 2
      %v613 = vsel %vm607, %v611, %v612
      %v614 = vrot.slane %v579, 2
      %v615 = vrot.slane %v584, 2
      %v616 = vsel %vm607, %v614, %v615
      %v617 = vrot.slane %v580, 2
      %v618 = vrot.slane %v585, 2
      %v619 = vsel %vm607, %v617, %v618
      %v620 = vrot.slane %v581, 2
      %v621 = vrot.slane %v586, 2
      %v622 = vsel %vm607, %v620, %v621
      %v623 = vrot.slane %v587, 2
      %v624 = vsel %vm607, %v609, %v623
      %v625 = vrot.slane %v588, 2
      %v626 = vsel %vm607, %v612, %v625
      %v627 = vrot.slane %v589, 2
      %v628 = vsel %vm607, %v615, %v627
      %v629 = vrot.slane %v590, 2
      %v630 = vsel %vm607, %v618, %v629
      %v631 = vrot.slane %v591, 2
      %v632 = vsel %vm607, %v621, %v631
      %v643 = vadd.f32 %v532, %v610
      %v644 = vadd.f32 %v533, %v613
      %v645 = vadd.f32 %v534, %v616
      %v646 = vadd.f32 %v535, %v619
      %v647 = vadd.f32 %v536, %v622
      %v648 = vadd.f32 %v537, %v624
      %v649 = vadd.f32 %v538, %v626
      %v650 = vadd.f32 %v539, %v628
      %v651 = vadd.f32 %v540, %v630
      %v652 = vadd.f32 %v541, %v632
      %s653 = scalar_lea.vmem %s3, 69
      %v654 = vld [vmem:[%s653] ss:$8 sm:$0xf]
      %v656 = vlaneseq
      %v657 = vshrl.u32 %v656, 7
      %v658 = vsub.s32 0, %v657
      %v659 = vrot.slane %v654, %v658
      %v660 = vlaneseq
      %v661 = vshrl.u32 %v660, 7
      %v662 = vsub.s32 1, %v661
      %v663 = vrot.slane %v654, %v662
      %v664 = vlaneseq
      %v665 = vshrl.u32 %v664, 7
      %v666 = vsub.s32 2, %v665
      %v667 = vrot.slane %v654, %v666
      %v668 = vlaneseq
      %v669 = vshrl.u32 %v668, 7
      %v670 = vsub.s32 3, %v669
      %v671 = vrot.slane %v654, %v670
      %672 = vrot.lane.b32.xlu0 %v659, 32
      %v673 = vpop.permute.xlu0 %672
      %674 = vrot.lane.b32.xlu0 %v663, 32
      %v675 = vpop.permute.xlu0 %674
      %676 = vrot.lane.b32.xlu0 %v667, 32
      %v677 = vpop.permute.xlu0 %676
      %678 = vrot.lane.b32.xlu0 %v671, 32
      %v679 = vpop.permute.xlu0 %678
      %v680 = vsel %vm402, %v673, %v675
      %v681 = vsel %vm402, %v675, %v677
      %v682 = vsel %vm402, %v677, %v679
      %v688 = vmul.f32 %v361, %v673
      %v689 = vmul.f32 %v362, %v680
      %v690 = vmul.f32 %v363, %v681
      %v691 = vmul.f32 %v364, %v682
      %v692 = vmul.f32 %v365, %v679
      %v693 = vmul.f32 %v366, %v673
      %v694 = vmul.f32 %v367, %v680
      %v695 = vmul.f32 %v368, %v681
      %v696 = vmul.f32 %v369, %v682
      %v697 = vmul.f32 %v370, %v679
      %v698 = vmul.f32 %v371, %v673
      %v699 = vmul.f32 %v372, %v680
      %v700 = vmul.f32 %v373, %v681
      %v701 = vmul.f32 %v374, %v682
      %v702 = vmul.f32 %v375, %v679
      %vm718 = vcmask 1044480
      %v719 = vrot.slane %v688, 3
      %v720 = vrot.slane %v693, 3
      %v721 = vsel %vm718, %v719, %v720
      %v722 = vrot.slane %v689, 3
      %v723 = vrot.slane %v694, 3
      %v724 = vsel %vm718, %v722, %v723
      %v725 = vrot.slane %v690, 3
      %v726 = vrot.slane %v695, 3
      %v727 = vsel %vm718, %v725, %v726
      %v728 = vrot.slane %v691, 3
      %v729 = vrot.slane %v696, 3
      %v730 = vsel %vm718, %v728, %v729
      %v731 = vrot.slane %v692, 3
      %v732 = vrot.slane %v697, 3
      %v733 = vsel %vm718, %v731, %v732
      %v734 = vrot.slane %v698, 3
      %v735 = vsel %vm718, %v720, %v734
      %v736 = vrot.slane %v699, 3
      %v737 = vsel %vm718, %v723, %v736
      %v738 = vrot.slane %v700, 3
      %v739 = vsel %vm718, %v726, %v738
      %v740 = vrot.slane %v701, 3
      %v741 = vsel %vm718, %v729, %v740
      %v742 = vrot.slane %v702, 3
      %v743 = vsel %vm718, %v732, %v742
      %v754 = vadd.f32 %v643, %v721
      %v755 = vadd.f32 %v644, %v724
      %v756 = vadd.f32 %v645, %v727
      %v757 = vadd.f32 %v646, %v730
      %v758 = vadd.f32 %v647, %v733
      %v759 = vadd.f32 %v648, %v735
      %v760 = vadd.f32 %v649, %v737
      %v761 = vadd.f32 %v650, %v739
      %v762 = vadd.f32 %v651, %v741
      %v763 = vadd.f32 %v652, %v743
      %s764 = scalar_lea.vmem %s3, 100
      %v765 = vld [vmem:[%s764] ss:$8 sm:$0xf]
      %v767 = vlaneseq
      %v768 = vshrl.u32 %v767, 7
      %v769 = vsub.s32 0, %v768
      %v770 = vrot.slane %v765, %v769
      %v771 = vlaneseq
      %v772 = vshrl.u32 %v771, 7
      %v773 = vsub.s32 1, %v772
      %v774 = vrot.slane %v765, %v773
      %v775 = vlaneseq
      %v776 = vshrl.u32 %v775, 7
      %v777 = vsub.s32 2, %v776
      %v778 = vrot.slane %v765, %v777
      %v779 = vlaneseq
      %v780 = vshrl.u32 %v779, 7
      %v781 = vsub.s32 3, %v780
      %v782 = vrot.slane %v765, %v781
      %783 = vrot.lane.b32.xlu0 %v770, 32
      %v784 = vpop.permute.xlu0 %783
      %785 = vrot.lane.b32.xlu0 %v774, 32
      %v786 = vpop.permute.xlu0 %785
      %787 = vrot.lane.b32.xlu0 %v778, 32
      %v788 = vpop.permute.xlu0 %787
      %789 = vrot.lane.b32.xlu0 %v782, 32
      %v790 = vpop.permute.xlu0 %789
      %v791 = vsel %vm402, %v784, %v786
      %v792 = vsel %vm402, %v786, %v788
      %v793 = vsel %vm402, %v788, %v790
      %v799 = vmul.f32 %v361, %v784
      %v800 = vmul.f32 %v362, %v791
      %v801 = vmul.f32 %v363, %v792
      %v802 = vmul.f32 %v364, %v793
      %v803 = vmul.f32 %v365, %v790
      %v804 = vmul.f32 %v366, %v784
      %v805 = vmul.f32 %v367, %v791
      %v806 = vmul.f32 %v368, %v792
      %v807 = vmul.f32 %v369, %v793
      %v808 = vmul.f32 %v370, %v790
      %v809 = vmul.f32 %v371, %v784
      %v810 = vmul.f32 %v372, %v791
      %v811 = vmul.f32 %v373, %v792
      %v812 = vmul.f32 %v374, %v793
      %v813 = vmul.f32 %v375, %v790
      %vm829 = vcmask 1043456
      %v830 = vrot.slane %v799, 4
      %v831 = vrot.slane %v804, 4
      %v832 = vsel %vm829, %v830, %v831
      %v833 = vrot.slane %v800, 4
      %v834 = vrot.slane %v805, 4
      %v835 = vsel %vm829, %v833, %v834
      %v836 = vrot.slane %v801, 4
      %v837 = vrot.slane %v806, 4
      %v838 = vsel %vm829, %v836, %v837
      %v839 = vrot.slane %v802, 4
      %v840 = vrot.slane %v807, 4
      %v841 = vsel %vm829, %v839, %v840
      %v842 = vrot.slane %v803, 4
      %v843 = vrot.slane %v808, 4
      %v844 = vsel %vm829, %v842, %v843
      %v845 = vrot.slane %v809, 4
      %v846 = vsel %vm829, %v831, %v845
      %v847 = vrot.slane %v810, 4
      %v848 = vsel %vm829, %v834, %v847
      %v849 = vrot.slane %v811, 4
      %v850 = vsel %vm829, %v837, %v849
      %v851 = vrot.slane %v812, 4
      %v852 = vsel %vm829, %v840, %v851
      %v853 = vrot.slane %v813, 4
      %v854 = vsel %vm829, %v843, %v853
      %v865 = vadd.f32 %v754, %v832
      %v866 = vadd.f32 %v755, %v835
      %v867 = vadd.f32 %v756, %v838
      %v868 = vadd.f32 %v757, %v841
      %v869 = vadd.f32 %v758, %v844
      %v870 = vadd.f32 %v759, %v846
      %v871 = vadd.f32 %v760, %v848
      %v872 = vadd.f32 %v761, %v850
      %v873 = vadd.f32 %v762, %v852
      %v874 = vadd.f32 %v763, %v854
      %s875 = scalar_lea.vmem %s3, 131
      %v876 = vld [vmem:[%s875] ss:$8 sm:$0xf]
      %v878 = vlaneseq
      %v879 = vshrl.u32 %v878, 7
      %v880 = vsub.s32 0, %v879
      %v881 = vrot.slane %v876, %v880
      %v882 = vlaneseq
      %v883 = vshrl.u32 %v882, 7
      %v884 = vsub.s32 1, %v883
      %v885 = vrot.slane %v876, %v884
      %v886 = vlaneseq
      %v887 = vshrl.u32 %v886, 7
      %v888 = vsub.s32 2, %v887
      %v889 = vrot.slane %v876, %v888
      %v890 = vlaneseq
      %v891 = vshrl.u32 %v890, 7
      %v892 = vsub.s32 3, %v891
      %v893 = vrot.slane %v876, %v892
      %894 = vrot.lane.b32.xlu0 %v881, 32
      %v895 = vpop.permute.xlu0 %894
      %896 = vrot.lane.b32.xlu0 %v885, 32
      %v897 = vpop.permute.xlu0 %896
      %898 = vrot.lane.b32.xlu0 %v889, 32
      %v899 = vpop.permute.xlu0 %898
      %900 = vrot.lane.b32.xlu0 %v893, 32
      %v901 = vpop.permute.xlu0 %900
      %v902 = vsel %vm402, %v895, %v897
      %v903 = vsel %vm402, %v897, %v899
      %v904 = vsel %vm402, %v899, %v901
      %v910 = vmul.f32 %v361, %v895
      %v911 = vmul.f32 %v362, %v902
      %v912 = vmul.f32 %v363, %v903
      %v913 = vmul.f32 %v364, %v904
      %v914 = vmul.f32 %v365, %v901
      %v915 = vmul.f32 %v366, %v895
      %v916 = vmul.f32 %v367, %v902
      %v917 = vmul.f32 %v368, %v903
      %v918 = vmul.f32 %v369, %v904
      %v919 = vmul.f32 %v370, %v901
      %v920 = vmul.f32 %v371, %v895
      %v921 = vmul.f32 %v372, %v902
      %v922 = vmul.f32 %v373, %v903
      %v923 = vmul.f32 %v374, %v904
      %v924 = vmul.f32 %v375, %v901
      %v940 = vrot.slane %v910, 5
      %v941 = vrot.slane %v915, 5
      %v942 = vsel %vm324, %v940, %v941
      %v943 = vrot.slane %v911, 5
      %v944 = vrot.slane %v916, 5
      %v945 = vsel %vm324, %v943, %v944
      %v946 = vrot.slane %v912, 5
      %v947 = vrot.slane %v917, 5
      %v948 = vsel %vm324, %v946, %v947
      %v949 = vrot.slane %v913, 5
      %v950 = vrot.slane %v918, 5
      %v951 = vsel %vm324, %v949, %v950
      %v952 = vrot.slane %v914, 5
      %v953 = vrot.slane %v919, 5
      %v954 = vsel %vm324, %v952, %v953
      %v955 = vrot.slane %v920, 5
      %v956 = vsel %vm324, %v941, %v955
      %v957 = vrot.slane %v921, 5
      %v958 = vsel %vm324, %v944, %v957
      %v959 = vrot.slane %v922, 5
      %v960 = vsel %vm324, %v947, %v959
      %v961 = vrot.slane %v923, 5
      %v962 = vsel %vm324, %v950, %v961
      %v963 = vrot.slane %v924, 5
      %v964 = vsel %vm324, %v953, %v963
      %v975 = vadd.f32 %v865, %v942
      %v976 = vadd.f32 %v866, %v945
      %v977 = vadd.f32 %v867, %v948
      %v978 = vadd.f32 %v868, %v951
      %v979 = vadd.f32 %v869, %v954
      %v980 = vadd.f32 %v870, %v956
      %v981 = vadd.f32 %v871, %v958
      %v982 = vadd.f32 %v872, %v960
      %v983 = vadd.f32 %v873, %v962
      %v984 = vadd.f32 %v874, %v964
      %s985 = scalar_lea.vmem %s3, 162
      %v986 = vld [vmem:[%s985] ss:$8 sm:$0xf]
      %v988 = vlaneseq
      %v989 = vshrl.u32 %v988, 7
      %v990 = vsub.s32 0, %v989
      %v991 = vrot.slane %v986, %v990
      %v992 = vlaneseq
      %v993 = vshrl.u32 %v992, 7
      %v994 = vsub.s32 1, %v993
      %v995 = vrot.slane %v986, %v994
      %v996 = vlaneseq
      %v997 = vshrl.u32 %v996, 7
      %v998 = vsub.s32 2, %v997
      %v999 = vrot.slane %v986, %v998
      %v1000 = vlaneseq
      %v1001 = vshrl.u32 %v1000, 7
      %v1002 = vsub.s32 3, %v1001
      %v1003 = vrot.slane %v986, %v1002
      %1004 = vrot.lane.b32.xlu0 %v991, 32
      %v1005 = vpop.permute.xlu0 %1004
      %1006 = vrot.lane.b32.xlu0 %v995, 32
      %v1007 = vpop.permute.xlu0 %1006
      %1008 = vrot.lane.b32.xlu0 %v999, 32
      %v1009 = vpop.permute.xlu0 %1008
      %1010 = vrot.lane.b32.xlu0 %v1003, 32
      %v1011 = vpop.permute.xlu0 %1010
      %v1012 = vsel %vm402, %v1005, %v1007
      %v1013 = vsel %vm402, %v1007, %v1009
      %v1014 = vsel %vm402, %v1009, %v1011
      %v1020 = vmul.f32 %v361, %v1005
      %v1021 = vmul.f32 %v362, %v1012
      %v1022 = vmul.f32 %v363, %v1013
      %v1023 = vmul.f32 %v364, %v1014
      %v1024 = vmul.f32 %v365, %v1011
      %v1025 = vmul.f32 %v366, %v1005
      %v1026 = vmul.f32 %v367, %v1012
      %v1027 = vmul.f32 %v368, %v1013
      %v1028 = vmul.f32 %v369, %v1014
      %v1029 = vmul.f32 %v370, %v1011
      %v1030 = vmul.f32 %v371, %v1005
      %v1031 = vmul.f32 %v372, %v1012
      %v1032 = vmul.f32 %v373, %v1013
      %v1033 = vmul.f32 %v374, %v1014
      %v1034 = vmul.f32 %v375, %v1011
      %vm1050 = vcmask 1041408
      %v1051 = vrot.slane %v1020, 6
      %v1052 = vrot.slane %v1025, 6
      %v1053 = vsel %vm1050, %v1051, %v1052
      %v1054 = vrot.slane %v1021, 6
      %v1055 = vrot.slane %v1026, 6
      %v1056 = vsel %vm1050, %v1054, %v1055
      %v1057 = vrot.slane %v1022, 6
      %v1058 = vrot.slane %v1027, 6
      %v1059 = vsel %vm1050, %v1057, %v1058
      %v1060 = vrot.slane %v1023, 6
      %v1061 = vrot.slane %v1028, 6
      %v1062 = vsel %vm1050, %v1060, %v1061
      %v1063 = vrot.slane %v1024, 6
      %v1064 = vrot.slane %v1029, 6
      %v1065 = vsel %vm1050, %v1063, %v1064
      %v1066 = vrot.slane %v1030, 6
      %v1067 = vsel %vm1050, %v1052, %v1066
      %v1068 = vrot.slane %v1031, 6
      %v1069 = vsel %vm1050, %v1055, %v1068
      %v1070 = vrot.slane %v1032, 6
      %v1071 = vsel %vm1050, %v1058, %v1070
      %v1072 = vrot.slane %v1033, 6
      %v1073 = vsel %vm1050, %v1061, %v1072
      %v1074 = vrot.slane %v1034, 6
      %v1075 = vsel %vm1050, %v1064, %v1074
      %v1086 = vadd.f32 %v975, %v1053
      %v1087 = vadd.f32 %v976, %v1056
      %v1088 = vadd.f32 %v977, %v1059
      %v1089 = vadd.f32 %v978, %v1062
      %v1090 = vadd.f32 %v979, %v1065
      %v1091 = vadd.f32 %v980, %v1067
      %v1092 = vadd.f32 %v981, %v1069
      %v1093 = vadd.f32 %v982, %v1071
      %v1094 = vadd.f32 %v983, %v1073
      %v1095 = vadd.f32 %v984, %v1075
      %s1096 = scalar_lea.vmem %s3, 1
      %v1097 = vld [vmem:[%s1096] ss:$8 sm:$0xf]
      %v1099 = vlaneseq
      %v1100 = vshrl.u32 %v1099, 7
      %v1101 = vsub.s32 0, %v1100
      %v1102 = vrot.slane %v1097, %v1101
      %v1103 = vlaneseq
      %v1104 = vshrl.u32 %v1103, 7
      %v1105 = vsub.s32 1, %v1104
      %v1106 = vrot.slane %v1097, %v1105
      %v1107 = vlaneseq
      %v1108 = vshrl.u32 %v1107, 7
      %v1109 = vsub.s32 2, %v1108
      %v1110 = vrot.slane %v1097, %v1109
      %v1111 = vlaneseq
      %v1112 = vshrl.u32 %v1111, 7
      %v1113 = vsub.s32 3, %v1112
      %v1114 = vrot.slane %v1097, %v1113
      %1115 = vrot.lane.b32.xlu0 %v1102, 64
      %v1116 = vpop.permute.xlu0 %1115
      %1117 = vrot.lane.b32.xlu0 %v1106, 64
      %v1118 = vpop.permute.xlu0 %1117
      %1119 = vrot.lane.b32.xlu0 %v1110, 64
      %v1120 = vpop.permute.xlu0 %1119
      %1121 = vrot.lane.b32.xlu0 %v1114, 64
      %v1122 = vpop.permute.xlu0 %1121
      %vm1123 = vcmask 523264
      %v1124 = vsel %vm1123, %v1116, %v1118
      %v1125 = vsel %vm1123, %v1118, %v1120
      %v1126 = vsel %vm1123, %v1120, %v1122
      %v1132 = vmul.f32 %v361, %v1116
      %v1133 = vmul.f32 %v362, %v1124
      %v1134 = vmul.f32 %v363, %v1125
      %v1135 = vmul.f32 %v364, %v1126
      %v1136 = vmul.f32 %v365, %v1122
      %v1137 = vmul.f32 %v366, %v1116
      %v1138 = vmul.f32 %v367, %v1124
      %v1139 = vmul.f32 %v368, %v1125
      %v1140 = vmul.f32 %v369, %v1126
      %v1141 = vmul.f32 %v370, %v1122
      %1152 = vrot.lane.b32.xlu0 %v1132, 96
      %v1153 = vpop.permute.xlu0 %1152
      %1154 = vrot.lane.b32.xlu0 %v1133, 96
      %v1155 = vpop.permute.xlu0 %1154
      %1156 = vrot.lane.b32.xlu0 %v1134, 96
      %v1157 = vpop.permute.xlu0 %1156
      %1158 = vrot.lane.b32.xlu0 %v1135, 96
      %v1159 = vpop.permute.xlu0 %1158
      %1160 = vrot.lane.b32.xlu0 %v1136, 96
      %v1161 = vpop.permute.xlu0 %1160
      %1162 = vrot.lane.b32.xlu0 %v1137, 96
      %v1163 = vpop.permute.xlu0 %1162
      %1164 = vrot.lane.b32.xlu0 %v1138, 96
      %v1165 = vpop.permute.xlu0 %1164
      %1166 = vrot.lane.b32.xlu0 %v1139, 96
      %v1167 = vpop.permute.xlu0 %1166
      %1168 = vrot.lane.b32.xlu0 %v1140, 96
      %v1169 = vpop.permute.xlu0 %1168
      %1170 = vrot.lane.b32.xlu0 %v1141, 96
      %v1171 = vpop.permute.xlu0 %1170
      %v1172 = vsel %vm301, %v1153, %v1155
      %v1173 = vsel %vm301, %v1155, %v1157
      %v1174 = vsel %vm301, %v1157, %v1159
      %v1175 = vsel %vm301, %v1159, %v1161
      %v1176 = vsel %vm301, %v1163, %v1165
      %v1177 = vsel %vm301, %v1165, %v1167
      %v1178 = vsel %vm301, %v1167, %v1169
      %v1179 = vsel %vm301, %v1169, %v1171
      %v1190 = vadd.f32 %v1086, %v1172
      %v1191 = vadd.f32 %v1087, %v1173
      %v1192 = vadd.f32 %v1088, %v1174
      %v1193 = vadd.f32 %v1089, %v1175
      %v1194 = vadd.f32 %v1090, %v1161
      %v1195 = vadd.f32 %v1091, %v1176
      %v1196 = vadd.f32 %v1092, %v1177
      %v1197 = vadd.f32 %v1093, %v1178
      %v1198 = vadd.f32 %v1094, %v1179
      %v1199 = vadd.f32 %v1095, %v1171
      %s1200 = scalar_lea.vmem %s3, 32
      %v1201 = vld [vmem:[%s1200] ss:$8 sm:$0xf]
      %v1203 = vlaneseq
      %v1204 = vshrl.u32 %v1203, 7
      %v1205 = vsub.s32 0, %v1204
      %v1206 = vrot.slane %v1201, %v1205
      %v1207 = vlaneseq
      %v1208 = vshrl.u32 %v1207, 7
      %v1209 = vsub.s32 1, %v1208
      %v1210 = vrot.slane %v1201, %v1209
      %v1211 = vlaneseq
      %v1212 = vshrl.u32 %v1211, 7
      %v1213 = vsub.s32 2, %v1212
      %v1214 = vrot.slane %v1201, %v1213
      %v1215 = vlaneseq
      %v1216 = vshrl.u32 %v1215, 7
      %v1217 = vsub.s32 3, %v1216
      %v1218 = vrot.slane %v1201, %v1217
      %1219 = vrot.lane.b32.xlu0 %v1206, 64
      %v1220 = vpop.permute.xlu0 %1219
      %1221 = vrot.lane.b32.xlu0 %v1210, 64
      %v1222 = vpop.permute.xlu0 %1221
      %1223 = vrot.lane.b32.xlu0 %v1214, 64
      %v1224 = vpop.permute.xlu0 %1223
      %1225 = vrot.lane.b32.xlu0 %v1218, 64
      %v1226 = vpop.permute.xlu0 %1225
      %v1227 = vsel %vm1123, %v1220, %v1222
      %v1228 = vsel %vm1123, %v1222, %v1224
      %v1229 = vsel %vm1123, %v1224, %v1226
      %v1235 = vmul.f32 %v361, %v1220
      %v1236 = vmul.f32 %v362, %v1227
      %v1237 = vmul.f32 %v363, %v1228
      %v1238 = vmul.f32 %v364, %v1229
      %v1239 = vmul.f32 %v365, %v1226
      %v1240 = vmul.f32 %v366, %v1220
      %v1241 = vmul.f32 %v367, %v1227
      %v1242 = vmul.f32 %v368, %v1228
      %v1243 = vmul.f32 %v369, %v1229
      %v1244 = vmul.f32 %v370, %v1226
      %v1245 = vmul.f32 %v371, %v1220
      %v1246 = vmul.f32 %v372, %v1227
      %v1247 = vmul.f32 %v373, %v1228
      %v1248 = vmul.f32 %v374, %v1229
      %v1249 = vmul.f32 %v375, %v1226
      %v1265 = vrot.slane %v1235, 1
      %v1266 = vrot.slane %v1240, 1
      %v1267 = vsel %vm496, %v1265, %v1266
      %v1268 = vrot.slane %v1236, 1
      %v1269 = vrot.slane %v1241, 1
      %v1270 = vsel %vm496, %v1268, %v1269
      %v1271 = vrot.slane %v1237, 1
      %v1272 = vrot.slane %v1242, 1
      %v1273 = vsel %vm496, %v1271, %v1272
      %v1274 = vrot.slane %v1238, 1
      %v1275 = vrot.slane %v1243, 1
      %v1276 = vsel %vm496, %v1274, %v1275
      %v1277 = vrot.slane %v1239, 1
      %v1278 = vrot.slane %v1244, 1
      %v1279 = vsel %vm496, %v1277, %v1278
      %v1280 = vrot.slane %v1245, 1
      %v1281 = vsel %vm496, %v1266, %v1280
      %v1282 = vrot.slane %v1246, 1
      %v1283 = vsel %vm496, %v1269, %v1282
      %v1284 = vrot.slane %v1247, 1
      %v1285 = vsel %vm496, %v1272, %v1284
      %v1286 = vrot.slane %v1248, 1
      %v1287 = vsel %vm496, %v1275, %v1286
      %v1288 = vrot.slane %v1249, 1
      %v1289 = vsel %vm496, %v1278, %v1288
      %1290 = vrot.lane.b32.xlu0 %v1267, 96
      %v1291 = vpop.permute.xlu0 %1290
      %1292 = vrot.lane.b32.xlu0 %v1270, 96
      %v1293 = vpop.permute.xlu0 %1292
      %1294 = vrot.lane.b32.xlu0 %v1273, 96
      %v1295 = vpop.permute.xlu0 %1294
      %1296 = vrot.lane.b32.xlu0 %v1276, 96
      %v1297 = vpop.permute.xlu0 %1296
      %1298 = vrot.lane.b32.xlu0 %v1279, 96
      %v1299 = vpop.permute.xlu0 %1298
      %1300 = vrot.lane.b32.xlu0 %v1281, 96
      %v1301 = vpop.permute.xlu0 %1300
      %1302 = vrot.lane.b32.xlu0 %v1283, 96
      %v1303 = vpop.permute.xlu0 %1302
      %1304 = vrot.lane.b32.xlu0 %v1285, 96
      %v1305 = vpop.permute.xlu0 %1304
      %1306 = vrot.lane.b32.xlu0 %v1287, 96
      %v1307 = vpop.permute.xlu0 %1306
      %1308 = vrot.lane.b32.xlu0 %v1289, 96
      %v1309 = vpop.permute.xlu0 %1308
      %v1310 = vsel %vm301, %v1291, %v1293
      %v1311 = vsel %vm301, %v1293, %v1295
      %v1312 = vsel %vm301, %v1295, %v1297
      %v1313 = vsel %vm301, %v1297, %v1299
      %v1314 = vsel %vm301, %v1301, %v1303
      %v1315 = vsel %vm301, %v1303, %v1305
      %v1316 = vsel %vm301, %v1305, %v1307
      %v1317 = vsel %vm301, %v1307, %v1309
      %v1328 = vadd.f32 %v1190, %v1310
      %v1329 = vadd.f32 %v1191, %v1311
      %v1330 = vadd.f32 %v1192, %v1312
      %v1331 = vadd.f32 %v1193, %v1313
      %v1332 = vadd.f32 %v1194, %v1299
      %v1333 = vadd.f32 %v1195, %v1314
      %v1334 = vadd.f32 %v1196, %v1315
      %v1335 = vadd.f32 %v1197, %v1316
      %v1336 = vadd.f32 %v1198, %v1317
      %v1337 = vadd.f32 %v1199, %v1309
      %s1338 = scalar_lea.vmem %s3, 39
      %v1339 = vld [vmem:[%s1338] ss:$8 sm:$0xf]
      %v1341 = vlaneseq
      %v1342 = vshrl.u32 %v1341, 7
      %v1343 = vsub.s32 0, %v1342
      %v1344 = vrot.slane %v1339, %v1343
      %v1345 = vlaneseq
      %v1346 = vshrl.u32 %v1345, 7
      %v1347 = vsub.s32 1, %v1346
      %v1348 = vrot.slane %v1339, %v1347
      %v1349 = vlaneseq
      %v1350 = vshrl.u32 %v1349, 7
      %v1351 = vsub.s32 2, %v1350
      %v1352 = vrot.slane %v1339, %v1351
      %v1353 = vlaneseq
      %v1354 = vshrl.u32 %v1353, 7
      %v1355 = vsub.s32 3, %v1354
      %v1356 = vrot.slane %v1339, %v1355
      %1357 = vrot.lane.b32.xlu0 %v1344, 64
      %v1358 = vpop.permute.xlu0 %1357
      %1359 = vrot.lane.b32.xlu0 %v1348, 64
      %v1360 = vpop.permute.xlu0 %1359
      %1361 = vrot.lane.b32.xlu0 %v1352, 64
      %v1362 = vpop.permute.xlu0 %1361
      %1363 = vrot.lane.b32.xlu0 %v1356, 64
      %v1364 = vpop.permute.xlu0 %1363
      %v1365 = vsel %vm1123, %v1358, %v1360
      %v1366 = vsel %vm1123, %v1360, %v1362
      %v1367 = vsel %vm1123, %v1362, %v1364
      %v1373 = vmul.f32 %v361, %v1358
      %v1374 = vmul.f32 %v362, %v1365
      %v1375 = vmul.f32 %v363, %v1366
      %v1376 = vmul.f32 %v364, %v1367
      %v1377 = vmul.f32 %v365, %v1364
      %v1378 = vmul.f32 %v366, %v1358
      %v1379 = vmul.f32 %v367, %v1365
      %v1380 = vmul.f32 %v368, %v1366
      %v1381 = vmul.f32 %v369, %v1367
      %v1382 = vmul.f32 %v370, %v1364
      %v1383 = vmul.f32 %v371, %v1358
      %v1384 = vmul.f32 %v372, %v1365
      %v1385 = vmul.f32 %v373, %v1366
      %v1386 = vmul.f32 %v374, %v1367
      %v1387 = vmul.f32 %v375, %v1364
      %v1403 = vrot.slane %v1373, 2
      %v1404 = vrot.slane %v1378, 2
      %v1405 = vsel %vm607, %v1403, %v1404
      %v1406 = vrot.slane %v1374, 2
      %v1407 = vrot.slane %v1379, 2
      %v1408 = vsel %vm607, %v1406, %v1407
      %v1409 = vrot.slane %v1375, 2
      %v1410 = vrot.slane %v1380, 2
      %v1411 = vsel %vm607, %v1409, %v1410
      %v1412 = vrot.slane %v1376, 2
      %v1413 = vrot.slane %v1381, 2
      %v1414 = vsel %vm607, %v1412, %v1413
      %v1415 = vrot.slane %v1377, 2
      %v1416 = vrot.slane %v1382, 2
      %v1417 = vsel %vm607, %v1415, %v1416
      %v1418 = vrot.slane %v1383, 2
      %v1419 = vsel %vm607, %v1404, %v1418
      %v1420 = vrot.slane %v1384, 2
      %v1421 = vsel %vm607, %v1407, %v1420
      %v1422 = vrot.slane %v1385, 2
      %v1423 = vsel %vm607, %v1410, %v1422
      %v1424 = vrot.slane %v1386, 2
      %v1425 = vsel %vm607, %v1413, %v1424
      %v1426 = vrot.slane %v1387, 2
      %v1427 = vsel %vm607, %v1416, %v1426
      %1428 = vrot.lane.b32.xlu0 %v1405, 96
      %v1429 = vpop.permute.xlu0 %1428
      %1430 = vrot.lane.b32.xlu0 %v1408, 96
      %v1431 = vpop.permute.xlu0 %1430
      %1432 = vrot.lane.b32.xlu0 %v1411, 96
      %v1433 = vpop.permute.xlu0 %1432
      %1434 = vrot.lane.b32.xlu0 %v1414, 96
      %v1435 = vpop.permute.xlu0 %1434
      %1436 = vrot.lane.b32.xlu0 %v1417, 96
      %v1437 = vpop.permute.xlu0 %1436
      %1438 = vrot.lane.b32.xlu0 %v1419, 96
      %v1439 = vpop.permute.xlu0 %1438
      %1440 = vrot.lane.b32.xlu0 %v1421, 96
      %v1441 = vpop.permute.xlu0 %1440
      %1442 = vrot.lane.b32.xlu0 %v1423, 96
      %v1443 = vpop.permute.xlu0 %1442
      %1444 = vrot.lane.b32.xlu0 %v1425, 96
      %v1445 = vpop.permute.xlu0 %1444
      %1446 = vrot.lane.b32.xlu0 %v1427, 96
      %v1447 = vpop.permute.xlu0 %1446
      %v1448 = vsel %vm301, %v1429, %v1431
      %v1449 = vsel %vm301, %v1431, %v1433
      %v1450 = vsel %vm301, %v1433, %v1435
      %v1451 = vsel %vm301, %v1435, %v1437
      %v1452 = vsel %vm301, %v1439, %v1441
      %v1453 = vsel %vm301, %v1441, %v1443
      %v1454 = vsel %vm301, %v1443, %v1445
      %v1455 = vsel %vm301, %v1445, %v1447
      %v1466 = vadd.f32 %v1328, %v1448
      %v1467 = vadd.f32 %v1329, %v1449
      %v1468 = vadd.f32 %v1330, %v1450
      %v1469 = vadd.f32 %v1331, %v1451
      %v1470 = vadd.f32 %v1332, %v1437
      %v1471 = vadd.f32 %v1333, %v1452
      %v1472 = vadd.f32 %v1334, %v1453
      %v1473 = vadd.f32 %v1335, %v1454
      %v1474 = vadd.f32 %v1336, %v1455
      %v1475 = vadd.f32 %v1337, %v1447
      %s1476 = scalar_lea.vmem %s3, 70
      %v1477 = vld [vmem:[%s1476] ss:$8 sm:$0xf]
      %v1479 = vlaneseq
      %v1480 = vshrl.u32 %v1479, 7
      %v1481 = vsub.s32 0, %v1480
      %v1482 = vrot.slane %v1477, %v1481
      %v1483 = vlaneseq
      %v1484 = vshrl.u32 %v1483, 7
      %v1485 = vsub.s32 1, %v1484
      %v1486 = vrot.slane %v1477, %v1485
      %v1487 = vlaneseq
      %v1488 = vshrl.u32 %v1487, 7
      %v1489 = vsub.s32 2, %v1488
      %v1490 = vrot.slane %v1477, %v1489
      %v1491 = vlaneseq
      %v1492 = vshrl.u32 %v1491, 7
      %v1493 = vsub.s32 3, %v1492
      %v1494 = vrot.slane %v1477, %v1493
      %1495 = vrot.lane.b32.xlu0 %v1482, 64
      %v1496 = vpop.permute.xlu0 %1495
      %1497 = vrot.lane.b32.xlu0 %v1486, 64
      %v1498 = vpop.permute.xlu0 %1497
      %1499 = vrot.lane.b32.xlu0 %v1490, 64
      %v1500 = vpop.permute.xlu0 %1499
      %1501 = vrot.lane.b32.xlu0 %v1494, 64
      %v1502 = vpop.permute.xlu0 %1501
      %v1503 = vsel %vm1123, %v1496, %v1498
      %v1504 = vsel %vm1123, %v1498, %v1500
      %v1505 = vsel %vm1123, %v1500, %v1502
      %v1511 = vmul.f32 %v361, %v1496
      %v1512 = vmul.f32 %v362, %v1503
      %v1513 = vmul.f32 %v363, %v1504
      %v1514 = vmul.f32 %v364, %v1505
      %v1515 = vmul.f32 %v365, %v1502
      %v1516 = vmul.f32 %v366, %v1496
      %v1517 = vmul.f32 %v367, %v1503
      %v1518 = vmul.f32 %v368, %v1504
      %v1519 = vmul.f32 %v369, %v1505
      %v1520 = vmul.f32 %v370, %v1502
      %v1521 = vmul.f32 %v371, %v1496
      %v1522 = vmul.f32 %v372, %v1503
      %v1523 = vmul.f32 %v373, %v1504
      %v1524 = vmul.f32 %v374, %v1505
      %v1525 = vmul.f32 %v375, %v1502
      %v1541 = vrot.slane %v1511, 3
      %v1542 = vrot.slane %v1516, 3
      %v1543 = vsel %vm718, %v1541, %v1542
      %v1544 = vrot.slane %v1512, 3
      %v1545 = vrot.slane %v1517, 3
      %v1546 = vsel %vm718, %v1544, %v1545
      %v1547 = vrot.slane %v1513, 3
      %v1548 = vrot.slane %v1518, 3
      %v1549 = vsel %vm718, %v1547, %v1548
      %v1550 = vrot.slane %v1514, 3
      %v1551 = vrot.slane %v1519, 3
      %v1552 = vsel %vm718, %v1550, %v1551
      %v1553 = vrot.slane %v1515, 3
      %v1554 = vrot.slane %v1520, 3
      %v1555 = vsel %vm718, %v1553, %v1554
      %v1556 = vrot.slane %v1521, 3
      %v1557 = vsel %vm718, %v1542, %v1556
      %v1558 = vrot.slane %v1522, 3
      %v1559 = vsel %vm718, %v1545, %v1558
      %v1560 = vrot.slane %v1523, 3
      %v1561 = vsel %vm718, %v1548, %v1560
      %v1562 = vrot.slane %v1524, 3
      %v1563 = vsel %vm718, %v1551, %v1562
      %v1564 = vrot.slane %v1525, 3
      %v1565 = vsel %vm718, %v1554, %v1564
      %1566 = vrot.lane.b32.xlu0 %v1543, 96
      %v1567 = vpop.permute.xlu0 %1566
      %1568 = vrot.lane.b32.xlu0 %v1546, 96
      %v1569 = vpop.permute.xlu0 %1568
      %1570 = vrot.lane.b32.xlu0 %v1549, 96
      %v1571 = vpop.permute.xlu0 %1570
      %1572 = vrot.lane.b32.xlu0 %v1552, 96
      %v1573 = vpop.permute.xlu0 %1572
      %1574 = vrot.lane.b32.xlu0 %v1555, 96
      %v1575 = vpop.permute.xlu0 %1574
      %1576 = vrot.lane.b32.xlu0 %v1557, 96
      %v1577 = vpop.permute.xlu0 %1576
      %1578 = vrot.lane.b32.xlu0 %v1559, 96
      %v1579 = vpop.permute.xlu0 %1578
      %1580 = vrot.lane.b32.xlu0 %v1561, 96
      %v1581 = vpop.permute.xlu0 %1580
      %1582 = vrot.lane.b32.xlu0 %v1563, 96
      %v1583 = vpop.permute.xlu0 %1582
      %1584 = vrot.lane.b32.xlu0 %v1565, 96
      %v1585 = vpop.permute.xlu0 %1584
      %v1586 = vsel %vm301, %v1567, %v1569
      %v1587 = vsel %vm301, %v1569, %v1571
      %v1588 = vsel %vm301, %v1571, %v1573
      %v1589 = vsel %vm301, %v1573, %v1575
      %v1590 = vsel %vm301, %v1577, %v1579
      %v1591 = vsel %vm301, %v1579, %v1581
      %v1592 = vsel %vm301, %v1581, %v1583
      %v1593 = vsel %vm301, %v1583, %v1585
      %v1604 = vadd.f32 %v1466, %v1586
      %v1605 = vadd.f32 %v1467, %v1587
      %v1606 = vadd.f32 %v1468, %v1588
      %v1607 = vadd.f32 %v1469, %v1589
      %v1608 = vadd.f32 %v1470, %v1575
      %v1609 = vadd.f32 %v1471, %v1590
      %v1610 = vadd.f32 %v1472, %v1591
      %v1611 = vadd.f32 %v1473, %v1592
      %v1612 = vadd.f32 %v1474, %v1593
      %v1613 = vadd.f32 %v1475, %v1585
      %s1614 = scalar_lea.vmem %s3, 101
      %v1615 = vld [vmem:[%s1614] ss:$8 sm:$0xf]
      %v1617 = vlaneseq
      %v1618 = vshrl.u32 %v1617, 7
      %v1619 = vsub.s32 0, %v1618
      %v1620 = vrot.slane %v1615, %v1619
      %v1621 = vlaneseq
      %v1622 = vshrl.u32 %v1621, 7
      %v1623 = vsub.s32 1, %v1622
      %v1624 = vrot.slane %v1615, %v1623
      %v1625 = vlaneseq
      %v1626 = vshrl.u32 %v1625, 7
      %v1627 = vsub.s32 2, %v1626
      %v1628 = vrot.slane %v1615, %v1627
      %v1629 = vlaneseq
      %v1630 = vshrl.u32 %v1629, 7
      %v1631 = vsub.s32 3, %v1630
      %v1632 = vrot.slane %v1615, %v1631
      %1633 = vrot.lane.b32.xlu0 %v1620, 64
      %v1634 = vpop.permute.xlu0 %1633
      %1635 = vrot.lane.b32.xlu0 %v1624, 64
      %v1636 = vpop.permute.xlu0 %1635
      %1637 = vrot.lane.b32.xlu0 %v1628, 64
      %v1638 = vpop.permute.xlu0 %1637
      %1639 = vrot.lane.b32.xlu0 %v1632, 64
      %v1640 = vpop.permute.xlu0 %1639
      %v1641 = vsel %vm1123, %v1634, %v1636
      %v1642 = vsel %vm1123, %v1636, %v1638
      %v1643 = vsel %vm1123, %v1638, %v1640
      %v1649 = vmul.f32 %v361, %v1634
      %v1650 = vmul.f32 %v362, %v1641
      %v1651 = vmul.f32 %v363, %v1642
      %v1652 = vmul.f32 %v364, %v1643
      %v1653 = vmul.f32 %v365, %v1640
      %v1654 = vmul.f32 %v366, %v1634
      %v1655 = vmul.f32 %v367, %v1641
      %v1656 = vmul.f32 %v368, %v1642
      %v1657 = vmul.f32 %v369, %v1643
      %v1658 = vmul.f32 %v370, %v1640
      %v1659 = vmul.f32 %v371, %v1634
      %v1660 = vmul.f32 %v372, %v1641
      %v1661 = vmul.f32 %v373, %v1642
      %v1662 = vmul.f32 %v374, %v1643
      %v1663 = vmul.f32 %v375, %v1640
      %v1679 = vrot.slane %v1649, 4
      %v1680 = vrot.slane %v1654, 4
      %v1681 = vsel %vm829, %v1679, %v1680
      %v1682 = vrot.slane %v1650, 4
      %v1683 = vrot.slane %v1655, 4
      %v1684 = vsel %vm829, %v1682, %v1683
      %v1685 = vrot.slane %v1651, 4
      %v1686 = vrot.slane %v1656, 4
      %v1687 = vsel %vm829, %v1685, %v1686
      %v1688 = vrot.slane %v1652, 4
      %v1689 = vrot.slane %v1657, 4
      %v1690 = vsel %vm829, %v1688, %v1689
      %v1691 = vrot.slane %v1653, 4
      %v1692 = vrot.slane %v1658, 4
      %v1693 = vsel %vm829, %v1691, %v1692
      %v1694 = vrot.slane %v1659, 4
      %v1695 = vsel %vm829, %v1680, %v1694
      %v1696 = vrot.slane %v1660, 4
      %v1697 = vsel %vm829, %v1683, %v1696
      %v1698 = vrot.slane %v1661, 4
      %v1699 = vsel %vm829, %v1686, %v1698
      %v1700 = vrot.slane %v1662, 4
      %v1701 = vsel %vm829, %v1689, %v1700
      %v1702 = vrot.slane %v1663, 4
      %v1703 = vsel %vm829, %v1692, %v1702
      %1704 = vrot.lane.b32.xlu0 %v1681, 96
      %v1705 = vpop.permute.xlu0 %1704
      %1706 = vrot.lane.b32.xlu0 %v1684, 96
      %v1707 = vpop.permute.xlu0 %1706
      %1708 = vrot.lane.b32.xlu0 %v1687, 96
      %v1709 = vpop.permute.xlu0 %1708
      %1710 = vrot.lane.b32.xlu0 %v1690, 96
      %v1711 = vpop.permute.xlu0 %1710
      %1712 = vrot.lane.b32.xlu0 %v1693, 96
      %v1713 = vpop.permute.xlu0 %1712
      %1714 = vrot.lane.b32.xlu0 %v1695, 96
      %v1715 = vpop.permute.xlu0 %1714
      %1716 = vrot.lane.b32.xlu0 %v1697, 96
      %v1717 = vpop.permute.xlu0 %1716
      %1718 = vrot.lane.b32.xlu0 %v1699, 96
      %v1719 = vpop.permute.xlu0 %1718
      %1720 = vrot.lane.b32.xlu0 %v1701, 96
      %v1721 = vpop.permute.xlu0 %1720
      %1722 = vrot.lane.b32.xlu0 %v1703, 96
      %v1723 = vpop.permute.xlu0 %1722
      %v1724 = vsel %vm301, %v1705, %v1707
      %v1725 = vsel %vm301, %v1707, %v1709
      %v1726 = vsel %vm301, %v1709, %v1711
      %v1727 = vsel %vm301, %v1711, %v1713
      %v1728 = vsel %vm301, %v1715, %v1717
      %v1729 = vsel %vm301, %v1717, %v1719
      %v1730 = vsel %vm301, %v1719, %v1721
      %v1731 = vsel %vm301, %v1721, %v1723
      %v1742 = vadd.f32 %v1604, %v1724
      %v1743 = vadd.f32 %v1605, %v1725
      %v1744 = vadd.f32 %v1606, %v1726
      %v1745 = vadd.f32 %v1607, %v1727
      %v1746 = vadd.f32 %v1608, %v1713
      %v1747 = vadd.f32 %v1609, %v1728
      %v1748 = vadd.f32 %v1610, %v1729
      %v1749 = vadd.f32 %v1611, %v1730
      %v1750 = vadd.f32 %v1612, %v1731
      %v1751 = vadd.f32 %v1613, %v1723
      %s1752 = scalar_lea.vmem %s3, 132
      %v1753 = vld [vmem:[%s1752] ss:$8 sm:$0xf]
      %v1755 = vlaneseq
      %v1756 = vshrl.u32 %v1755, 7
      %v1757 = vsub.s32 0, %v1756
      %v1758 = vrot.slane %v1753, %v1757
      %v1759 = vlaneseq
      %v1760 = vshrl.u32 %v1759, 7
      %v1761 = vsub.s32 1, %v1760
      %v1762 = vrot.slane %v1753, %v1761
      %v1763 = vlaneseq
      %v1764 = vshrl.u32 %v1763, 7
      %v1765 = vsub.s32 2, %v1764
      %v1766 = vrot.slane %v1753, %v1765
      %v1767 = vlaneseq
      %v1768 = vshrl.u32 %v1767, 7
      %v1769 = vsub.s32 3, %v1768
      %v1770 = vrot.slane %v1753, %v1769
      %1771 = vrot.lane.b32.xlu0 %v1758, 64
      %v1772 = vpop.permute.xlu0 %1771
      %1773 = vrot.lane.b32.xlu0 %v1762, 64
      %v1774 = vpop.permute.xlu0 %1773
      %1775 = vrot.lane.b32.xlu0 %v1766, 64
      %v1776 = vpop.permute.xlu0 %1775
      %1777 = vrot.lane.b32.xlu0 %v1770, 64
      %v1778 = vpop.permute.xlu0 %1777
      %v1779 = vsel %vm1123, %v1772, %v1774
      %v1780 = vsel %vm1123, %v1774, %v1776
      %v1781 = vsel %vm1123, %v1776, %v1778
      %v1787 = vmul.f32 %v361, %v1772
      %v1788 = vmul.f32 %v362, %v1779
      %v1789 = vmul.f32 %v363, %v1780
      %v1790 = vmul.f32 %v364, %v1781
      %v1791 = vmul.f32 %v365, %v1778
      %v1792 = vmul.f32 %v366, %v1772
      %v1793 = vmul.f32 %v367, %v1779
      %v1794 = vmul.f32 %v368, %v1780
      %v1795 = vmul.f32 %v369, %v1781
      %v1796 = vmul.f32 %v370, %v1778
      %v1797 = vmul.f32 %v371, %v1772
      %v1798 = vmul.f32 %v372, %v1779
      %v1799 = vmul.f32 %v373, %v1780
      %v1800 = vmul.f32 %v374, %v1781
      %v1801 = vmul.f32 %v375, %v1778
      %v1817 = vrot.slane %v1787, 5
      %v1818 = vrot.slane %v1792, 5
      %v1819 = vsel %vm324, %v1817, %v1818
      %v1820 = vrot.slane %v1788, 5
      %v1821 = vrot.slane %v1793, 5
      %v1822 = vsel %vm324, %v1820, %v1821
      %v1823 = vrot.slane %v1789, 5
      %v1824 = vrot.slane %v1794, 5
      %v1825 = vsel %vm324, %v1823, %v1824
      %v1826 = vrot.slane %v1790, 5
      %v1827 = vrot.slane %v1795, 5
      %v1828 = vsel %vm324, %v1826, %v1827
      %v1829 = vrot.slane %v1791, 5
      %v1830 = vrot.slane %v1796, 5
      %v1831 = vsel %vm324, %v1829, %v1830
      %v1832 = vrot.slane %v1797, 5
      %v1833 = vsel %vm324, %v1818, %v1832
      %v1834 = vrot.slane %v1798, 5
      %v1835 = vsel %vm324, %v1821, %v1834
      %v1836 = vrot.slane %v1799, 5
      %v1837 = vsel %vm324, %v1824, %v1836
      %v1838 = vrot.slane %v1800, 5
      %v1839 = vsel %vm324, %v1827, %v1838
      %v1840 = vrot.slane %v1801, 5
      %v1841 = vsel %vm324, %v1830, %v1840
      %1842 = vrot.lane.b32.xlu0 %v1819, 96
      %v1843 = vpop.permute.xlu0 %1842
      %1844 = vrot.lane.b32.xlu0 %v1822, 96
      %v1845 = vpop.permute.xlu0 %1844
      %1846 = vrot.lane.b32.xlu0 %v1825, 96
      %v1847 = vpop.permute.xlu0 %1846
      %1848 = vrot.lane.b32.xlu0 %v1828, 96
      %v1849 = vpop.permute.xlu0 %1848
      %1850 = vrot.lane.b32.xlu0 %v1831, 96
      %v1851 = vpop.permute.xlu0 %1850
      %1852 = vrot.lane.b32.xlu0 %v1833, 96
      %v1853 = vpop.permute.xlu0 %1852
      %1854 = vrot.lane.b32.xlu0 %v1835, 96
      %v1855 = vpop.permute.xlu0 %1854
      %1856 = vrot.lane.b32.xlu0 %v1837, 96
      %v1857 = vpop.permute.xlu0 %1856
      %1858 = vrot.lane.b32.xlu0 %v1839, 96
      %v1859 = vpop.permute.xlu0 %1858
      %1860 = vrot.lane.b32.xlu0 %v1841, 96
      %v1861 = vpop.permute.xlu0 %1860
      %v1862 = vsel %vm301, %v1843, %v1845
      %v1863 = vsel %vm301, %v1845, %v1847
      %v1864 = vsel %vm301, %v1847, %v1849
      %v1865 = vsel %vm301, %v1849, %v1851
      %v1866 = vsel %vm301, %v1853, %v1855
      %v1867 = vsel %vm301, %v1855, %v1857
      %v1868 = vsel %vm301, %v1857, %v1859
      %v1869 = vsel %vm301, %v1859, %v1861
      %v1880 = vadd.f32 %v1742, %v1862
      %v1881 = vadd.f32 %v1743, %v1863
      %v1882 = vadd.f32 %v1744, %v1864
      %v1883 = vadd.f32 %v1745, %v1865
      %v1884 = vadd.f32 %v1746, %v1851
      %v1885 = vadd.f32 %v1747, %v1866
      %v1886 = vadd.f32 %v1748, %v1867
      %v1887 = vadd.f32 %v1749, %v1868
      %v1888 = vadd.f32 %v1750, %v1869
      %v1889 = vadd.f32 %v1751, %v1861
      %s1890 = scalar_lea.vmem %s3, 163
      %v1891 = vld [vmem:[%s1890] ss:$8 sm:$0xf]
      %v1893 = vlaneseq
      %v1894 = vshrl.u32 %v1893, 7
      %v1895 = vsub.s32 0, %v1894
      %v1896 = vrot.slane %v1891, %v1895
      %v1897 = vlaneseq
      %v1898 = vshrl.u32 %v1897, 7
      %v1899 = vsub.s32 1, %v1898
      %v1900 = vrot.slane %v1891, %v1899
      %v1901 = vlaneseq
      %v1902 = vshrl.u32 %v1901, 7
      %v1903 = vsub.s32 2, %v1902
      %v1904 = vrot.slane %v1891, %v1903
      %v1905 = vlaneseq
      %v1906 = vshrl.u32 %v1905, 7
      %v1907 = vsub.s32 3, %v1906
      %v1908 = vrot.slane %v1891, %v1907
      %1909 = vrot.lane.b32.xlu0 %v1896, 64
      %v1910 = vpop.permute.xlu0 %1909
      %1911 = vrot.lane.b32.xlu0 %v1900, 64
      %v1912 = vpop.permute.xlu0 %1911
      %1913 = vrot.lane.b32.xlu0 %v1904, 64
      %v1914 = vpop.permute.xlu0 %1913
      %1915 = vrot.lane.b32.xlu0 %v1908, 64
      %v1916 = vpop.permute.xlu0 %1915
      %v1917 = vsel %vm1123, %v1910, %v1912
      %v1918 = vsel %vm1123, %v1912, %v1914
      %v1919 = vsel %vm1123, %v1914, %v1916
      %v1925 = vmul.f32 %v361, %v1910
      %v1926 = vmul.f32 %v362, %v1917
      %v1927 = vmul.f32 %v363, %v1918
      %v1928 = vmul.f32 %v364, %v1919
      %v1929 = vmul.f32 %v365, %v1916
      %v1930 = vmul.f32 %v366, %v1910
      %v1931 = vmul.f32 %v367, %v1917
      %v1932 = vmul.f32 %v368, %v1918
      %v1933 = vmul.f32 %v369, %v1919
      %v1934 = vmul.f32 %v370, %v1916
      %v1935 = vmul.f32 %v371, %v1910
      %v1936 = vmul.f32 %v372, %v1917
      %v1937 = vmul.f32 %v373, %v1918
      %v1938 = vmul.f32 %v374, %v1919
      %v1939 = vmul.f32 %v375, %v1916
      %v1955 = vrot.slane %v1925, 6
      %v1956 = vrot.slane %v1930, 6
      %v1957 = vsel %vm1050, %v1955, %v1956
      %v1958 = vrot.slane %v1926, 6
      %v1959 = vrot.slane %v1931, 6
      %v1960 = vsel %vm1050, %v1958, %v1959
      %v1961 = vrot.slane %v1927, 6
      %v1962 = vrot.slane %v1932, 6
      %v1963 = vsel %vm1050, %v1961, %v1962
      %v1964 = vrot.slane %v1928, 6
      %v1965 = vrot.slane %v1933, 6
      %v1966 = vsel %vm1050, %v1964, %v1965
      %v1967 = vrot.slane %v1929, 6
      %v1968 = vrot.slane %v1934, 6
      %v1969 = vsel %vm1050, %v1967, %v1968
      %v1970 = vrot.slane %v1935, 6
      %v1971 = vsel %vm1050, %v1956, %v1970
      %v1972 = vrot.slane %v1936, 6
      %v1973 = vsel %vm1050, %v1959, %v1972
      %v1974 = vrot.slane %v1937, 6
      %v1975 = vsel %vm1050, %v1962, %v1974
      %v1976 = vrot.slane %v1938, 6
      %v1977 = vsel %vm1050, %v1965, %v1976
      %v1978 = vrot.slane %v1939, 6
      %v1979 = vsel %vm1050, %v1968, %v1978
      %1980 = vrot.lane.b32.xlu0 %v1957, 96
      %v1981 = vpop.permute.xlu0 %1980
      %1982 = vrot.lane.b32.xlu0 %v1960, 96
      %v1983 = vpop.permute.xlu0 %1982
      %1984 = vrot.lane.b32.xlu0 %v1963, 96
      %v1985 = vpop.permute.xlu0 %1984
      %1986 = vrot.lane.b32.xlu0 %v1966, 96
      %v1987 = vpop.permute.xlu0 %1986
      %1988 = vrot.lane.b32.xlu0 %v1969, 96
      %v1989 = vpop.permute.xlu0 %1988
      %1990 = vrot.lane.b32.xlu0 %v1971, 96
      %v1991 = vpop.permute.xlu0 %1990
      %1992 = vrot.lane.b32.xlu0 %v1973, 96
      %v1993 = vpop.permute.xlu0 %1992
      %1994 = vrot.lane.b32.xlu0 %v1975, 96
      %v1995 = vpop.permute.xlu0 %1994
      %1996 = vrot.lane.b32.xlu0 %v1977, 96
      %v1997 = vpop.permute.xlu0 %1996
      %1998 = vrot.lane.b32.xlu0 %v1979, 96
      %v1999 = vpop.permute.xlu0 %1998
      %v2000 = vsel %vm301, %v1981, %v1983
      %v2001 = vsel %vm301, %v1983, %v1985
      %v2002 = vsel %vm301, %v1985, %v1987
      %v2003 = vsel %vm301, %v1987, %v1989
      %v2004 = vsel %vm301, %v1991, %v1993
      %v2005 = vsel %vm301, %v1993, %v1995
      %v2006 = vsel %vm301, %v1995, %v1997
      %v2007 = vsel %vm301, %v1997, %v1999
      %v2018 = vadd.f32 %v1880, %v2000
      %v2019 = vadd.f32 %v1881, %v2001
      %v2020 = vadd.f32 %v1882, %v2002
      %v2021 = vadd.f32 %v1883, %v2003
      %v2022 = vadd.f32 %v1884, %v1989
      %v2023 = vadd.f32 %v1885, %v2004
      %v2024 = vadd.f32 %v1886, %v2005
      %v2025 = vadd.f32 %v1887, %v2006
      %v2026 = vadd.f32 %v1888, %v2007
      %v2027 = vadd.f32 %v1889, %v1999
      %s2028 = scalar_lea.vmem %s3, 2
      %v2029 = vld [vmem:[%s2028] ss:$8 sm:$0xf]
      %v2031 = vlaneseq
      %v2032 = vshrl.u32 %v2031, 7
      %v2033 = vsub.s32 0, %v2032
      %v2034 = vrot.slane %v2029, %v2033
      %v2035 = vlaneseq
      %v2036 = vshrl.u32 %v2035, 7
      %v2037 = vsub.s32 1, %v2036
      %v2038 = vrot.slane %v2029, %v2037
      %v2039 = vlaneseq
      %v2040 = vshrl.u32 %v2039, 7
      %v2041 = vsub.s32 2, %v2040
      %v2042 = vrot.slane %v2029, %v2041
      %v2043 = vlaneseq
      %v2044 = vshrl.u32 %v2043, 7
      %v2045 = vsub.s32 3, %v2044
      %v2046 = vrot.slane %v2029, %v2045
      %2047 = vrot.lane.b32.xlu0 %v2034, 96
      %v2048 = vpop.permute.xlu0 %2047
      %2049 = vrot.lane.b32.xlu0 %v2038, 96
      %v2050 = vpop.permute.xlu0 %2049
      %2051 = vrot.lane.b32.xlu0 %v2042, 96
      %v2052 = vpop.permute.xlu0 %2051
      %2053 = vrot.lane.b32.xlu0 %v2046, 96
      %v2054 = vpop.permute.xlu0 %2053
      %v2055 = vsel %vm301, %v2048, %v2050
      %v2056 = vsel %vm301, %v2050, %v2052
      %v2057 = vsel %vm301, %v2052, %v2054
      %v2063 = vmul.f32 %v361, %v2048
      %v2064 = vmul.f32 %v362, %v2055
      %v2065 = vmul.f32 %v363, %v2056
      %v2066 = vmul.f32 %v364, %v2057
      %v2067 = vmul.f32 %v365, %v2054
      %v2068 = vmul.f32 %v366, %v2048
      %v2069 = vmul.f32 %v367, %v2055
      %v2070 = vmul.f32 %v368, %v2056
      %v2071 = vmul.f32 %v369, %v2057
      %v2072 = vmul.f32 %v370, %v2054
      %2083 = vrot.lane.b32.xlu0 %v2063, 64
      %v2084 = vpop.permute.xlu0 %2083
      %2085 = vrot.lane.b32.xlu0 %v2064, 64
      %v2086 = vpop.permute.xlu0 %2085
      %2087 = vrot.lane.b32.xlu0 %v2065, 64
      %v2088 = vpop.permute.xlu0 %2087
      %2089 = vrot.lane.b32.xlu0 %v2066, 64
      %v2090 = vpop.permute.xlu0 %2089
      %2091 = vrot.lane.b32.xlu0 %v2067, 64
      %v2092 = vpop.permute.xlu0 %2091
      %2093 = vrot.lane.b32.xlu0 %v2068, 64
      %v2094 = vpop.permute.xlu0 %2093
      %2095 = vrot.lane.b32.xlu0 %v2069, 64
      %v2096 = vpop.permute.xlu0 %2095
      %2097 = vrot.lane.b32.xlu0 %v2070, 64
      %v2098 = vpop.permute.xlu0 %2097
      %2099 = vrot.lane.b32.xlu0 %v2071, 64
      %v2100 = vpop.permute.xlu0 %2099
      %2101 = vrot.lane.b32.xlu0 %v2072, 64
      %v2102 = vpop.permute.xlu0 %2101
      %v2103 = vsel %vm1123, %v2084, %v2086
      %v2104 = vsel %vm1123, %v2086, %v2088
      %v2105 = vsel %vm1123, %v2088, %v2090
      %v2106 = vsel %vm1123, %v2090, %v2092
      %v2107 = vsel %vm1123, %v2094, %v2096
      %v2108 = vsel %vm1123, %v2096, %v2098
      %v2109 = vsel %vm1123, %v2098, %v2100
      %v2110 = vsel %vm1123, %v2100, %v2102
      %v2121 = vadd.f32 %v2018, %v2103
      %v2122 = vadd.f32 %v2019, %v2104
      %v2123 = vadd.f32 %v2020, %v2105
      %v2124 = vadd.f32 %v2021, %v2106
      %v2125 = vadd.f32 %v2022, %v2092
      %v2126 = vadd.f32 %v2023, %v2107
      %v2127 = vadd.f32 %v2024, %v2108
      %v2128 = vadd.f32 %v2025, %v2109
      %v2129 = vadd.f32 %v2026, %v2110
      %v2130 = vadd.f32 %v2027, %v2102
      %s2131 = scalar_lea.vmem %s3, 33
      %v2132 = vld [vmem:[%s2131] ss:$8 sm:$0xf]
      %v2134 = vlaneseq
      %v2135 = vshrl.u32 %v2134, 7
      %v2136 = vsub.s32 0, %v2135
      %v2137 = vrot.slane %v2132, %v2136
      %v2138 = vlaneseq
      %v2139 = vshrl.u32 %v2138, 7
      %v2140 = vsub.s32 1, %v2139
      %v2141 = vrot.slane %v2132, %v2140
      %v2142 = vlaneseq
      %v2143 = vshrl.u32 %v2142, 7
      %v2144 = vsub.s32 2, %v2143
      %v2145 = vrot.slane %v2132, %v2144
      %v2146 = vlaneseq
      %v2147 = vshrl.u32 %v2146, 7
      %v2148 = vsub.s32 3, %v2147
      %v2149 = vrot.slane %v2132, %v2148
      %2150 = vrot.lane.b32.xlu0 %v2137, 96
      %v2151 = vpop.permute.xlu0 %2150
      %2152 = vrot.lane.b32.xlu0 %v2141, 96
      %v2153 = vpop.permute.xlu0 %2152
      %2154 = vrot.lane.b32.xlu0 %v2145, 96
      %v2155 = vpop.permute.xlu0 %2154
      %2156 = vrot.lane.b32.xlu0 %v2149, 96
      %v2157 = vpop.permute.xlu0 %2156
      %v2158 = vsel %vm301, %v2151, %v2153
      %v2159 = vsel %vm301, %v2153, %v2155
      %v2160 = vsel %vm301, %v2155, %v2157
      %v2166 = vmul.f32 %v361, %v2151
      %v2167 = vmul.f32 %v362, %v2158
      %v2168 = vmul.f32 %v363, %v2159
      %v2169 = vmul.f32 %v364, %v2160
      %v2170 = vmul.f32 %v365, %v2157
      %v2171 = vmul.f32 %v366, %v2151
      %v2172 = vmul.f32 %v367, %v2158
      %v2173 = vmul.f32 %v368, %v2159
      %v2174 = vmul.f32 %v369, %v2160
      %v2175 = vmul.f32 %v370, %v2157
      %v2176 = vmul.f32 %v371, %v2151
      %v2177 = vmul.f32 %v372, %v2158
      %v2178 = vmul.f32 %v373, %v2159
      %v2179 = vmul.f32 %v374, %v2160
      %v2180 = vmul.f32 %v375, %v2157
      %v2196 = vrot.slane %v2166, 1
      %v2197 = vrot.slane %v2171, 1
      %v2198 = vsel %vm496, %v2196, %v2197
      %v2199 = vrot.slane %v2167, 1
      %v2200 = vrot.slane %v2172, 1
      %v2201 = vsel %vm496, %v2199, %v2200
      %v2202 = vrot.slane %v2168, 1
      %v2203 = vrot.slane %v2173, 1
      %v2204 = vsel %vm496, %v2202, %v2203
      %v2205 = vrot.slane %v2169, 1
      %v2206 = vrot.slane %v2174, 1
      %v2207 = vsel %vm496, %v2205, %v2206
      %v2208 = vrot.slane %v2170, 1
      %v2209 = vrot.slane %v2175, 1
      %v2210 = vsel %vm496, %v2208, %v2209
      %v2211 = vrot.slane %v2176, 1
      %v2212 = vsel %vm496, %v2197, %v2211
      %v2213 = vrot.slane %v2177, 1
      %v2214 = vsel %vm496, %v2200, %v2213
      %v2215 = vrot.slane %v2178, 1
      %v2216 = vsel %vm496, %v2203, %v2215
      %v2217 = vrot.slane %v2179, 1
      %v2218 = vsel %vm496, %v2206, %v2217
      %v2219 = vrot.slane %v2180, 1
      %v2220 = vsel %vm496, %v2209, %v2219
      %2221 = vrot.lane.b32.xlu0 %v2198, 64
      %v2222 = vpop.permute.xlu0 %2221
      %2223 = vrot.lane.b32.xlu0 %v2201, 64
      %v2224 = vpop.permute.xlu0 %2223
      %2225 = vrot.lane.b32.xlu0 %v2204, 64
      %v2226 = vpop.permute.xlu0 %2225
      %2227 = vrot.lane.b32.xlu0 %v2207, 64
      %v2228 = vpop.permute.xlu0 %2227
      %2229 = vrot.lane.b32.xlu0 %v2210, 64
      %v2230 = vpop.permute.xlu0 %2229
      %2231 = vrot.lane.b32.xlu0 %v2212, 64
      %v2232 = vpop.permute.xlu0 %2231
      %2233 = vrot.lane.b32.xlu0 %v2214, 64
      %v2234 = vpop.permute.xlu0 %2233
      %2235 = vrot.lane.b32.xlu0 %v2216, 64
      %v2236 = vpop.permute.xlu0 %2235
      %2237 = vrot.lane.b32.xlu0 %v2218, 64
      %v2238 = vpop.permute.xlu0 %2237
      %2239 = vrot.lane.b32.xlu0 %v2220, 64
      %v2240 = vpop.permute.xlu0 %2239
      %v2241 = vsel %vm1123, %v2222, %v2224
      %v2242 = vsel %vm1123, %v2224, %v2226
      %v2243 = vsel %vm1123, %v2226, %v2228
      %v2244 = vsel %vm1123, %v2228, %v2230
      %v2245 = vsel %vm1123, %v2232, %v2234
      %v2246 = vsel %vm1123, %v2234, %v2236
      %v2247 = vsel %vm1123, %v2236, %v2238
      %v2248 = vsel %vm1123, %v2238, %v2240
      %v2259 = vadd.f32 %v2121, %v2241
      %v2260 = vadd.f32 %v2122, %v2242
      %v2261 = vadd.f32 %v2123, %v2243
      %v2262 = vadd.f32 %v2124, %v2244
      %v2263 = vadd.f32 %v2125, %v2230
      %v2264 = vadd.f32 %v2126, %v2245
      %v2265 = vadd.f32 %v2127, %v2246
      %v2266 = vadd.f32 %v2128, %v2247
      %v2267 = vadd.f32 %v2129, %v2248
      %v2268 = vadd.f32 %v2130, %v2240
      %s2269 = scalar_lea.vmem %s3, 64
      %v2270 = vld [vmem:[%s2269] ss:$8 sm:$0xf]
      %v2272 = vlaneseq
      %v2273 = vshrl.u32 %v2272, 7
      %v2274 = vsub.s32 0, %v2273
      %v2275 = vrot.slane %v2270, %v2274
      %v2276 = vlaneseq
      %v2277 = vshrl.u32 %v2276, 7
      %v2278 = vsub.s32 1, %v2277
      %v2279 = vrot.slane %v2270, %v2278
      %v2280 = vlaneseq
      %v2281 = vshrl.u32 %v2280, 7
      %v2282 = vsub.s32 2, %v2281
      %v2283 = vrot.slane %v2270, %v2282
      %v2284 = vlaneseq
      %v2285 = vshrl.u32 %v2284, 7
      %v2286 = vsub.s32 3, %v2285
      %v2287 = vrot.slane %v2270, %v2286
      %2288 = vrot.lane.b32.xlu0 %v2275, 96
      %v2289 = vpop.permute.xlu0 %2288
      %2290 = vrot.lane.b32.xlu0 %v2279, 96
      %v2291 = vpop.permute.xlu0 %2290
      %2292 = vrot.lane.b32.xlu0 %v2283, 96
      %v2293 = vpop.permute.xlu0 %2292
      %2294 = vrot.lane.b32.xlu0 %v2287, 96
      %v2295 = vpop.permute.xlu0 %2294
      %v2296 = vsel %vm301, %v2289, %v2291
      %v2297 = vsel %vm301, %v2291, %v2293
      %v2298 = vsel %vm301, %v2293, %v2295
      %v2304 = vmul.f32 %v361, %v2289
      %v2305 = vmul.f32 %v362, %v2296
      %v2306 = vmul.f32 %v363, %v2297
      %v2307 = vmul.f32 %v364, %v2298
      %v2308 = vmul.f32 %v365, %v2295
      %v2309 = vmul.f32 %v366, %v2289
      %v2310 = vmul.f32 %v367, %v2296
      %v2311 = vmul.f32 %v368, %v2297
      %v2312 = vmul.f32 %v369, %v2298
      %v2313 = vmul.f32 %v370, %v2295
      %v2314 = vmul.f32 %v371, %v2289
      %v2315 = vmul.f32 %v372, %v2296
      %v2316 = vmul.f32 %v373, %v2297
      %v2317 = vmul.f32 %v374, %v2298
      %v2318 = vmul.f32 %v375, %v2295
      %v2334 = vrot.slane %v2304, 2
      %v2335 = vrot.slane %v2309, 2
      %v2336 = vsel %vm607, %v2334, %v2335
      %v2337 = vrot.slane %v2305, 2
      %v2338 = vrot.slane %v2310, 2
      %v2339 = vsel %vm607, %v2337, %v2338
      %v2340 = vrot.slane %v2306, 2
      %v2341 = vrot.slane %v2311, 2
      %v2342 = vsel %vm607, %v2340, %v2341
      %v2343 = vrot.slane %v2307, 2
      %v2344 = vrot.slane %v2312, 2
      %v2345 = vsel %vm607, %v2343, %v2344
      %v2346 = vrot.slane %v2308, 2
      %v2347 = vrot.slane %v2313, 2
      %v2348 = vsel %vm607, %v2346, %v2347
      %v2349 = vrot.slane %v2314, 2
      %v2350 = vsel %vm607, %v2335, %v2349
      %v2351 = vrot.slane %v2315, 2
      %v2352 = vsel %vm607, %v2338, %v2351
      %v2353 = vrot.slane %v2316, 2
      %v2354 = vsel %vm607, %v2341, %v2353
      %v2355 = vrot.slane %v2317, 2
      %v2356 = vsel %vm607, %v2344, %v2355
      %v2357 = vrot.slane %v2318, 2
      %v2358 = vsel %vm607, %v2347, %v2357
      %2359 = vrot.lane.b32.xlu0 %v2336, 64
      %v2360 = vpop.permute.xlu0 %2359
      %2361 = vrot.lane.b32.xlu0 %v2339, 64
      %v2362 = vpop.permute.xlu0 %2361
      %2363 = vrot.lane.b32.xlu0 %v2342, 64
      %v2364 = vpop.permute.xlu0 %2363
      %2365 = vrot.lane.b32.xlu0 %v2345, 64
      %v2366 = vpop.permute.xlu0 %2365
      %2367 = vrot.lane.b32.xlu0 %v2348, 64
      %v2368 = vpop.permute.xlu0 %2367
      %2369 = vrot.lane.b32.xlu0 %v2350, 64
      %v2370 = vpop.permute.xlu0 %2369
      %2371 = vrot.lane.b32.xlu0 %v2352, 64
      %v2372 = vpop.permute.xlu0 %2371
      %2373 = vrot.lane.b32.xlu0 %v2354, 64
      %v2374 = vpop.permute.xlu0 %2373
      %2375 = vrot.lane.b32.xlu0 %v2356, 64
      %v2376 = vpop.permute.xlu0 %2375
      %2377 = vrot.lane.b32.xlu0 %v2358, 64
      %v2378 = vpop.permute.xlu0 %2377
      %v2379 = vsel %vm1123, %v2360, %v2362
      %v2380 = vsel %vm1123, %v2362, %v2364
      %v2381 = vsel %vm1123, %v2364, %v2366
      %v2382 = vsel %vm1123, %v2366, %v2368
      %v2383 = vsel %vm1123, %v2370, %v2372
      %v2384 = vsel %vm1123, %v2372, %v2374
      %v2385 = vsel %vm1123, %v2374, %v2376
      %v2386 = vsel %vm1123, %v2376, %v2378
      %v2397 = vadd.f32 %v2259, %v2379
      %v2398 = vadd.f32 %v2260, %v2380
      %v2399 = vadd.f32 %v2261, %v2381
      %v2400 = vadd.f32 %v2262, %v2382
      %v2401 = vadd.f32 %v2263, %v2368
      %v2402 = vadd.f32 %v2264, %v2383
      %v2403 = vadd.f32 %v2265, %v2384
      %v2404 = vadd.f32 %v2266, %v2385
      %v2405 = vadd.f32 %v2267, %v2386
      %v2406 = vadd.f32 %v2268, %v2378
      %s2407 = scalar_lea.vmem %s3, 71
      %v2408 = vld [vmem:[%s2407] ss:$8 sm:$0xf]
      %v2410 = vlaneseq
      %v2411 = vshrl.u32 %v2410, 7
      %v2412 = vsub.s32 0, %v2411
      %v2413 = vrot.slane %v2408, %v2412
      %v2414 = vlaneseq
      %v2415 = vshrl.u32 %v2414, 7
      %v2416 = vsub.s32 1, %v2415
      %v2417 = vrot.slane %v2408, %v2416
      %v2418 = vlaneseq
      %v2419 = vshrl.u32 %v2418, 7
      %v2420 = vsub.s32 2, %v2419
      %v2421 = vrot.slane %v2408, %v2420
      %v2422 = vlaneseq
      %v2423 = vshrl.u32 %v2422, 7
      %v2424 = vsub.s32 3, %v2423
      %v2425 = vrot.slane %v2408, %v2424
      %2426 = vrot.lane.b32.xlu0 %v2413, 96
      %v2427 = vpop.permute.xlu0 %2426
      %2428 = vrot.lane.b32.xlu0 %v2417, 96
      %v2429 = vpop.permute.xlu0 %2428
      %2430 = vrot.lane.b32.xlu0 %v2421, 96
      %v2431 = vpop.permute.xlu0 %2430
      %2432 = vrot.lane.b32.xlu0 %v2425, 96
      %v2433 = vpop.permute.xlu0 %2432
      %v2434 = vsel %vm301, %v2427, %v2429
      %v2435 = vsel %vm301, %v2429, %v2431
      %v2436 = vsel %vm301, %v2431, %v2433
      %v2442 = vmul.f32 %v361, %v2427
      %v2443 = vmul.f32 %v362, %v2434
      %v2444 = vmul.f32 %v363, %v2435
      %v2445 = vmul.f32 %v364, %v2436
      %v2446 = vmul.f32 %v365, %v2433
      %v2447 = vmul.f32 %v366, %v2427
      %v2448 = vmul.f32 %v367, %v2434
      %v2449 = vmul.f32 %v368, %v2435
      %v2450 = vmul.f32 %v369, %v2436
      %v2451 = vmul.f32 %v370, %v2433
      %v2452 = vmul.f32 %v371, %v2427
      %v2453 = vmul.f32 %v372, %v2434
      %v2454 = vmul.f32 %v373, %v2435
      %v2455 = vmul.f32 %v374, %v2436
      %v2456 = vmul.f32 %v375, %v2433
      %v2472 = vrot.slane %v2442, 3
      %v2473 = vrot.slane %v2447, 3
      %v2474 = vsel %vm718, %v2472, %v2473
      %v2475 = vrot.slane %v2443, 3
      %v2476 = vrot.slane %v2448, 3
      %v2477 = vsel %vm718, %v2475, %v2476
      %v2478 = vrot.slane %v2444, 3
      %v2479 = vrot.slane %v2449, 3
      %v2480 = vsel %vm718, %v2478, %v2479
      %v2481 = vrot.slane %v2445, 3
      %v2482 = vrot.slane %v2450, 3
      %v2483 = vsel %vm718, %v2481, %v2482
      %v2484 = vrot.slane %v2446, 3
      %v2485 = vrot.slane %v2451, 3
      %v2486 = vsel %vm718, %v2484, %v2485
      %v2487 = vrot.slane %v2452, 3
      %v2488 = vsel %vm718, %v2473, %v2487
      %v2489 = vrot.slane %v2453, 3
      %v2490 = vsel %vm718, %v2476, %v2489
      %v2491 = vrot.slane %v2454, 3
      %v2492 = vsel %vm718, %v2479, %v2491
      %v2493 = vrot.slane %v2455, 3
      %v2494 = vsel %vm718, %v2482, %v2493
      %v2495 = vrot.slane %v2456, 3
      %v2496 = vsel %vm718, %v2485, %v2495
      %2497 = vrot.lane.b32.xlu0 %v2474, 64
      %v2498 = vpop.permute.xlu0 %2497
      %2499 = vrot.lane.b32.xlu0 %v2477, 64
      %v2500 = vpop.permute.xlu0 %2499
      %2501 = vrot.lane.b32.xlu0 %v2480, 64
      %v2502 = vpop.permute.xlu0 %2501
      %2503 = vrot.lane.b32.xlu0 %v2483, 64
      %v2504 = vpop.permute.xlu0 %2503
      %2505 = vrot.lane.b32.xlu0 %v2486, 64
      %v2506 = vpop.permute.xlu0 %2505
      %2507 = vrot.lane.b32.xlu0 %v2488, 64
      %v2508 = vpop.permute.xlu0 %2507
      %2509 = vrot.lane.b32.xlu0 %v2490, 64
      %v2510 = vpop.permute.xlu0 %2509
      %2511 = vrot.lane.b32.xlu0 %v2492, 64
      %v2512 = vpop.permute.xlu0 %2511
      %2513 = vrot.lane.b32.xlu0 %v2494, 64
      %v2514 = vpop.permute.xlu0 %2513
      %2515 = vrot.lane.b32.xlu0 %v2496, 64
      %v2516 = vpop.permute.xlu0 %2515
      %v2517 = vsel %vm1123, %v2498, %v2500
      %v2518 = vsel %vm1123, %v2500, %v2502
      %v2519 = vsel %vm1123, %v2502, %v2504
      %v2520 = vsel %vm1123, %v2504, %v2506
      %v2521 = vsel %vm1123, %v2508, %v2510
      %v2522 = vsel %vm1123, %v2510, %v2512
      %v2523 = vsel %vm1123, %v2512, %v2514
      %v2524 = vsel %vm1123, %v2514, %v2516
      %v2535 = vadd.f32 %v2397, %v2517
      %v2536 = vadd.f32 %v2398, %v2518
      %v2537 = vadd.f32 %v2399, %v2519
      %v2538 = vadd.f32 %v2400, %v2520
      %v2539 = vadd.f32 %v2401, %v2506
      %v2540 = vadd.f32 %v2402, %v2521
      %v2541 = vadd.f32 %v2403, %v2522
      %v2542 = vadd.f32 %v2404, %v2523
      %v2543 = vadd.f32 %v2405, %v2524
      %v2544 = vadd.f32 %v2406, %v2516
      %s2545 = scalar_lea.vmem %s3, 102
      %v2546 = vld [vmem:[%s2545] ss:$8 sm:$0xf]
      %v2548 = vlaneseq
      %v2549 = vshrl.u32 %v2548, 7
      %v2550 = vsub.s32 0, %v2549
      %v2551 = vrot.slane %v2546, %v2550
      %v2552 = vlaneseq
      %v2553 = vshrl.u32 %v2552, 7
      %v2554 = vsub.s32 1, %v2553
      %v2555 = vrot.slane %v2546, %v2554
      %v2556 = vlaneseq
      %v2557 = vshrl.u32 %v2556, 7
      %v2558 = vsub.s32 2, %v2557
      %v2559 = vrot.slane %v2546, %v2558
      %v2560 = vlaneseq
      %v2561 = vshrl.u32 %v2560, 7
      %v2562 = vsub.s32 3, %v2561
      %v2563 = vrot.slane %v2546, %v2562
      %2564 = vrot.lane.b32.xlu0 %v2551, 96
      %v2565 = vpop.permute.xlu0 %2564
      %2566 = vrot.lane.b32.xlu0 %v2555, 96
      %v2567 = vpop.permute.xlu0 %2566
      %2568 = vrot.lane.b32.xlu0 %v2559, 96
      %v2569 = vpop.permute.xlu0 %2568
      %2570 = vrot.lane.b32.xlu0 %v2563, 96
      %v2571 = vpop.permute.xlu0 %2570
      %v2572 = vsel %vm301, %v2565, %v2567
      %v2573 = vsel %vm301, %v2567, %v2569
      %v2574 = vsel %vm301, %v2569, %v2571
      %v2580 = vmul.f32 %v361, %v2565
      %v2581 = vmul.f32 %v362, %v2572
      %v2582 = vmul.f32 %v363, %v2573
      %v2583 = vmul.f32 %v364, %v2574
      %v2584 = vmul.f32 %v365, %v2571
      %v2585 = vmul.f32 %v366, %v2565
      %v2586 = vmul.f32 %v367, %v2572
      %v2587 = vmul.f32 %v368, %v2573
      %v2588 = vmul.f32 %v369, %v2574
      %v2589 = vmul.f32 %v370, %v2571
      %v2590 = vmul.f32 %v371, %v2565
      %v2591 = vmul.f32 %v372, %v2572
      %v2592 = vmul.f32 %v373, %v2573
      %v2593 = vmul.f32 %v374, %v2574
      %v2594 = vmul.f32 %v375, %v2571
      %v2610 = vrot.slane %v2580, 4
      %v2611 = vrot.slane %v2585, 4
      %v2612 = vsel %vm829, %v2610, %v2611
      %v2613 = vrot.slane %v2581, 4
      %v2614 = vrot.slane %v2586, 4
      %v2615 = vsel %vm829, %v2613, %v2614
      %v2616 = vrot.slane %v2582, 4
      %v2617 = vrot.slane %v2587, 4
      %v2618 = vsel %vm829, %v2616, %v2617
      %v2619 = vrot.slane %v2583, 4
      %v2620 = vrot.slane %v2588, 4
      %v2621 = vsel %vm829, %v2619, %v2620
      %v2622 = vrot.slane %v2584, 4
      %v2623 = vrot.slane %v2589, 4
      %v2624 = vsel %vm829, %v2622, %v2623
      %v2625 = vrot.slane %v2590, 4
      %v2626 = vsel %vm829, %v2611, %v2625
      %v2627 = vrot.slane %v2591, 4
      %v2628 = vsel %vm829, %v2614, %v2627
      %v2629 = vrot.slane %v2592, 4
      %v2630 = vsel %vm829, %v2617, %v2629
      %v2631 = vrot.slane %v2593, 4
      %v2632 = vsel %vm829, %v2620, %v2631
      %v2633 = vrot.slane %v2594, 4
      %v2634 = vsel %vm829, %v2623, %v2633
      %2635 = vrot.lane.b32.xlu0 %v2612, 64
      %v2636 = vpop.permute.xlu0 %2635
      %2637 = vrot.lane.b32.xlu0 %v2615, 64
      %v2638 = vpop.permute.xlu0 %2637
      %2639 = vrot.lane.b32.xlu0 %v2618, 64
      %v2640 = vpop.permute.xlu0 %2639
      %2641 = vrot.lane.b32.xlu0 %v2621, 64
      %v2642 = vpop.permute.xlu0 %2641
      %2643 = vrot.lane.b32.xlu0 %v2624, 64
      %v2644 = vpop.permute.xlu0 %2643
      %2645 = vrot.lane.b32.xlu0 %v2626, 64
      %v2646 = vpop.permute.xlu0 %2645
      %2647 = vrot.lane.b32.xlu0 %v2628, 64
      %v2648 = vpop.permute.xlu0 %2647
      %2649 = vrot.lane.b32.xlu0 %v2630, 64
      %v2650 = vpop.permute.xlu0 %2649
      %2651 = vrot.lane.b32.xlu0 %v2632, 64
      %v2652 = vpop.permute.xlu0 %2651
      %2653 = vrot.lane.b32.xlu0 %v2634, 64
      %v2654 = vpop.permute.xlu0 %2653
      %v2655 = vsel %vm1123, %v2636, %v2638
      %v2656 = vsel %vm1123, %v2638, %v2640
      %v2657 = vsel %vm1123, %v2640, %v2642
      %v2658 = vsel %vm1123, %v2642, %v2644
      %v2659 = vsel %vm1123, %v2646, %v2648
      %v2660 = vsel %vm1123, %v2648, %v2650
      %v2661 = vsel %vm1123, %v2650, %v2652
      %v2662 = vsel %vm1123, %v2652, %v2654
      %v2673 = vadd.f32 %v2535, %v2655
      %v2674 = vadd.f32 %v2536, %v2656
      %v2675 = vadd.f32 %v2537, %v2657
      %v2676 = vadd.f32 %v2538, %v2658
      %v2677 = vadd.f32 %v2539, %v2644
      %v2678 = vadd.f32 %v2540, %v2659
      %v2679 = vadd.f32 %v2541, %v2660
      %v2680 = vadd.f32 %v2542, %v2661
      %v2681 = vadd.f32 %v2543, %v2662
      %v2682 = vadd.f32 %v2544, %v2654
      %s2683 = scalar_lea.vmem %s3, 133
      %v2684 = vld [vmem:[%s2683] ss:$8 sm:$0xf]
      %v2686 = vlaneseq
      %v2687 = vshrl.u32 %v2686, 7
      %v2688 = vsub.s32 0, %v2687
      %v2689 = vrot.slane %v2684, %v2688
      %v2690 = vlaneseq
      %v2691 = vshrl.u32 %v2690, 7
      %v2692 = vsub.s32 1, %v2691
      %v2693 = vrot.slane %v2684, %v2692
      %v2694 = vlaneseq
      %v2695 = vshrl.u32 %v2694, 7
      %v2696 = vsub.s32 2, %v2695
      %v2697 = vrot.slane %v2684, %v2696
      %v2698 = vlaneseq
      %v2699 = vshrl.u32 %v2698, 7
      %v2700 = vsub.s32 3, %v2699
      %v2701 = vrot.slane %v2684, %v2700
      %2702 = vrot.lane.b32.xlu0 %v2689, 96
      %v2703 = vpop.permute.xlu0 %2702
      %2704 = vrot.lane.b32.xlu0 %v2693, 96
      %v2705 = vpop.permute.xlu0 %2704
      %2706 = vrot.lane.b32.xlu0 %v2697, 96
      %v2707 = vpop.permute.xlu0 %2706
      %2708 = vrot.lane.b32.xlu0 %v2701, 96
      %v2709 = vpop.permute.xlu0 %2708
      %v2710 = vsel %vm301, %v2703, %v2705
      %v2711 = vsel %vm301, %v2705, %v2707
      %v2712 = vsel %vm301, %v2707, %v2709
      %v2718 = vmul.f32 %v361, %v2703
      %v2719 = vmul.f32 %v362, %v2710
      %v2720 = vmul.f32 %v363, %v2711
      %v2721 = vmul.f32 %v364, %v2712
      %v2722 = vmul.f32 %v365, %v2709
      %v2723 = vmul.f32 %v366, %v2703
      %v2724 = vmul.f32 %v367, %v2710
      %v2725 = vmul.f32 %v368, %v2711
      %v2726 = vmul.f32 %v369, %v2712
      %v2727 = vmul.f32 %v370, %v2709
      %v2728 = vmul.f32 %v371, %v2703
      %v2729 = vmul.f32 %v372, %v2710
      %v2730 = vmul.f32 %v373, %v2711
      %v2731 = vmul.f32 %v374, %v2712
      %v2732 = vmul.f32 %v375, %v2709
      %v2748 = vrot.slane %v2718, 5
      %v2749 = vrot.slane %v2723, 5
      %v2750 = vsel %vm324, %v2748, %v2749
      %v2751 = vrot.slane %v2719, 5
      %v2752 = vrot.slane %v2724, 5
      %v2753 = vsel %vm324, %v2751, %v2752
      %v2754 = vrot.slane %v2720, 5
      %v2755 = vrot.slane %v2725, 5
      %v2756 = vsel %vm324, %v2754, %v2755
      %v2757 = vrot.slane %v2721, 5
      %v2758 = vrot.slane %v2726, 5
      %v2759 = vsel %vm324, %v2757, %v2758
      %v2760 = vrot.slane %v2722, 5
      %v2761 = vrot.slane %v2727, 5
      %v2762 = vsel %vm324, %v2760, %v2761
      %v2763 = vrot.slane %v2728, 5
      %v2764 = vsel %vm324, %v2749, %v2763
      %v2765 = vrot.slane %v2729, 5
      %v2766 = vsel %vm324, %v2752, %v2765
      %v2767 = vrot.slane %v2730, 5
      %v2768 = vsel %vm324, %v2755, %v2767
      %v2769 = vrot.slane %v2731, 5
      %v2770 = vsel %vm324, %v2758, %v2769
      %v2771 = vrot.slane %v2732, 5
      %v2772 = vsel %vm324, %v2761, %v2771
      %2773 = vrot.lane.b32.xlu0 %v2750, 64
      %v2774 = vpop.permute.xlu0 %2773
      %2775 = vrot.lane.b32.xlu0 %v2753, 64
      %v2776 = vpop.permute.xlu0 %2775
      %2777 = vrot.lane.b32.xlu0 %v2756, 64
      %v2778 = vpop.permute.xlu0 %2777
      %2779 = vrot.lane.b32.xlu0 %v2759, 64
      %v2780 = vpop.permute.xlu0 %2779
      %2781 = vrot.lane.b32.xlu0 %v2762, 64
      %v2782 = vpop.permute.xlu0 %2781
      %2783 = vrot.lane.b32.xlu0 %v2764, 64
      %v2784 = vpop.permute.xlu0 %2783
      %2785 = vrot.lane.b32.xlu0 %v2766, 64
      %v2786 = vpop.permute.xlu0 %2785
      %2787 = vrot.lane.b32.xlu0 %v2768, 64
      %v2788 = vpop.permute.xlu0 %2787
      %2789 = vrot.lane.b32.xlu0 %v2770, 64
      %v2790 = vpop.permute.xlu0 %2789
      %2791 = vrot.lane.b32.xlu0 %v2772, 64
      %v2792 = vpop.permute.xlu0 %2791
      %v2793 = vsel %vm1123, %v2774, %v2776
      %v2794 = vsel %vm1123, %v2776, %v2778
      %v2795 = vsel %vm1123, %v2778, %v2780
      %v2796 = vsel %vm1123, %v2780, %v2782
      %v2797 = vsel %vm1123, %v2784, %v2786
      %v2798 = vsel %vm1123, %v2786, %v2788
      %v2799 = vsel %vm1123, %v2788, %v2790
      %v2800 = vsel %vm1123, %v2790, %v2792
      %v2811 = vadd.f32 %v2673, %v2793
      %v2812 = vadd.f32 %v2674, %v2794
      %v2813 = vadd.f32 %v2675, %v2795
      %v2814 = vadd.f32 %v2676, %v2796
      %v2815 = vadd.f32 %v2677, %v2782
      %v2816 = vadd.f32 %v2678, %v2797
      %v2817 = vadd.f32 %v2679, %v2798
      %v2818 = vadd.f32 %v2680, %v2799
      %v2819 = vadd.f32 %v2681, %v2800
      %v2820 = vadd.f32 %v2682, %v2792
      %s2821 = scalar_lea.vmem %s3, 164
      %v2822 = vld [vmem:[%s2821] ss:$8 sm:$0xf]
      %v2824 = vlaneseq
      %v2825 = vshrl.u32 %v2824, 7
      %v2826 = vsub.s32 0, %v2825
      %v2827 = vrot.slane %v2822, %v2826
      %v2828 = vlaneseq
      %v2829 = vshrl.u32 %v2828, 7
      %v2830 = vsub.s32 1, %v2829
      %v2831 = vrot.slane %v2822, %v2830
      %v2832 = vlaneseq
      %v2833 = vshrl.u32 %v2832, 7
      %v2834 = vsub.s32 2, %v2833
      %v2835 = vrot.slane %v2822, %v2834
      %v2836 = vlaneseq
      %v2837 = vshrl.u32 %v2836, 7
      %v2838 = vsub.s32 3, %v2837
      %v2839 = vrot.slane %v2822, %v2838
      %2840 = vrot.lane.b32.xlu0 %v2827, 96
      %v2841 = vpop.permute.xlu0 %2840
      %2842 = vrot.lane.b32.xlu0 %v2831, 96
      %v2843 = vpop.permute.xlu0 %2842
      %2844 = vrot.lane.b32.xlu0 %v2835, 96
      %v2845 = vpop.permute.xlu0 %2844
      %2846 = vrot.lane.b32.xlu0 %v2839, 96
      %v2847 = vpop.permute.xlu0 %2846
      %v2848 = vsel %vm301, %v2841, %v2843
      %v2849 = vsel %vm301, %v2843, %v2845
      %v2850 = vsel %vm301, %v2845, %v2847
      %v2856 = vmul.f32 %v361, %v2841
      %v2857 = vmul.f32 %v362, %v2848
      %v2858 = vmul.f32 %v363, %v2849
      %v2859 = vmul.f32 %v364, %v2850
      %v2860 = vmul.f32 %v365, %v2847
      %v2861 = vmul.f32 %v366, %v2841
      %v2862 = vmul.f32 %v367, %v2848
      %v2863 = vmul.f32 %v368, %v2849
      %v2864 = vmul.f32 %v369, %v2850
      %v2865 = vmul.f32 %v370, %v2847
      %v2866 = vmul.f32 %v371, %v2841
      %v2867 = vmul.f32 %v372, %v2848
      %v2868 = vmul.f32 %v373, %v2849
      %v2869 = vmul.f32 %v374, %v2850
      %v2870 = vmul.f32 %v375, %v2847
      %v2886 = vrot.slane %v2856, 6
      %v2887 = vrot.slane %v2861, 6
      %v2888 = vsel %vm1050, %v2886, %v2887
      %v2889 = vrot.slane %v2857, 6
      %v2890 = vrot.slane %v2862, 6
      %v2891 = vsel %vm1050, %v2889, %v2890
      %v2892 = vrot.slane %v2858, 6
      %v2893 = vrot.slane %v2863, 6
      %v2894 = vsel %vm1050, %v2892, %v2893
      %v2895 = vrot.slane %v2859, 6
      %v2896 = vrot.slane %v2864, 6
      %v2897 = vsel %vm1050, %v2895, %v2896
      %v2898 = vrot.slane %v2860, 6
      %v2899 = vrot.slane %v2865, 6
      %v2900 = vsel %vm1050, %v2898, %v2899
      %v2901 = vrot.slane %v2866, 6
      %v2902 = vsel %vm1050, %v2887, %v2901
      %v2903 = vrot.slane %v2867, 6
      %v2904 = vsel %vm1050, %v2890, %v2903
      %v2905 = vrot.slane %v2868, 6
      %v2906 = vsel %vm1050, %v2893, %v2905
      %v2907 = vrot.slane %v2869, 6
      %v2908 = vsel %vm1050, %v2896, %v2907
      %v2909 = vrot.slane %v2870, 6
      %v2910 = vsel %vm1050, %v2899, %v2909
      %2911 = vrot.lane.b32.xlu0 %v2888, 64
      %v2912 = vpop.permute.xlu0 %2911
      %2913 = vrot.lane.b32.xlu0 %v2891, 64
      %v2914 = vpop.permute.xlu0 %2913
      %2915 = vrot.lane.b32.xlu0 %v2894, 64
      %v2916 = vpop.permute.xlu0 %2915
      %2917 = vrot.lane.b32.xlu0 %v2897, 64
      %v2918 = vpop.permute.xlu0 %2917
      %2919 = vrot.lane.b32.xlu0 %v2900, 64
      %v2920 = vpop.permute.xlu0 %2919
      %2921 = vrot.lane.b32.xlu0 %v2902, 64
      %v2922 = vpop.permute.xlu0 %2921
      %2923 = vrot.lane.b32.xlu0 %v2904, 64
      %v2924 = vpop.permute.xlu0 %2923
      %2925 = vrot.lane.b32.xlu0 %v2906, 64
      %v2926 = vpop.permute.xlu0 %2925
      %2927 = vrot.lane.b32.xlu0 %v2908, 64
      %v2928 = vpop.permute.xlu0 %2927
      %2929 = vrot.lane.b32.xlu0 %v2910, 64
      %v2930 = vpop.permute.xlu0 %2929
      %v2931 = vsel %vm1123, %v2912, %v2914
      %v2932 = vsel %vm1123, %v2914, %v2916
      %v2933 = vsel %vm1123, %v2916, %v2918
      %v2934 = vsel %vm1123, %v2918, %v2920
      %v2935 = vsel %vm1123, %v2922, %v2924
      %v2936 = vsel %vm1123, %v2924, %v2926
      %v2937 = vsel %vm1123, %v2926, %v2928
      %v2938 = vsel %vm1123, %v2928, %v2930
      %v2949 = vadd.f32 %v2811, %v2931
      %v2950 = vadd.f32 %v2812, %v2932
      %v2951 = vadd.f32 %v2813, %v2933
      %v2952 = vadd.f32 %v2814, %v2934
      %v2953 = vadd.f32 %v2815, %v2920
      %v2954 = vadd.f32 %v2816, %v2935
      %v2955 = vadd.f32 %v2817, %v2936
      %v2956 = vadd.f32 %v2818, %v2937
      %v2957 = vadd.f32 %v2819, %v2938
      %v2958 = vadd.f32 %v2820, %v2930
      %s2959 = scalar_lea.vmem %s3, 3
      %v2960 = vld [vmem:[%s2959] ss:$8 sm:$0xf]
      %v2962 = vlaneseq
      %v2963 = vshrl.u32 %v2962, 7
      %v2964 = vsub.s32 0, %v2963
      %v2965 = vrot.slane %v2960, %v2964
      %v2966 = vlaneseq
      %v2967 = vshrl.u32 %v2966, 7
      %v2968 = vsub.s32 1, %v2967
      %v2969 = vrot.slane %v2960, %v2968
      %v2970 = vlaneseq
      %v2971 = vshrl.u32 %v2970, 7
      %v2972 = vsub.s32 2, %v2971
      %v2973 = vrot.slane %v2960, %v2972
      %v2974 = vlaneseq
      %v2975 = vshrl.u32 %v2974, 7
      %v2976 = vsub.s32 3, %v2975
      %v2977 = vrot.slane %v2960, %v2976
      %v2982 = vmul.f32 %v362, %v2965
      %v2983 = vmul.f32 %v363, %v2969
      %v2984 = vmul.f32 %v364, %v2973
      %v2985 = vmul.f32 %v365, %v2977
      %v2986 = vmul.f32 %v367, %v2965
      %v2987 = vmul.f32 %v368, %v2969
      %v2988 = vmul.f32 %v369, %v2973
      %v2989 = vmul.f32 %v370, %v2977
      %2998 = vrot.lane.b32.xlu0 %v2982, 32
      %v2999 = vpop.permute.xlu0 %2998
      %3000 = vrot.lane.b32.xlu0 %v2983, 32
      %v3001 = vpop.permute.xlu0 %3000
      %3002 = vrot.lane.b32.xlu0 %v2984, 32
      %v3003 = vpop.permute.xlu0 %3002
      %3004 = vrot.lane.b32.xlu0 %v2985, 32
      %v3005 = vpop.permute.xlu0 %3004
      %3006 = vrot.lane.b32.xlu0 %v2986, 32
      %v3007 = vpop.permute.xlu0 %3006
      %3008 = vrot.lane.b32.xlu0 %v2987, 32
      %v3009 = vpop.permute.xlu0 %3008
      %3010 = vrot.lane.b32.xlu0 %v2988, 32
      %v3011 = vpop.permute.xlu0 %3010
      %3012 = vrot.lane.b32.xlu0 %v2989, 32
      %v3013 = vpop.permute.xlu0 %3012
      %v3014 = vsel %vm402, %v2999, %v3001
      %v3015 = vsel %vm402, %v3001, %v3003
      %v3016 = vsel %vm402, %v3003, %v3005
      %v3017 = vsel %vm402, %v3007, %v3009
      %v3018 = vsel %vm402, %v3009, %v3011
      %v3019 = vsel %vm402, %v3011, %v3013
      %v3030 = vadd.f32 %v2949, %v2999
      %v3031 = vadd.f32 %v2950, %v3014
      %v3032 = vadd.f32 %v2951, %v3015
      %v3033 = vadd.f32 %v2952, %v3016
      %v3034 = vadd.f32 %v2953, %v3005
      %v3035 = vadd.f32 %v2954, %v3007
      %v3036 = vadd.f32 %v2955, %v3017
      %v3037 = vadd.f32 %v2956, %v3018
      %v3038 = vadd.f32 %v2957, %v3019
      %v3039 = vadd.f32 %v2958, %v3013
      %s3040 = scalar_lea.vmem %s3, 34
      %v3041 = vld [vmem:[%s3040] ss:$8 sm:$0xf]
      %v3043 = vlaneseq
      %v3044 = vshrl.u32 %v3043, 7
      %v3045 = vsub.s32 0, %v3044
      %v3046 = vrot.slane %v3041, %v3045
      %v3047 = vlaneseq
      %v3048 = vshrl.u32 %v3047, 7
      %v3049 = vsub.s32 1, %v3048
      %v3050 = vrot.slane %v3041, %v3049
      %v3051 = vlaneseq
      %v3052 = vshrl.u32 %v3051, 7
      %v3053 = vsub.s32 2, %v3052
      %v3054 = vrot.slane %v3041, %v3053
      %v3055 = vlaneseq
      %v3056 = vshrl.u32 %v3055, 7
      %v3057 = vsub.s32 3, %v3056
      %v3058 = vrot.slane %v3041, %v3057
      %v3063 = vmul.f32 %v362, %v3046
      %v3064 = vmul.f32 %v363, %v3050
      %v3065 = vmul.f32 %v364, %v3054
      %v3066 = vmul.f32 %v365, %v3058
      %v3067 = vmul.f32 %v367, %v3046
      %v3068 = vmul.f32 %v368, %v3050
      %v3069 = vmul.f32 %v369, %v3054
      %v3070 = vmul.f32 %v370, %v3058
      %v3071 = vmul.f32 %v372, %v3046
      %v3072 = vmul.f32 %v373, %v3050
      %v3073 = vmul.f32 %v374, %v3054
      %v3074 = vmul.f32 %v375, %v3058
      %v3087 = vrot.slane %v3063, 1
      %v3088 = vrot.slane %v3067, 1
      %v3089 = vsel %vm496, %v3087, %v3088
      %v3090 = vrot.slane %v3064, 1
      %v3091 = vrot.slane %v3068, 1
      %v3092 = vsel %vm496, %v3090, %v3091
      %v3093 = vrot.slane %v3065, 1
      %v3094 = vrot.slane %v3069, 1
      %v3095 = vsel %vm496, %v3093, %v3094
      %v3096 = vrot.slane %v3066, 1
      %v3097 = vrot.slane %v3070, 1
      %v3098 = vsel %vm496, %v3096, %v3097
      %v3099 = vrot.slane %v3071, 1
      %v3100 = vsel %vm496, %v3088, %v3099
      %v3101 = vrot.slane %v3072, 1
      %v3102 = vsel %vm496, %v3091, %v3101
      %v3103 = vrot.slane %v3073, 1
      %v3104 = vsel %vm496, %v3094, %v3103
      %v3105 = vrot.slane %v3074, 1
      %v3106 = vsel %vm496, %v3097, %v3105
      %3107 = vrot.lane.b32.xlu0 %v3089, 32
      %v3108 = vpop.permute.xlu0 %3107
      %3109 = vrot.lane.b32.xlu0 %v3092, 32
      %v3110 = vpop.permute.xlu0 %3109
      %3111 = vrot.lane.b32.xlu0 %v3095, 32
      %v3112 = vpop.permute.xlu0 %3111
      %3113 = vrot.lane.b32.xlu0 %v3098, 32
      %v3114 = vpop.permute.xlu0 %3113
      %3115 = vrot.lane.b32.xlu0 %v3100, 32
      %v3116 = vpop.permute.xlu0 %3115
      %3117 = vrot.lane.b32.xlu0 %v3102, 32
      %v3118 = vpop.permute.xlu0 %3117
      %3119 = vrot.lane.b32.xlu0 %v3104, 32
      %v3120 = vpop.permute.xlu0 %3119
      %3121 = vrot.lane.b32.xlu0 %v3106, 32
      %v3122 = vpop.permute.xlu0 %3121
      %v3123 = vsel %vm402, %v3108, %v3110
      %v3124 = vsel %vm402, %v3110, %v3112
      %v3125 = vsel %vm402, %v3112, %v3114
      %v3126 = vsel %vm402, %v3116, %v3118
      %v3127 = vsel %vm402, %v3118, %v3120
      %v3128 = vsel %vm402, %v3120, %v3122
      %v3139 = vadd.f32 %v3030, %v3108
      %v3140 = vadd.f32 %v3031, %v3123
      %v3141 = vadd.f32 %v3032, %v3124
      %v3142 = vadd.f32 %v3033, %v3125
      %v3143 = vadd.f32 %v3034, %v3114
      %v3144 = vadd.f32 %v3035, %v3116
      %v3145 = vadd.f32 %v3036, %v3126
      %v3146 = vadd.f32 %v3037, %v3127
      %v3147 = vadd.f32 %v3038, %v3128
      %v3148 = vadd.f32 %v3039, %v3122
      %s3149 = scalar_lea.vmem %s3, 65
      %v3150 = vld [vmem:[%s3149] ss:$8 sm:$0xf]
      %v3152 = vlaneseq
      %v3153 = vshrl.u32 %v3152, 7
      %v3154 = vsub.s32 0, %v3153
      %v3155 = vrot.slane %v3150, %v3154
      %v3156 = vlaneseq
      %v3157 = vshrl.u32 %v3156, 7
      %v3158 = vsub.s32 1, %v3157
      %v3159 = vrot.slane %v3150, %v3158
      %v3160 = vlaneseq
      %v3161 = vshrl.u32 %v3160, 7
      %v3162 = vsub.s32 2, %v3161
      %v3163 = vrot.slane %v3150, %v3162
      %v3164 = vlaneseq
      %v3165 = vshrl.u32 %v3164, 7
      %v3166 = vsub.s32 3, %v3165
      %v3167 = vrot.slane %v3150, %v3166
      %v3172 = vmul.f32 %v362, %v3155
      %v3173 = vmul.f32 %v363, %v3159
      %v3174 = vmul.f32 %v364, %v3163
      %v3175 = vmul.f32 %v365, %v3167
      %v3176 = vmul.f32 %v367, %v3155
      %v3177 = vmul.f32 %v368, %v3159
      %v3178 = vmul.f32 %v369, %v3163
      %v3179 = vmul.f32 %v370, %v3167
      %v3180 = vmul.f32 %v372, %v3155
      %v3181 = vmul.f32 %v373, %v3159
      %v3182 = vmul.f32 %v374, %v3163
      %v3183 = vmul.f32 %v375, %v3167
      %v3196 = vrot.slane %v3172, 2
      %v3197 = vrot.slane %v3176, 2
      %v3198 = vsel %vm607, %v3196, %v3197
      %v3199 = vrot.slane %v3173, 2
      %v3200 = vrot.slane %v3177, 2
      %v3201 = vsel %vm607, %v3199, %v3200
      %v3202 = vrot.slane %v3174, 2
      %v3203 = vrot.slane %v3178, 2
      %v3204 = vsel %vm607, %v3202, %v3203
      %v3205 = vrot.slane %v3175, 2
      %v3206 = vrot.slane %v3179, 2
      %v3207 = vsel %vm607, %v3205, %v3206
      %v3208 = vrot.slane %v3180, 2
      %v3209 = vsel %vm607, %v3197, %v3208
      %v3210 = vrot.slane %v3181, 2
      %v3211 = vsel %vm607, %v3200, %v3210
      %v3212 = vrot.slane %v3182, 2
      %v3213 = vsel %vm607, %v3203, %v3212
      %v3214 = vrot.slane %v3183, 2
      %v3215 = vsel %vm607, %v3206, %v3214
      %3216 = vrot.lane.b32.xlu0 %v3198, 32
      %v3217 = vpop.permute.xlu0 %3216
      %3218 = vrot.lane.b32.xlu0 %v3201, 32
      %v3219 = vpop.permute.xlu0 %3218
      %3220 = vrot.lane.b32.xlu0 %v3204, 32
      %v3221 = vpop.permute.xlu0 %3220
      %3222 = vrot.lane.b32.xlu0 %v3207, 32
      %v3223 = vpop.permute.xlu0 %3222
      %3224 = vrot.lane.b32.xlu0 %v3209, 32
      %v3225 = vpop.permute.xlu0 %3224
      %3226 = vrot.lane.b32.xlu0 %v3211, 32
      %v3227 = vpop.permute.xlu0 %3226
      %3228 = vrot.lane.b32.xlu0 %v3213, 32
      %v3229 = vpop.permute.xlu0 %3228
      %3230 = vrot.lane.b32.xlu0 %v3215, 32
      %v3231 = vpop.permute.xlu0 %3230
      %v3232 = vsel %vm402, %v3217, %v3219
      %v3233 = vsel %vm402, %v3219, %v3221
      %v3234 = vsel %vm402, %v3221, %v3223
      %v3235 = vsel %vm402, %v3225, %v3227
      %v3236 = vsel %vm402, %v3227, %v3229
      %v3237 = vsel %vm402, %v3229, %v3231
      %v3248 = vadd.f32 %v3139, %v3217
      %v3249 = vadd.f32 %v3140, %v3232
      %v3250 = vadd.f32 %v3141, %v3233
      %v3251 = vadd.f32 %v3142, %v3234
      %v3252 = vadd.f32 %v3143, %v3223
      %v3253 = vadd.f32 %v3144, %v3225
      %v3254 = vadd.f32 %v3145, %v3235
      %v3255 = vadd.f32 %v3146, %v3236
      %v3256 = vadd.f32 %v3147, %v3237
      %v3257 = vadd.f32 %v3148, %v3231
      %s3258 = scalar_lea.vmem %s3, 96
      %v3259 = vld [vmem:[%s3258] ss:$8 sm:$0xf]
      %v3261 = vlaneseq
      %v3262 = vshrl.u32 %v3261, 7
      %v3263 = vsub.s32 0, %v3262
      %v3264 = vrot.slane %v3259, %v3263
      %v3265 = vlaneseq
      %v3266 = vshrl.u32 %v3265, 7
      %v3267 = vsub.s32 1, %v3266
      %v3268 = vrot.slane %v3259, %v3267
      %v3269 = vlaneseq
      %v3270 = vshrl.u32 %v3269, 7
      %v3271 = vsub.s32 2, %v3270
      %v3272 = vrot.slane %v3259, %v3271
      %v3273 = vlaneseq
      %v3274 = vshrl.u32 %v3273, 7
      %v3275 = vsub.s32 3, %v3274
      %v3276 = vrot.slane %v3259, %v3275
      %v3281 = vmul.f32 %v362, %v3264
      %v3282 = vmul.f32 %v363, %v3268
      %v3283 = vmul.f32 %v364, %v3272
      %v3284 = vmul.f32 %v365, %v3276
      %v3285 = vmul.f32 %v367, %v3264
      %v3286 = vmul.f32 %v368, %v3268
      %v3287 = vmul.f32 %v369, %v3272
      %v3288 = vmul.f32 %v370, %v3276
      %v3289 = vmul.f32 %v372, %v3264
      %v3290 = vmul.f32 %v373, %v3268
      %v3291 = vmul.f32 %v374, %v3272
      %v3292 = vmul.f32 %v375, %v3276
      %v3305 = vrot.slane %v3281, 3
      %v3306 = vrot.slane %v3285, 3
      %v3307 = vsel %vm718, %v3305, %v3306
      %v3308 = vrot.slane %v3282, 3
      %v3309 = vrot.slane %v3286, 3
      %v3310 = vsel %vm718, %v3308, %v3309
      %v3311 = vrot.slane %v3283, 3
      %v3312 = vrot.slane %v3287, 3
      %v3313 = vsel %vm718, %v3311, %v3312
      %v3314 = vrot.slane %v3284, 3
      %v3315 = vrot.slane %v3288, 3
      %v3316 = vsel %vm718, %v3314, %v3315
      %v3317 = vrot.slane %v3289, 3
      %v3318 = vsel %vm718, %v3306, %v3317
      %v3319 = vrot.slane %v3290, 3
      %v3320 = vsel %vm718, %v3309, %v3319
      %v3321 = vrot.slane %v3291, 3
      %v3322 = vsel %vm718, %v3312, %v3321
      %v3323 = vrot.slane %v3292, 3
      %v3324 = vsel %vm718, %v3315, %v3323
      %3325 = vrot.lane.b32.xlu0 %v3307, 32
      %v3326 = vpop.permute.xlu0 %3325
      %3327 = vrot.lane.b32.xlu0 %v3310, 32
      %v3328 = vpop.permute.xlu0 %3327
      %3329 = vrot.lane.b32.xlu0 %v3313, 32
      %v3330 = vpop.permute.xlu0 %3329
      %3331 = vrot.lane.b32.xlu0 %v3316, 32
      %v3332 = vpop.permute.xlu0 %3331
      %3333 = vrot.lane.b32.xlu0 %v3318, 32
      %v3334 = vpop.permute.xlu0 %3333
      %3335 = vrot.lane.b32.xlu0 %v3320, 32
      %v3336 = vpop.permute.xlu0 %3335
      %3337 = vrot.lane.b32.xlu0 %v3322, 32
      %v3338 = vpop.permute.xlu0 %3337
      %3339 = vrot.lane.b32.xlu0 %v3324, 32
      %v3340 = vpop.permute.xlu0 %3339
      %v3341 = vsel %vm402, %v3326, %v3328
      %v3342 = vsel %vm402, %v3328, %v3330
      %v3343 = vsel %vm402, %v3330, %v3332
      %v3344 = vsel %vm402, %v3334, %v3336
      %v3345 = vsel %vm402, %v3336, %v3338
      %v3346 = vsel %vm402, %v3338, %v3340
      %v3357 = vadd.f32 %v3248, %v3326
      %v3358 = vadd.f32 %v3249, %v3341
      %v3359 = vadd.f32 %v3250, %v3342
      %v3360 = vadd.f32 %v3251, %v3343
      %v3361 = vadd.f32 %v3252, %v3332
      %v3362 = vadd.f32 %v3253, %v3334
      %v3363 = vadd.f32 %v3254, %v3344
      %v3364 = vadd.f32 %v3255, %v3345
      %v3365 = vadd.f32 %v3256, %v3346
      %v3366 = vadd.f32 %v3257, %v3340
      %s3367 = scalar_lea.vmem %s3, 103
      %v3368 = vld [vmem:[%s3367] ss:$8 sm:$0xf]
      %v3370 = vlaneseq
      %v3371 = vshrl.u32 %v3370, 7
      %v3372 = vsub.s32 0, %v3371
      %v3373 = vrot.slane %v3368, %v3372
      %v3374 = vlaneseq
      %v3375 = vshrl.u32 %v3374, 7
      %v3376 = vsub.s32 1, %v3375
      %v3377 = vrot.slane %v3368, %v3376
      %v3378 = vlaneseq
      %v3379 = vshrl.u32 %v3378, 7
      %v3380 = vsub.s32 2, %v3379
      %v3381 = vrot.slane %v3368, %v3380
      %v3382 = vlaneseq
      %v3383 = vshrl.u32 %v3382, 7
      %v3384 = vsub.s32 3, %v3383
      %v3385 = vrot.slane %v3368, %v3384
      %v3390 = vmul.f32 %v362, %v3373
      %v3391 = vmul.f32 %v363, %v3377
      %v3392 = vmul.f32 %v364, %v3381
      %v3393 = vmul.f32 %v365, %v3385
      %v3394 = vmul.f32 %v367, %v3373
      %v3395 = vmul.f32 %v368, %v3377
      %v3396 = vmul.f32 %v369, %v3381
      %v3397 = vmul.f32 %v370, %v3385
      %v3398 = vmul.f32 %v372, %v3373
      %v3399 = vmul.f32 %v373, %v3377
      %v3400 = vmul.f32 %v374, %v3381
      %v3401 = vmul.f32 %v375, %v3385
      %v3414 = vrot.slane %v3390, 4
      %v3415 = vrot.slane %v3394, 4
      %v3416 = vsel %vm829, %v3414, %v3415
      %v3417 = vrot.slane %v3391, 4
      %v3418 = vrot.slane %v3395, 4
      %v3419 = vsel %vm829, %v3417, %v3418
      %v3420 = vrot.slane %v3392, 4
      %v3421 = vrot.slane %v3396, 4
      %v3422 = vsel %vm829, %v3420, %v3421
      %v3423 = vrot.slane %v3393, 4
      %v3424 = vrot.slane %v3397, 4
      %v3425 = vsel %vm829, %v3423, %v3424
      %v3426 = vrot.slane %v3398, 4
      %v3427 = vsel %vm829, %v3415, %v3426
      %v3428 = vrot.slane %v3399, 4
      %v3429 = vsel %vm829, %v3418, %v3428
      %v3430 = vrot.slane %v3400, 4
      %v3431 = vsel %vm829, %v3421, %v3430
      %v3432 = vrot.slane %v3401, 4
      %v3433 = vsel %vm829, %v3424, %v3432
      %3434 = vrot.lane.b32.xlu0 %v3416, 32
      %v3435 = vpop.permute.xlu0 %3434
      %3436 = vrot.lane.b32.xlu0 %v3419, 32
      %v3437 = vpop.permute.xlu0 %3436
      %3438 = vrot.lane.b32.xlu0 %v3422, 32
      %v3439 = vpop.permute.xlu0 %3438
      %3440 = vrot.lane.b32.xlu0 %v3425, 32
      %v3441 = vpop.permute.xlu0 %3440
      %3442 = vrot.lane.b32.xlu0 %v3427, 32
      %v3443 = vpop.permute.xlu0 %3442
      %3444 = vrot.lane.b32.xlu0 %v3429, 32
      %v3445 = vpop.permute.xlu0 %3444
      %3446 = vrot.lane.b32.xlu0 %v3431, 32
      %v3447 = vpop.permute.xlu0 %3446
      %3448 = vrot.lane.b32.xlu0 %v3433, 32
      %v3449 = vpop.permute.xlu0 %3448
      %v3450 = vsel %vm402, %v3435, %v3437
      %v3451 = vsel %vm402, %v3437, %v3439
      %v3452 = vsel %vm402, %v3439, %v3441
      %v3453 = vsel %vm402, %v3443, %v3445
      %v3454 = vsel %vm402, %v3445, %v3447
      %v3455 = vsel %vm402, %v3447, %v3449
      %v3466 = vadd.f32 %v3357, %v3435
      %v3467 = vadd.f32 %v3358, %v3450
      %v3468 = vadd.f32 %v3359, %v3451
      %v3469 = vadd.f32 %v3360, %v3452
      %v3470 = vadd.f32 %v3361, %v3441
      %v3471 = vadd.f32 %v3362, %v3443
      %v3472 = vadd.f32 %v3363, %v3453
      %v3473 = vadd.f32 %v3364, %v3454
      %v3474 = vadd.f32 %v3365, %v3455
      %v3475 = vadd.f32 %v3366, %v3449
      %s3476 = scalar_lea.vmem %s3, 134
      %v3477 = vld [vmem:[%s3476] ss:$8 sm:$0xf]
      %v3479 = vlaneseq
      %v3480 = vshrl.u32 %v3479, 7
      %v3481 = vsub.s32 0, %v3480
      %v3482 = vrot.slane %v3477, %v3481
      %v3483 = vlaneseq
      %v3484 = vshrl.u32 %v3483, 7
      %v3485 = vsub.s32 1, %v3484
      %v3486 = vrot.slane %v3477, %v3485
      %v3487 = vlaneseq
      %v3488 = vshrl.u32 %v3487, 7
      %v3489 = vsub.s32 2, %v3488
      %v3490 = vrot.slane %v3477, %v3489
      %v3491 = vlaneseq
      %v3492 = vshrl.u32 %v3491, 7
      %v3493 = vsub.s32 3, %v3492
      %v3494 = vrot.slane %v3477, %v3493
      %v3499 = vmul.f32 %v362, %v3482
      %v3500 = vmul.f32 %v363, %v3486
      %v3501 = vmul.f32 %v364, %v3490
      %v3502 = vmul.f32 %v365, %v3494
      %v3503 = vmul.f32 %v367, %v3482
      %v3504 = vmul.f32 %v368, %v3486
      %v3505 = vmul.f32 %v369, %v3490
      %v3506 = vmul.f32 %v370, %v3494
      %v3507 = vmul.f32 %v372, %v3482
      %v3508 = vmul.f32 %v373, %v3486
      %v3509 = vmul.f32 %v374, %v3490
      %v3510 = vmul.f32 %v375, %v3494
      %v3523 = vrot.slane %v3499, 5
      %v3524 = vrot.slane %v3503, 5
      %v3525 = vsel %vm324, %v3523, %v3524
      %v3526 = vrot.slane %v3500, 5
      %v3527 = vrot.slane %v3504, 5
      %v3528 = vsel %vm324, %v3526, %v3527
      %v3529 = vrot.slane %v3501, 5
      %v3530 = vrot.slane %v3505, 5
      %v3531 = vsel %vm324, %v3529, %v3530
      %v3532 = vrot.slane %v3502, 5
      %v3533 = vrot.slane %v3506, 5
      %v3534 = vsel %vm324, %v3532, %v3533
      %v3535 = vrot.slane %v3507, 5
      %v3536 = vsel %vm324, %v3524, %v3535
      %v3537 = vrot.slane %v3508, 5
      %v3538 = vsel %vm324, %v3527, %v3537
      %v3539 = vrot.slane %v3509, 5
      %v3540 = vsel %vm324, %v3530, %v3539
      %v3541 = vrot.slane %v3510, 5
      %v3542 = vsel %vm324, %v3533, %v3541
      %3543 = vrot.lane.b32.xlu0 %v3525, 32
      %v3544 = vpop.permute.xlu0 %3543
      %3545 = vrot.lane.b32.xlu0 %v3528, 32
      %v3546 = vpop.permute.xlu0 %3545
      %3547 = vrot.lane.b32.xlu0 %v3531, 32
      %v3548 = vpop.permute.xlu0 %3547
      %3549 = vrot.lane.b32.xlu0 %v3534, 32
      %v3550 = vpop.permute.xlu0 %3549
      %3551 = vrot.lane.b32.xlu0 %v3536, 32
      %v3552 = vpop.permute.xlu0 %3551
      %3553 = vrot.lane.b32.xlu0 %v3538, 32
      %v3554 = vpop.permute.xlu0 %3553
      %3555 = vrot.lane.b32.xlu0 %v3540, 32
      %v3556 = vpop.permute.xlu0 %3555
      %3557 = vrot.lane.b32.xlu0 %v3542, 32
      %v3558 = vpop.permute.xlu0 %3557
      %v3559 = vsel %vm402, %v3544, %v3546
      %v3560 = vsel %vm402, %v3546, %v3548
      %v3561 = vsel %vm402, %v3548, %v3550
      %v3562 = vsel %vm402, %v3552, %v3554
      %v3563 = vsel %vm402, %v3554, %v3556
      %v3564 = vsel %vm402, %v3556, %v3558
      %v3575 = vadd.f32 %v3466, %v3544
      %v3576 = vadd.f32 %v3467, %v3559
      %v3577 = vadd.f32 %v3468, %v3560
      %v3578 = vadd.f32 %v3469, %v3561
      %v3579 = vadd.f32 %v3470, %v3550
      %v3580 = vadd.f32 %v3471, %v3552
      %v3581 = vadd.f32 %v3472, %v3562
      %v3582 = vadd.f32 %v3473, %v3563
      %v3583 = vadd.f32 %v3474, %v3564
      %v3584 = vadd.f32 %v3475, %v3558
      %s3585 = scalar_lea.vmem %s3, 165
      %v3586 = vld [vmem:[%s3585] ss:$8 sm:$0xf]
      %v3588 = vlaneseq
      %v3589 = vshrl.u32 %v3588, 7
      %v3590 = vsub.s32 0, %v3589
      %v3591 = vrot.slane %v3586, %v3590
      %v3592 = vlaneseq
      %v3593 = vshrl.u32 %v3592, 7
      %v3594 = vsub.s32 1, %v3593
      %v3595 = vrot.slane %v3586, %v3594
      %v3596 = vlaneseq
      %v3597 = vshrl.u32 %v3596, 7
      %v3598 = vsub.s32 2, %v3597
      %v3599 = vrot.slane %v3586, %v3598
      %v3600 = vlaneseq
      %v3601 = vshrl.u32 %v3600, 7
      %v3602 = vsub.s32 3, %v3601
      %v3603 = vrot.slane %v3586, %v3602
      %v3608 = vmul.f32 %v362, %v3591
      %v3609 = vmul.f32 %v363, %v3595
      %v3610 = vmul.f32 %v364, %v3599
      %v3611 = vmul.f32 %v365, %v3603
      %v3612 = vmul.f32 %v367, %v3591
      %v3613 = vmul.f32 %v368, %v3595
      %v3614 = vmul.f32 %v369, %v3599
      %v3615 = vmul.f32 %v370, %v3603
      %v3616 = vmul.f32 %v372, %v3591
      %v3617 = vmul.f32 %v373, %v3595
      %v3618 = vmul.f32 %v374, %v3599
      %v3619 = vmul.f32 %v375, %v3603
      %v3632 = vrot.slane %v3608, 6
      %v3633 = vrot.slane %v3612, 6
      %v3634 = vsel %vm1050, %v3632, %v3633
      %v3635 = vrot.slane %v3609, 6
      %v3636 = vrot.slane %v3613, 6
      %v3637 = vsel %vm1050, %v3635, %v3636
      %v3638 = vrot.slane %v3610, 6
      %v3639 = vrot.slane %v3614, 6
      %v3640 = vsel %vm1050, %v3638, %v3639
      %v3641 = vrot.slane %v3611, 6
      %v3642 = vrot.slane %v3615, 6
      %v3643 = vsel %vm1050, %v3641, %v3642
      %v3644 = vrot.slane %v3616, 6
      %v3645 = vsel %vm1050, %v3633, %v3644
      %v3646 = vrot.slane %v3617, 6
      %v3647 = vsel %vm1050, %v3636, %v3646
      %v3648 = vrot.slane %v3618, 6
      %v3649 = vsel %vm1050, %v3639, %v3648
      %v3650 = vrot.slane %v3619, 6
      %v3651 = vsel %vm1050, %v3642, %v3650
      %3652 = vrot.lane.b32.xlu0 %v3634, 32
      %v3653 = vpop.permute.xlu0 %3652
      %3654 = vrot.lane.b32.xlu0 %v3637, 32
      %v3655 = vpop.permute.xlu0 %3654
      %3656 = vrot.lane.b32.xlu0 %v3640, 32
      %v3657 = vpop.permute.xlu0 %3656
      %3658 = vrot.lane.b32.xlu0 %v3643, 32
      %v3659 = vpop.permute.xlu0 %3658
      %3660 = vrot.lane.b32.xlu0 %v3645, 32
      %v3661 = vpop.permute.xlu0 %3660
      %3662 = vrot.lane.b32.xlu0 %v3647, 32
      %v3663 = vpop.permute.xlu0 %3662
      %3664 = vrot.lane.b32.xlu0 %v3649, 32
      %v3665 = vpop.permute.xlu0 %3664
      %3666 = vrot.lane.b32.xlu0 %v3651, 32
      %v3667 = vpop.permute.xlu0 %3666
      %v3668 = vsel %vm402, %v3653, %v3655
      %v3669 = vsel %vm402, %v3655, %v3657
      %v3670 = vsel %vm402, %v3657, %v3659
      %v3671 = vsel %vm402, %v3661, %v3663
      %v3672 = vsel %vm402, %v3663, %v3665
      %v3673 = vsel %vm402, %v3665, %v3667
      %v3684 = vadd.f32 %v3575, %v3653
      %v3685 = vadd.f32 %v3576, %v3668
      %v3686 = vadd.f32 %v3577, %v3669
      %v3687 = vadd.f32 %v3578, %v3670
      %v3688 = vadd.f32 %v3579, %v3659
      %v3689 = vadd.f32 %v3580, %v3661
      %v3690 = vadd.f32 %v3581, %v3671
      %v3691 = vadd.f32 %v3582, %v3672
      %v3692 = vadd.f32 %v3583, %v3673
      %v3693 = vadd.f32 %v3584, %v3667
      %v3694 = vld [vmem:[#allocation2 + $0x28] sm:$0xff]
      %v3695 = vld [vmem:[#allocation2 + $0x58] sm:$0xff]
      %v3696 = vld [vmem:[#allocation2 + $0x88] sm:$0x3f]
      %s3697 = scalar_lea.vmem %s3, 4
      %v3698 = vld [vmem:[%s3697] ss:$8 sm:$0xf]
      %v3700 = vlaneseq
      %v3701 = vshrl.u32 %v3700, 7
      %v3702 = vsub.s32 0, %v3701
      %v3703 = vrot.slane %v3698, %v3702
      %v3704 = vlaneseq
      %v3705 = vshrl.u32 %v3704, 7
      %v3706 = vsub.s32 1, %v3705
      %v3707 = vrot.slane %v3698, %v3706
      %v3708 = vlaneseq
      %v3709 = vshrl.u32 %v3708, 7
      %v3710 = vsub.s32 2, %v3709
      %v3711 = vrot.slane %v3698, %v3710
      %v3712 = vlaneseq
      %v3713 = vshrl.u32 %v3712, 7
      %v3714 = vsub.s32 3, %v3713
      %v3715 = vrot.slane %v3698, %v3714
      %3716 = vrot.lane.b32.xlu0 %v3703, 32
      %v3717 = vpop.permute.xlu0 %3716
      %3718 = vrot.lane.b32.xlu0 %v3707, 32
      %v3719 = vpop.permute.xlu0 %3718
      %3720 = vrot.lane.b32.xlu0 %v3711, 32
      %v3721 = vpop.permute.xlu0 %3720
      %3722 = vrot.lane.b32.xlu0 %v3715, 32
      %v3723 = vpop.permute.xlu0 %3722
      %v3724 = vsel %vm402, %v3717, %v3719
      %v3725 = vsel %vm402, %v3719, %v3721
      %v3726 = vsel %vm402, %v3721, %v3723
      %v3732 = vmul.f32 %v362, %v3717
      %v3733 = vmul.f32 %v363, %v3724
      %v3734 = vmul.f32 %v364, %v3725
      %v3735 = vmul.f32 %v365, %v3726
      %v3736 = vmul.f32 %v3694, %v3723
      %v3737 = vmul.f32 %v367, %v3717
      %v3738 = vmul.f32 %v368, %v3724
      %v3739 = vmul.f32 %v369, %v3725
      %v3740 = vmul.f32 %v370, %v3726
      %v3741 = vmul.f32 %v3695, %v3723
      %v3742 = vadd.f32 %v3684, %v3732
      %v3743 = vadd.f32 %v3685, %v3733
      %v3744 = vadd.f32 %v3686, %v3734
      %v3745 = vadd.f32 %v3687, %v3735
      %v3746 = vadd.f32 %v3688, %v3736
      %v3747 = vadd.f32 %v3689, %v3737
      %v3748 = vadd.f32 %v3690, %v3738
      %v3749 = vadd.f32 %v3691, %v3739
      %v3750 = vadd.f32 %v3692, %v3740
      %v3751 = vadd.f32 %v3693, %v3741
      %s3752 = scalar_lea.vmem %s3, 35
      %v3753 = vld [vmem:[%s3752] ss:$8 sm:$0xf]
      %v3755 = vlaneseq
      %v3756 = vshrl.u32 %v3755, 7
      %v3757 = vsub.s32 0, %v3756
      %v3758 = vrot.slane %v3753, %v3757
      %v3759 = vlaneseq
      %v3760 = vshrl.u32 %v3759, 7
      %v3761 = vsub.s32 1, %v3760
      %v3762 = vrot.slane %v3753, %v3761
      %v3763 = vlaneseq
      %v3764 = vshrl.u32 %v3763, 7
      %v3765 = vsub.s32 2, %v3764
      %v3766 = vrot.slane %v3753, %v3765
      %v3767 = vlaneseq
      %v3768 = vshrl.u32 %v3767, 7
      %v3769 = vsub.s32 3, %v3768
      %v3770 = vrot.slane %v3753, %v3769
      %3771 = vrot.lane.b32.xlu0 %v3758, 32
      %v3772 = vpop.permute.xlu0 %3771
      %3773 = vrot.lane.b32.xlu0 %v3762, 32
      %v3774 = vpop.permute.xlu0 %3773
      %3775 = vrot.lane.b32.xlu0 %v3766, 32
      %v3776 = vpop.permute.xlu0 %3775
      %3777 = vrot.lane.b32.xlu0 %v3770, 32
      %v3778 = vpop.permute.xlu0 %3777
      %v3779 = vsel %vm402, %v3772, %v3774
      %v3780 = vsel %vm402, %v3774, %v3776
      %v3781 = vsel %vm402, %v3776, %v3778
      %v3787 = vmul.f32 %v362, %v3772
      %v3788 = vmul.f32 %v363, %v3779
      %v3789 = vmul.f32 %v364, %v3780
      %v3790 = vmul.f32 %v365, %v3781
      %v3791 = vmul.f32 %v3694, %v3778
      %v3792 = vmul.f32 %v367, %v3772
      %v3793 = vmul.f32 %v368, %v3779
      %v3794 = vmul.f32 %v369, %v3780
      %v3795 = vmul.f32 %v370, %v3781
      %v3796 = vmul.f32 %v3695, %v3778
      %v3797 = vmul.f32 %v372, %v3772
      %v3798 = vmul.f32 %v373, %v3779
      %v3799 = vmul.f32 %v374, %v3780
      %v3800 = vmul.f32 %v375, %v3781
      %v3801 = vmul.f32 %v3696, %v3778
      %v3817 = vrot.slane %v3787, 1
      %v3818 = vrot.slane %v3792, 1
      %v3819 = vsel %vm496, %v3817, %v3818
      %v3820 = vrot.slane %v3788, 1
      %v3821 = vrot.slane %v3793, 1
      %v3822 = vsel %vm496, %v3820, %v3821
      %v3823 = vrot.slane %v3789, 1
      %v3824 = vrot.slane %v3794, 1
      %v3825 = vsel %vm496, %v3823, %v3824
      %v3826 = vrot.slane %v3790, 1
      %v3827 = vrot.slane %v3795, 1
      %v3828 = vsel %vm496, %v3826, %v3827
      %v3829 = vrot.slane %v3791, 1
      %v3830 = vrot.slane %v3796, 1
      %v3831 = vsel %vm496, %v3829, %v3830
      %v3832 = vrot.slane %v3797, 1
      %v3833 = vsel %vm496, %v3818, %v3832
      %v3834 = vrot.slane %v3798, 1
      %v3835 = vsel %vm496, %v3821, %v3834
      %v3836 = vrot.slane %v3799, 1
      %v3837 = vsel %vm496, %v3824, %v3836
      %v3838 = vrot.slane %v3800, 1
      %v3839 = vsel %vm496, %v3827, %v3838
      %v3840 = vrot.slane %v3801, 1
      %v3841 = vsel %vm496, %v3830, %v3840
      %v3852 = vadd.f32 %v3742, %v3819
      %v3853 = vadd.f32 %v3743, %v3822
      %v3854 = vadd.f32 %v3744, %v3825
      %v3855 = vadd.f32 %v3745, %v3828
      %v3856 = vadd.f32 %v3746, %v3831
      %v3857 = vadd.f32 %v3747, %v3833
      %v3858 = vadd.f32 %v3748, %v3835
      %v3859 = vadd.f32 %v3749, %v3837
      %v3860 = vadd.f32 %v3750, %v3839
      %v3861 = vadd.f32 %v3751, %v3841
      %s3862 = scalar_lea.vmem %s3, 66
      %v3863 = vld [vmem:[%s3862] ss:$8 sm:$0xf]
      %v3865 = vlaneseq
      %v3866 = vshrl.u32 %v3865, 7
      %v3867 = vsub.s32 0, %v3866
      %v3868 = vrot.slane %v3863, %v3867
      %v3869 = vlaneseq
      %v3870 = vshrl.u32 %v3869, 7
      %v3871 = vsub.s32 1, %v3870
      %v3872 = vrot.slane %v3863, %v3871
      %v3873 = vlaneseq
      %v3874 = vshrl.u32 %v3873, 7
      %v3875 = vsub.s32 2, %v3874
      %v3876 = vrot.slane %v3863, %v3875
      %v3877 = vlaneseq
      %v3878 = vshrl.u32 %v3877, 7
      %v3879 = vsub.s32 3, %v3878
      %v3880 = vrot.slane %v3863, %v3879
      %3881 = vrot.lane.b32.xlu0 %v3868, 32
      %v3882 = vpop.permute.xlu0 %3881
      %3883 = vrot.lane.b32.xlu0 %v3872, 32
      %v3884 = vpop.permute.xlu0 %3883
      %3885 = vrot.lane.b32.xlu0 %v3876, 32
      %v3886 = vpop.permute.xlu0 %3885
      %3887 = vrot.lane.b32.xlu0 %v3880, 32
      %v3888 = vpop.permute.xlu0 %3887
      %v3889 = vsel %vm402, %v3882, %v3884
      %v3890 = vsel %vm402, %v3884, %v3886
      %v3891 = vsel %vm402, %v3886, %v3888
      %v3897 = vmul.f32 %v362, %v3882
      %v3898 = vmul.f32 %v363, %v3889
      %v3899 = vmul.f32 %v364, %v3890
      %v3900 = vmul.f32 %v365, %v3891
      %v3901 = vmul.f32 %v3694, %v3888
      %v3902 = vmul.f32 %v367, %v3882
      %v3903 = vmul.f32 %v368, %v3889
      %v3904 = vmul.f32 %v369, %v3890
      %v3905 = vmul.f32 %v370, %v3891
      %v3906 = vmul.f32 %v3695, %v3888
      %v3907 = vmul.f32 %v372, %v3882
      %v3908 = vmul.f32 %v373, %v3889
      %v3909 = vmul.f32 %v374, %v3890
      %v3910 = vmul.f32 %v375, %v3891
      %v3911 = vmul.f32 %v3696, %v3888
      %v3927 = vrot.slane %v3897, 2
      %v3928 = vrot.slane %v3902, 2
      %v3929 = vsel %vm607, %v3927, %v3928
      %v3930 = vrot.slane %v3898, 2
      %v3931 = vrot.slane %v3903, 2
      %v3932 = vsel %vm607, %v3930, %v3931
      %v3933 = vrot.slane %v3899, 2
      %v3934 = vrot.slane %v3904, 2
      %v3935 = vsel %vm607, %v3933, %v3934
      %v3936 = vrot.slane %v3900, 2
      %v3937 = vrot.slane %v3905, 2
      %v3938 = vsel %vm607, %v3936, %v3937
      %v3939 = vrot.slane %v3901, 2
      %v3940 = vrot.slane %v3906, 2
      %v3941 = vsel %vm607, %v3939, %v3940
      %v3942 = vrot.slane %v3907, 2
      %v3943 = vsel %vm607, %v3928, %v3942
      %v3944 = vrot.slane %v3908, 2
      %v3945 = vsel %vm607, %v3931, %v3944
      %v3946 = vrot.slane %v3909, 2
      %v3947 = vsel %vm607, %v3934, %v3946
      %v3948 = vrot.slane %v3910, 2
      %v3949 = vsel %vm607, %v3937, %v3948
      %v3950 = vrot.slane %v3911, 2
      %v3951 = vsel %vm607, %v3940, %v3950
      %v3962 = vadd.f32 %v3852, %v3929
      %v3963 = vadd.f32 %v3853, %v3932
      %v3964 = vadd.f32 %v3854, %v3935
      %v3965 = vadd.f32 %v3855, %v3938
      %v3966 = vadd.f32 %v3856, %v3941
      %v3967 = vadd.f32 %v3857, %v3943
      %v3968 = vadd.f32 %v3858, %v3945
      %v3969 = vadd.f32 %v3859, %v3947
      %v3970 = vadd.f32 %v3860, %v3949
      %v3971 = vadd.f32 %v3861, %v3951
      %s3972 = scalar_lea.vmem %s3, 97
      %v3973 = vld [vmem:[%s3972] ss:$8 sm:$0xf]
      %v3975 = vlaneseq
      %v3976 = vshrl.u32 %v3975, 7
      %v3977 = vsub.s32 0, %v3976
      %v3978 = vrot.slane %v3973, %v3977
      %v3979 = vlaneseq
      %v3980 = vshrl.u32 %v3979, 7
      %v3981 = vsub.s32 1, %v3980
      %v3982 = vrot.slane %v3973, %v3981
      %v3983 = vlaneseq
      %v3984 = vshrl.u32 %v3983, 7
      %v3985 = vsub.s32 2, %v3984
      %v3986 = vrot.slane %v3973, %v3985
      %v3987 = vlaneseq
      %v3988 = vshrl.u32 %v3987, 7
      %v3989 = vsub.s32 3, %v3988
      %v3990 = vrot.slane %v3973, %v3989
      %3991 = vrot.lane.b32.xlu0 %v3978, 32
      %v3992 = vpop.permute.xlu0 %3991
      %3993 = vrot.lane.b32.xlu0 %v3982, 32
      %v3994 = vpop.permute.xlu0 %3993
      %3995 = vrot.lane.b32.xlu0 %v3986, 32
      %v3996 = vpop.permute.xlu0 %3995
      %3997 = vrot.lane.b32.xlu0 %v3990, 32
      %v3998 = vpop.permute.xlu0 %3997
      %v3999 = vsel %vm402, %v3992, %v3994
      %v4000 = vsel %vm402, %v3994, %v3996
      %v4001 = vsel %vm402, %v3996, %v3998
      %v4007 = vmul.f32 %v362, %v3992
      %v4008 = vmul.f32 %v363, %v3999
      %v4009 = vmul.f32 %v364, %v4000
      %v4010 = vmul.f32 %v365, %v4001
      %v4011 = vmul.f32 %v3694, %v3998
      %v4012 = vmul.f32 %v367, %v3992
      %v4013 = vmul.f32 %v368, %v3999
      %v4014 = vmul.f32 %v369, %v4000
      %v4015 = vmul.f32 %v370, %v4001
      %v4016 = vmul.f32 %v3695, %v3998
      %v4017 = vmul.f32 %v372, %v3992
      %v4018 = vmul.f32 %v373, %v3999
      %v4019 = vmul.f32 %v374, %v4000
      %v4020 = vmul.f32 %v375, %v4001
      %v4021 = vmul.f32 %v3696, %v3998
      %v4037 = vrot.slane %v4007, 3
      %v4038 = vrot.slane %v4012, 3
      %v4039 = vsel %vm718, %v4037, %v4038
      %v4040 = vrot.slane %v4008, 3
      %v4041 = vrot.slane %v4013, 3
      %v4042 = vsel %vm718, %v4040, %v4041
      %v4043 = vrot.slane %v4009, 3
      %v4044 = vrot.slane %v4014, 3
      %v4045 = vsel %vm718, %v4043, %v4044
      %v4046 = vrot.slane %v4010, 3
      %v4047 = vrot.slane %v4015, 3
      %v4048 = vsel %vm718, %v4046, %v4047
      %v4049 = vrot.slane %v4011, 3
      %v4050 = vrot.slane %v4016, 3
      %v4051 = vsel %vm718, %v4049, %v4050
      %v4052 = vrot.slane %v4017, 3
      %v4053 = vsel %vm718, %v4038, %v4052
      %v4054 = vrot.slane %v4018, 3
      %v4055 = vsel %vm718, %v4041, %v4054
      %v4056 = vrot.slane %v4019, 3
      %v4057 = vsel %vm718, %v4044, %v4056
      %v4058 = vrot.slane %v4020, 3
      %v4059 = vsel %vm718, %v4047, %v4058
      %v4060 = vrot.slane %v4021, 3
      %v4061 = vsel %vm718, %v4050, %v4060
      %v4072 = vadd.f32 %v3962, %v4039
      %v4073 = vadd.f32 %v3963, %v4042
      %v4074 = vadd.f32 %v3964, %v4045
      %v4075 = vadd.f32 %v3965, %v4048
      %v4076 = vadd.f32 %v3966, %v4051
      %v4077 = vadd.f32 %v3967, %v4053
      %v4078 = vadd.f32 %v3968, %v4055
      %v4079 = vadd.f32 %v3969, %v4057
      %v4080 = vadd.f32 %v3970, %v4059
      %v4081 = vadd.f32 %v3971, %v4061
      %s4082 = scalar_lea.vmem %s3, 128
      %v4083 = vld [vmem:[%s4082] ss:$8 sm:$0xf]
      %v4085 = vlaneseq
      %v4086 = vshrl.u32 %v4085, 7
      %v4087 = vsub.s32 0, %v4086
      %v4088 = vrot.slane %v4083, %v4087
      %v4089 = vlaneseq
      %v4090 = vshrl.u32 %v4089, 7
      %v4091 = vsub.s32 1, %v4090
      %v4092 = vrot.slane %v4083, %v4091
      %v4093 = vlaneseq
      %v4094 = vshrl.u32 %v4093, 7
      %v4095 = vsub.s32 2, %v4094
      %v4096 = vrot.slane %v4083, %v4095
      %v4097 = vlaneseq
      %v4098 = vshrl.u32 %v4097, 7
      %v4099 = vsub.s32 3, %v4098
      %v4100 = vrot.slane %v4083, %v4099
      %4101 = vrot.lane.b32.xlu0 %v4088, 32
      %v4102 = vpop.permute.xlu0 %4101
      %4103 = vrot.lane.b32.xlu0 %v4092, 32
      %v4104 = vpop.permute.xlu0 %4103
      %4105 = vrot.lane.b32.xlu0 %v4096, 32
      %v4106 = vpop.permute.xlu0 %4105
      %4107 = vrot.lane.b32.xlu0 %v4100, 32
      %v4108 = vpop.permute.xlu0 %4107
      %v4109 = vsel %vm402, %v4102, %v4104
      %v4110 = vsel %vm402, %v4104, %v4106
      %v4111 = vsel %vm402, %v4106, %v4108
      %v4117 = vmul.f32 %v362, %v4102
      %v4118 = vmul.f32 %v363, %v4109
      %v4119 = vmul.f32 %v364, %v4110
      %v4120 = vmul.f32 %v365, %v4111
      %v4121 = vmul.f32 %v3694, %v4108
      %v4122 = vmul.f32 %v367, %v4102
      %v4123 = vmul.f32 %v368, %v4109
      %v4124 = vmul.f32 %v369, %v4110
      %v4125 = vmul.f32 %v370, %v4111
      %v4126 = vmul.f32 %v3695, %v4108
      %v4127 = vmul.f32 %v372, %v4102
      %v4128 = vmul.f32 %v373, %v4109
      %v4129 = vmul.f32 %v374, %v4110
      %v4130 = vmul.f32 %v375, %v4111
      %v4131 = vmul.f32 %v3696, %v4108
      %v4147 = vrot.slane %v4117, 4
      %v4148 = vrot.slane %v4122, 4
      %v4149 = vsel %vm829, %v4147, %v4148
      %v4150 = vrot.slane %v4118, 4
      %v4151 = vrot.slane %v4123, 4
      %v4152 = vsel %vm829, %v4150, %v4151
      %v4153 = vrot.slane %v4119, 4
      %v4154 = vrot.slane %v4124, 4
      %v4155 = vsel %vm829, %v4153, %v4154
      %v4156 = vrot.slane %v4120, 4
      %v4157 = vrot.slane %v4125, 4
      %v4158 = vsel %vm829, %v4156, %v4157
      %v4159 = vrot.slane %v4121, 4
      %v4160 = vrot.slane %v4126, 4
      %v4161 = vsel %vm829, %v4159, %v4160
      %v4162 = vrot.slane %v4127, 4
      %v4163 = vsel %vm829, %v4148, %v4162
      %v4164 = vrot.slane %v4128, 4
      %v4165 = vsel %vm829, %v4151, %v4164
      %v4166 = vrot.slane %v4129, 4
      %v4167 = vsel %vm829, %v4154, %v4166
      %v4168 = vrot.slane %v4130, 4
      %v4169 = vsel %vm829, %v4157, %v4168
      %v4170 = vrot.slane %v4131, 4
      %v4171 = vsel %vm829, %v4160, %v4170
      %v4182 = vadd.f32 %v4072, %v4149
      %v4183 = vadd.f32 %v4073, %v4152
      %v4184 = vadd.f32 %v4074, %v4155
      %v4185 = vadd.f32 %v4075, %v4158
      %v4186 = vadd.f32 %v4076, %v4161
      %v4187 = vadd.f32 %v4077, %v4163
      %v4188 = vadd.f32 %v4078, %v4165
      %v4189 = vadd.f32 %v4079, %v4167
      %v4190 = vadd.f32 %v4080, %v4169
      %v4191 = vadd.f32 %v4081, %v4171
      %s4192 = scalar_lea.vmem %s3, 135
      %v4193 = vld [vmem:[%s4192] ss:$8 sm:$0xf]
      %v4195 = vlaneseq
      %v4196 = vshrl.u32 %v4195, 7
      %v4197 = vsub.s32 0, %v4196
      %v4198 = vrot.slane %v4193, %v4197
      %v4199 = vlaneseq
      %v4200 = vshrl.u32 %v4199, 7
      %v4201 = vsub.s32 1, %v4200
      %v4202 = vrot.slane %v4193, %v4201
      %v4203 = vlaneseq
      %v4204 = vshrl.u32 %v4203, 7
      %v4205 = vsub.s32 2, %v4204
      %v4206 = vrot.slane %v4193, %v4205
      %v4207 = vlaneseq
      %v4208 = vshrl.u32 %v4207, 7
      %v4209 = vsub.s32 3, %v4208
      %v4210 = vrot.slane %v4193, %v4209
      %4211 = vrot.lane.b32.xlu0 %v4198, 32
      %v4212 = vpop.permute.xlu0 %4211
      %4213 = vrot.lane.b32.xlu0 %v4202, 32
      %v4214 = vpop.permute.xlu0 %4213
      %4215 = vrot.lane.b32.xlu0 %v4206, 32
      %v4216 = vpop.permute.xlu0 %4215
      %4217 = vrot.lane.b32.xlu0 %v4210, 32
      %v4218 = vpop.permute.xlu0 %4217
      %v4219 = vsel %vm402, %v4212, %v4214
      %v4220 = vsel %vm402, %v4214, %v4216
      %v4221 = vsel %vm402, %v4216, %v4218
      %v4227 = vmul.f32 %v362, %v4212
      %v4228 = vmul.f32 %v363, %v4219
      %v4229 = vmul.f32 %v364, %v4220
      %v4230 = vmul.f32 %v365, %v4221
      %v4231 = vmul.f32 %v3694, %v4218
      %v4232 = vmul.f32 %v367, %v4212
      %v4233 = vmul.f32 %v368, %v4219
      %v4234 = vmul.f32 %v369, %v4220
      %v4235 = vmul.f32 %v370, %v4221
      %v4236 = vmul.f32 %v3695, %v4218
      %v4237 = vmul.f32 %v372, %v4212
      %v4238 = vmul.f32 %v373, %v4219
      %v4239 = vmul.f32 %v374, %v4220
      %v4240 = vmul.f32 %v375, %v4221
      %v4241 = vmul.f32 %v3696, %v4218
      %v4257 = vrot.slane %v4227, 5
      %v4258 = vrot.slane %v4232, 5
      %v4259 = vsel %vm324, %v4257, %v4258
      %v4260 = vrot.slane %v4228, 5
      %v4261 = vrot.slane %v4233, 5
      %v4262 = vsel %vm324, %v4260, %v4261
      %v4263 = vrot.slane %v4229, 5
      %v4264 = vrot.slane %v4234, 5
      %v4265 = vsel %vm324, %v4263, %v4264
      %v4266 = vrot.slane %v4230, 5
      %v4267 = vrot.slane %v4235, 5
      %v4268 = vsel %vm324, %v4266, %v4267
      %v4269 = vrot.slane %v4231, 5
      %v4270 = vrot.slane %v4236, 5
      %v4271 = vsel %vm324, %v4269, %v4270
      %v4272 = vrot.slane %v4237, 5
      %v4273 = vsel %vm324, %v4258, %v4272
      %v4274 = vrot.slane %v4238, 5
      %v4275 = vsel %vm324, %v4261, %v4274
      %v4276 = vrot.slane %v4239, 5
      %v4277 = vsel %vm324, %v4264, %v4276
      %v4278 = vrot.slane %v4240, 5
      %v4279 = vsel %vm324, %v4267, %v4278
      %v4280 = vrot.slane %v4241, 5
      %v4281 = vsel %vm324, %v4270, %v4280
      %v4292 = vadd.f32 %v4182, %v4259
      %v4293 = vadd.f32 %v4183, %v4262
      %v4294 = vadd.f32 %v4184, %v4265
      %v4295 = vadd.f32 %v4185, %v4268
      %v4296 = vadd.f32 %v4186, %v4271
      %v4297 = vadd.f32 %v4187, %v4273
      %v4298 = vadd.f32 %v4188, %v4275
      %v4299 = vadd.f32 %v4189, %v4277
      %v4300 = vadd.f32 %v4190, %v4279
      %v4301 = vadd.f32 %v4191, %v4281
      %s4302 = scalar_lea.vmem %s3, 166
      %v4303 = vld [vmem:[%s4302] ss:$8 sm:$0xf]
      %v4305 = vlaneseq
      %v4306 = vshrl.u32 %v4305, 7
      %v4307 = vsub.s32 0, %v4306
      %v4308 = vrot.slane %v4303, %v4307
      %v4309 = vlaneseq
      %v4310 = vshrl.u32 %v4309, 7
      %v4311 = vsub.s32 1, %v4310
      %v4312 = vrot.slane %v4303, %v4311
      %v4313 = vlaneseq
      %v4314 = vshrl.u32 %v4313, 7
      %v4315 = vsub.s32 2, %v4314
      %v4316 = vrot.slane %v4303, %v4315
      %v4317 = vlaneseq
      %v4318 = vshrl.u32 %v4317, 7
      %v4319 = vsub.s32 3, %v4318
      %v4320 = vrot.slane %v4303, %v4319
      %4321 = vrot.lane.b32.xlu0 %v4308, 32
      %v4322 = vpop.permute.xlu0 %4321
      %4323 = vrot.lane.b32.xlu0 %v4312, 32
      %v4324 = vpop.permute.xlu0 %4323
      %4325 = vrot.lane.b32.xlu0 %v4316, 32
      %v4326 = vpop.permute.xlu0 %4325
      %4327 = vrot.lane.b32.xlu0 %v4320, 32
      %v4328 = vpop.permute.xlu0 %4327
      %v4329 = vsel %vm402, %v4322, %v4324
      %v4330 = vsel %vm402, %v4324, %v4326
      %v4331 = vsel %vm402, %v4326, %v4328
      %v4337 = vmul.f32 %v362, %v4322
      %v4338 = vmul.f32 %v363, %v4329
      %v4339 = vmul.f32 %v364, %v4330
      %v4340 = vmul.f32 %v365, %v4331
      %v4341 = vmul.f32 %v3694, %v4328
      %v4342 = vmul.f32 %v367, %v4322
      %v4343 = vmul.f32 %v368, %v4329
      %v4344 = vmul.f32 %v369, %v4330
      %v4345 = vmul.f32 %v370, %v4331
      %v4346 = vmul.f32 %v3695, %v4328
      %v4347 = vmul.f32 %v372, %v4322
      %v4348 = vmul.f32 %v373, %v4329
      %v4349 = vmul.f32 %v374, %v4330
      %v4350 = vmul.f32 %v375, %v4331
      %v4351 = vmul.f32 %v3696, %v4328
      %v4367 = vrot.slane %v4337, 6
      %v4368 = vrot.slane %v4342, 6
      %v4369 = vsel %vm1050, %v4367, %v4368
      %v4370 = vrot.slane %v4338, 6
      %v4371 = vrot.slane %v4343, 6
      %v4372 = vsel %vm1050, %v4370, %v4371
      %v4373 = vrot.slane %v4339, 6
      %v4374 = vrot.slane %v4344, 6
      %v4375 = vsel %vm1050, %v4373, %v4374
      %v4376 = vrot.slane %v4340, 6
      %v4377 = vrot.slane %v4345, 6
      %v4378 = vsel %vm1050, %v4376, %v4377
      %v4379 = vrot.slane %v4341, 6
      %v4380 = vrot.slane %v4346, 6
      %v4381 = vsel %vm1050, %v4379, %v4380
      %v4382 = vrot.slane %v4347, 6
      %v4383 = vsel %vm1050, %v4368, %v4382
      %v4384 = vrot.slane %v4348, 6
      %v4385 = vsel %vm1050, %v4371, %v4384
      %v4386 = vrot.slane %v4349, 6
      %v4387 = vsel %vm1050, %v4374, %v4386
      %v4388 = vrot.slane %v4350, 6
      %v4389 = vsel %vm1050, %v4377, %v4388
      %v4390 = vrot.slane %v4351, 6
      %v4391 = vsel %vm1050, %v4380, %v4390
      %v4402 = vadd.f32 %v4292, %v4369
      %v4403 = vadd.f32 %v4293, %v4372
      %v4404 = vadd.f32 %v4294, %v4375
      %v4405 = vadd.f32 %v4295, %v4378
      %v4406 = vadd.f32 %v4296, %v4381
      %v4407 = vadd.f32 %v4297, %v4383
      %v4408 = vadd.f32 %v4298, %v4385
      %v4409 = vadd.f32 %v4299, %v4387
      %v4410 = vadd.f32 %v4300, %v4389
      %v4411 = vadd.f32 %v4301, %v4391
      %s4412 = scalar_lea.vmem %s3, 5
      %v4413 = vld [vmem:[%s4412] ss:$8 sm:$0xf]
      %v4415 = vlaneseq
      %v4416 = vshrl.u32 %v4415, 7
      %v4417 = vsub.s32 0, %v4416
      %v4418 = vrot.slane %v4413, %v4417
      %v4419 = vlaneseq
      %v4420 = vshrl.u32 %v4419, 7
      %v4421 = vsub.s32 1, %v4420
      %v4422 = vrot.slane %v4413, %v4421
      %v4423 = vlaneseq
      %v4424 = vshrl.u32 %v4423, 7
      %v4425 = vsub.s32 2, %v4424
      %v4426 = vrot.slane %v4413, %v4425
      %v4427 = vlaneseq
      %v4428 = vshrl.u32 %v4427, 7
      %v4429 = vsub.s32 3, %v4428
      %v4430 = vrot.slane %v4413, %v4429
      %4431 = vrot.lane.b32.xlu0 %v4418, 64
      %v4432 = vpop.permute.xlu0 %4431
      %4433 = vrot.lane.b32.xlu0 %v4422, 64
      %v4434 = vpop.permute.xlu0 %4433
      %4435 = vrot.lane.b32.xlu0 %v4426, 64
      %v4436 = vpop.permute.xlu0 %4435
      %4437 = vrot.lane.b32.xlu0 %v4430, 64
      %v4438 = vpop.permute.xlu0 %4437
      %v4439 = vsel %vm1123, %v4432, %v4434
      %v4440 = vsel %vm1123, %v4434, %v4436
      %v4441 = vsel %vm1123, %v4436, %v4438
      %v4447 = vmul.f32 %v362, %v4432
      %v4448 = vmul.f32 %v363, %v4439
      %v4449 = vmul.f32 %v364, %v4440
      %v4450 = vmul.f32 %v365, %v4441
      %v4451 = vmul.f32 %v3694, %v4438
      %v4452 = vmul.f32 %v367, %v4432
      %v4453 = vmul.f32 %v368, %v4439
      %v4454 = vmul.f32 %v369, %v4440
      %v4455 = vmul.f32 %v370, %v4441
      %v4456 = vmul.f32 %v3695, %v4438
      %4467 = vrot.lane.b32.xlu0 %v4447, 96
      %v4468 = vpop.permute.xlu0 %4467
      %4469 = vrot.lane.b32.xlu0 %v4448, 96
      %v4470 = vpop.permute.xlu0 %4469
      %4471 = vrot.lane.b32.xlu0 %v4449, 96
      %v4472 = vpop.permute.xlu0 %4471
      %4473 = vrot.lane.b32.xlu0 %v4450, 96
      %v4474 = vpop.permute.xlu0 %4473
      %4475 = vrot.lane.b32.xlu0 %v4451, 96
      %v4476 = vpop.permute.xlu0 %4475
      %4477 = vrot.lane.b32.xlu0 %v4452, 96
      %v4478 = vpop.permute.xlu0 %4477
      %4479 = vrot.lane.b32.xlu0 %v4453, 96
      %v4480 = vpop.permute.xlu0 %4479
      %4481 = vrot.lane.b32.xlu0 %v4454, 96
      %v4482 = vpop.permute.xlu0 %4481
      %4483 = vrot.lane.b32.xlu0 %v4455, 96
      %v4484 = vpop.permute.xlu0 %4483
      %4485 = vrot.lane.b32.xlu0 %v4456, 96
      %v4486 = vpop.permute.xlu0 %4485
      %v4487 = vsel %vm301, %v4468, %v4470
      %v4488 = vsel %vm301, %v4470, %v4472
      %v4489 = vsel %vm301, %v4472, %v4474
      %v4490 = vsel %vm301, %v4474, %v4476
      %v4491 = vsel %vm301, %v4478, %v4480
      %v4492 = vsel %vm301, %v4480, %v4482
      %v4493 = vsel %vm301, %v4482, %v4484
      %v4494 = vsel %vm301, %v4484, %v4486
      %v4505 = vadd.f32 %v4402, %v4487
      %v4506 = vadd.f32 %v4403, %v4488
      %v4507 = vadd.f32 %v4404, %v4489
      %v4508 = vadd.f32 %v4405, %v4490
      %v4509 = vadd.f32 %v4406, %v4476
      %v4510 = vadd.f32 %v4407, %v4491
      %v4511 = vadd.f32 %v4408, %v4492
      %v4512 = vadd.f32 %v4409, %v4493
      %v4513 = vadd.f32 %v4410, %v4494
      %v4514 = vadd.f32 %v4411, %v4486
      %s4515 = scalar_lea.vmem %s3, 36
      %v4516 = vld [vmem:[%s4515] ss:$8 sm:$0xf]
      %v4518 = vlaneseq
      %v4519 = vshrl.u32 %v4518, 7
      %v4520 = vsub.s32 0, %v4519
      %v4521 = vrot.slane %v4516, %v4520
      %v4522 = vlaneseq
      %v4523 = vshrl.u32 %v4522, 7
      %v4524 = vsub.s32 1, %v4523
      %v4525 = vrot.slane %v4516, %v4524
      %v4526 = vlaneseq
      %v4527 = vshrl.u32 %v4526, 7
      %v4528 = vsub.s32 2, %v4527
      %v4529 = vrot.slane %v4516, %v4528
      %v4530 = vlaneseq
      %v4531 = vshrl.u32 %v4530, 7
      %v4532 = vsub.s32 3, %v4531
      %v4533 = vrot.slane %v4516, %v4532
      %4534 = vrot.lane.b32.xlu0 %v4521, 64
      %v4535 = vpop.permute.xlu0 %4534
      %4536 = vrot.lane.b32.xlu0 %v4525, 64
      %v4537 = vpop.permute.xlu0 %4536
      %4538 = vrot.lane.b32.xlu0 %v4529, 64
      %v4539 = vpop.permute.xlu0 %4538
      %4540 = vrot.lane.b32.xlu0 %v4533, 64
      %v4541 = vpop.permute.xlu0 %4540
      %v4542 = vsel %vm1123, %v4535, %v4537
      %v4543 = vsel %vm1123, %v4537, %v4539
      %v4544 = vsel %vm1123, %v4539, %v4541
      %v4550 = vmul.f32 %v362, %v4535
      %v4551 = vmul.f32 %v363, %v4542
      %v4552 = vmul.f32 %v364, %v4543
      %v4553 = vmul.f32 %v365, %v4544
      %v4554 = vmul.f32 %v3694, %v4541
      %v4555 = vmul.f32 %v367, %v4535
      %v4556 = vmul.f32 %v368, %v4542
      %v4557 = vmul.f32 %v369, %v4543
      %v4558 = vmul.f32 %v370, %v4544
      %v4559 = vmul.f32 %v3695, %v4541
      %v4560 = vmul.f32 %v372, %v4535
      %v4561 = vmul.f32 %v373, %v4542
      %v4562 = vmul.f32 %v374, %v4543
      %v4563 = vmul.f32 %v375, %v4544
      %v4564 = vmul.f32 %v3696, %v4541
      %v4580 = vrot.slane %v4550, 1
      %v4581 = vrot.slane %v4555, 1
      %v4582 = vsel %vm496, %v4580, %v4581
      %v4583 = vrot.slane %v4551, 1
      %v4584 = vrot.slane %v4556, 1
      %v4585 = vsel %vm496, %v4583, %v4584
      %v4586 = vrot.slane %v4552, 1
      %v4587 = vrot.slane %v4557, 1
      %v4588 = vsel %vm496, %v4586, %v4587
      %v4589 = vrot.slane %v4553, 1
      %v4590 = vrot.slane %v4558, 1
      %v4591 = vsel %vm496, %v4589, %v4590
      %v4592 = vrot.slane %v4554, 1
      %v4593 = vrot.slane %v4559, 1
      %v4594 = vsel %vm496, %v4592, %v4593
      %v4595 = vrot.slane %v4560, 1
      %v4596 = vsel %vm496, %v4581, %v4595
      %v4597 = vrot.slane %v4561, 1
      %v4598 = vsel %vm496, %v4584, %v4597
      %v4599 = vrot.slane %v4562, 1
      %v4600 = vsel %vm496, %v4587, %v4599
      %v4601 = vrot.slane %v4563, 1
      %v4602 = vsel %vm496, %v4590, %v4601
      %v4603 = vrot.slane %v4564, 1
      %v4604 = vsel %vm496, %v4593, %v4603
      %4605 = vrot.lane.b32.xlu0 %v4582, 96
      %v4606 = vpop.permute.xlu0 %4605
      %4607 = vrot.lane.b32.xlu0 %v4585, 96
      %v4608 = vpop.permute.xlu0 %4607
      %4609 = vrot.lane.b32.xlu0 %v4588, 96
      %v4610 = vpop.permute.xlu0 %4609
      %4611 = vrot.lane.b32.xlu0 %v4591, 96
      %v4612 = vpop.permute.xlu0 %4611
      %4613 = vrot.lane.b32.xlu0 %v4594, 96
      %v4614 = vpop.permute.xlu0 %4613
      %4615 = vrot.lane.b32.xlu0 %v4596, 96
      %v4616 = vpop.permute.xlu0 %4615
      %4617 = vrot.lane.b32.xlu0 %v4598, 96
      %v4618 = vpop.permute.xlu0 %4617
      %4619 = vrot.lane.b32.xlu0 %v4600, 96
      %v4620 = vpop.permute.xlu0 %4619
      %4621 = vrot.lane.b32.xlu0 %v4602, 96
      %v4622 = vpop.permute.xlu0 %4621
      %4623 = vrot.lane.b32.xlu0 %v4604, 96
      %v4624 = vpop.permute.xlu0 %4623
      %v4625 = vsel %vm301, %v4606, %v4608
      %v4626 = vsel %vm301, %v4608, %v4610
      %v4627 = vsel %vm301, %v4610, %v4612
      %v4628 = vsel %vm301, %v4612, %v4614
      %v4629 = vsel %vm301, %v4616, %v4618
      %v4630 = vsel %vm301, %v4618, %v4620
      %v4631 = vsel %vm301, %v4620, %v4622
      %v4632 = vsel %vm301, %v4622, %v4624
      %v4643 = vadd.f32 %v4505, %v4625
      %v4644 = vadd.f32 %v4506, %v4626
      %v4645 = vadd.f32 %v4507, %v4627
      %v4646 = vadd.f32 %v4508, %v4628
      %v4647 = vadd.f32 %v4509, %v4614
      %v4648 = vadd.f32 %v4510, %v4629
      %v4649 = vadd.f32 %v4511, %v4630
      %v4650 = vadd.f32 %v4512, %v4631
      %v4651 = vadd.f32 %v4513, %v4632
      %v4652 = vadd.f32 %v4514, %v4624
      %s4653 = scalar_lea.vmem %s3, 67
      %v4654 = vld [vmem:[%s4653] ss:$8 sm:$0xf]
      %v4656 = vlaneseq
      %v4657 = vshrl.u32 %v4656, 7
      %v4658 = vsub.s32 0, %v4657
      %v4659 = vrot.slane %v4654, %v4658
      %v4660 = vlaneseq
      %v4661 = vshrl.u32 %v4660, 7
      %v4662 = vsub.s32 1, %v4661
      %v4663 = vrot.slane %v4654, %v4662
      %v4664 = vlaneseq
      %v4665 = vshrl.u32 %v4664, 7
      %v4666 = vsub.s32 2, %v4665
      %v4667 = vrot.slane %v4654, %v4666
      %v4668 = vlaneseq
      %v4669 = vshrl.u32 %v4668, 7
      %v4670 = vsub.s32 3, %v4669
      %v4671 = vrot.slane %v4654, %v4670
      %4672 = vrot.lane.b32.xlu0 %v4659, 64
      %v4673 = vpop.permute.xlu0 %4672
      %4674 = vrot.lane.b32.xlu0 %v4663, 64
      %v4675 = vpop.permute.xlu0 %4674
      %4676 = vrot.lane.b32.xlu0 %v4667, 64
      %v4677 = vpop.permute.xlu0 %4676
      %4678 = vrot.lane.b32.xlu0 %v4671, 64
      %v4679 = vpop.permute.xlu0 %4678
      %v4680 = vsel %vm1123, %v4673, %v4675
      %v4681 = vsel %vm1123, %v4675, %v4677
      %v4682 = vsel %vm1123, %v4677, %v4679
      %v4688 = vmul.f32 %v362, %v4673
      %v4689 = vmul.f32 %v363, %v4680
      %v4690 = vmul.f32 %v364, %v4681
      %v4691 = vmul.f32 %v365, %v4682
      %v4692 = vmul.f32 %v3694, %v4679
      %v4693 = vmul.f32 %v367, %v4673
      %v4694 = vmul.f32 %v368, %v4680
      %v4695 = vmul.f32 %v369, %v4681
      %v4696 = vmul.f32 %v370, %v4682
      %v4697 = vmul.f32 %v3695, %v4679
      %v4698 = vmul.f32 %v372, %v4673
      %v4699 = vmul.f32 %v373, %v4680
      %v4700 = vmul.f32 %v374, %v4681
      %v4701 = vmul.f32 %v375, %v4682
      %v4702 = vmul.f32 %v3696, %v4679
      %v4718 = vrot.slane %v4688, 2
      %v4719 = vrot.slane %v4693, 2
      %v4720 = vsel %vm607, %v4718, %v4719
      %v4721 = vrot.slane %v4689, 2
      %v4722 = vrot.slane %v4694, 2
      %v4723 = vsel %vm607, %v4721, %v4722
      %v4724 = vrot.slane %v4690, 2
      %v4725 = vrot.slane %v4695, 2
      %v4726 = vsel %vm607, %v4724, %v4725
      %v4727 = vrot.slane %v4691, 2
      %v4728 = vrot.slane %v4696, 2
      %v4729 = vsel %vm607, %v4727, %v4728
      %v4730 = vrot.slane %v4692, 2
      %v4731 = vrot.slane %v4697, 2
      %v4732 = vsel %vm607, %v4730, %v4731
      %v4733 = vrot.slane %v4698, 2
      %v4734 = vsel %vm607, %v4719, %v4733
      %v4735 = vrot.slane %v4699, 2
      %v4736 = vsel %vm607, %v4722, %v4735
      %v4737 = vrot.slane %v4700, 2
      %v4738 = vsel %vm607, %v4725, %v4737
      %v4739 = vrot.slane %v4701, 2
      %v4740 = vsel %vm607, %v4728, %v4739
      %v4741 = vrot.slane %v4702, 2
      %v4742 = vsel %vm607, %v4731, %v4741
      %4743 = vrot.lane.b32.xlu0 %v4720, 96
      %v4744 = vpop.permute.xlu0 %4743
      %4745 = vrot.lane.b32.xlu0 %v4723, 96
      %v4746 = vpop.permute.xlu0 %4745
      %4747 = vrot.lane.b32.xlu0 %v4726, 96
      %v4748 = vpop.permute.xlu0 %4747
      %4749 = vrot.lane.b32.xlu0 %v4729, 96
      %v4750 = vpop.permute.xlu0 %4749
      %4751 = vrot.lane.b32.xlu0 %v4732, 96
      %v4752 = vpop.permute.xlu0 %4751
      %4753 = vrot.lane.b32.xlu0 %v4734, 96
      %v4754 = vpop.permute.xlu0 %4753
      %4755 = vrot.lane.b32.xlu0 %v4736, 96
      %v4756 = vpop.permute.xlu0 %4755
      %4757 = vrot.lane.b32.xlu0 %v4738, 96
      %v4758 = vpop.permute.xlu0 %4757
      %4759 = vrot.lane.b32.xlu0 %v4740, 96
      %v4760 = vpop.permute.xlu0 %4759
      %4761 = vrot.lane.b32.xlu0 %v4742, 96
      %v4762 = vpop.permute.xlu0 %4761
      %v4763 = vsel %vm301, %v4744, %v4746
      %v4764 = vsel %vm301, %v4746, %v4748
      %v4765 = vsel %vm301, %v4748, %v4750
      %v4766 = vsel %vm301, %v4750, %v4752
      %v4767 = vsel %vm301, %v4754, %v4756
      %v4768 = vsel %vm301, %v4756, %v4758
      %v4769 = vsel %vm301, %v4758, %v4760
      %v4770 = vsel %vm301, %v4760, %v4762
      %v4781 = vadd.f32 %v4643, %v4763
      %v4782 = vadd.f32 %v4644, %v4764
      %v4783 = vadd.f32 %v4645, %v4765
      %v4784 = vadd.f32 %v4646, %v4766
      %v4785 = vadd.f32 %v4647, %v4752
      %v4786 = vadd.f32 %v4648, %v4767
      %v4787 = vadd.f32 %v4649, %v4768
      %v4788 = vadd.f32 %v4650, %v4769
      %v4789 = vadd.f32 %v4651, %v4770
      %v4790 = vadd.f32 %v4652, %v4762
      %s4791 = scalar_lea.vmem %s3, 98
      %v4792 = vld [vmem:[%s4791] ss:$8 sm:$0xf]
      %v4794 = vlaneseq
      %v4795 = vshrl.u32 %v4794, 7
      %v4796 = vsub.s32 0, %v4795
      %v4797 = vrot.slane %v4792, %v4796
      %v4798 = vlaneseq
      %v4799 = vshrl.u32 %v4798, 7
      %v4800 = vsub.s32 1, %v4799
      %v4801 = vrot.slane %v4792, %v4800
      %v4802 = vlaneseq
      %v4803 = vshrl.u32 %v4802, 7
      %v4804 = vsub.s32 2, %v4803
      %v4805 = vrot.slane %v4792, %v4804
      %v4806 = vlaneseq
      %v4807 = vshrl.u32 %v4806, 7
      %v4808 = vsub.s32 3, %v4807
      %v4809 = vrot.slane %v4792, %v4808
      %4810 = vrot.lane.b32.xlu0 %v4797, 64
      %v4811 = vpop.permute.xlu0 %4810
      %4812 = vrot.lane.b32.xlu0 %v4801, 64
      %v4813 = vpop.permute.xlu0 %4812
      %4814 = vrot.lane.b32.xlu0 %v4805, 64
      %v4815 = vpop.permute.xlu0 %4814
      %4816 = vrot.lane.b32.xlu0 %v4809, 64
      %v4817 = vpop.permute.xlu0 %4816
      %v4818 = vsel %vm1123, %v4811, %v4813
      %v4819 = vsel %vm1123, %v4813, %v4815
      %v4820 = vsel %vm1123, %v4815, %v4817
      %v4826 = vmul.f32 %v362, %v4811
      %v4827 = vmul.f32 %v363, %v4818
      %v4828 = vmul.f32 %v364, %v4819
      %v4829 = vmul.f32 %v365, %v4820
      %v4830 = vmul.f32 %v3694, %v4817
      %v4831 = vmul.f32 %v367, %v4811
      %v4832 = vmul.f32 %v368, %v4818
      %v4833 = vmul.f32 %v369, %v4819
      %v4834 = vmul.f32 %v370, %v4820
      %v4835 = vmul.f32 %v3695, %v4817
      %v4836 = vmul.f32 %v372, %v4811
      %v4837 = vmul.f32 %v373, %v4818
      %v4838 = vmul.f32 %v374, %v4819
      %v4839 = vmul.f32 %v375, %v4820
      %v4840 = vmul.f32 %v3696, %v4817
      %v4856 = vrot.slane %v4826, 3
      %v4857 = vrot.slane %v4831, 3
      %v4858 = vsel %vm718, %v4856, %v4857
      %v4859 = vrot.slane %v4827, 3
      %v4860 = vrot.slane %v4832, 3
      %v4861 = vsel %vm718, %v4859, %v4860
      %v4862 = vrot.slane %v4828, 3
      %v4863 = vrot.slane %v4833, 3
      %v4864 = vsel %vm718, %v4862, %v4863
      %v4865 = vrot.slane %v4829, 3
      %v4866 = vrot.slane %v4834, 3
      %v4867 = vsel %vm718, %v4865, %v4866
      %v4868 = vrot.slane %v4830, 3
      %v4869 = vrot.slane %v4835, 3
      %v4870 = vsel %vm718, %v4868, %v4869
      %v4871 = vrot.slane %v4836, 3
      %v4872 = vsel %vm718, %v4857, %v4871
      %v4873 = vrot.slane %v4837, 3
      %v4874 = vsel %vm718, %v4860, %v4873
      %v4875 = vrot.slane %v4838, 3
      %v4876 = vsel %vm718, %v4863, %v4875
      %v4877 = vrot.slane %v4839, 3
      %v4878 = vsel %vm718, %v4866, %v4877
      %v4879 = vrot.slane %v4840, 3
      %v4880 = vsel %vm718, %v4869, %v4879
      %4881 = vrot.lane.b32.xlu0 %v4858, 96
      %v4882 = vpop.permute.xlu0 %4881
      %4883 = vrot.lane.b32.xlu0 %v4861, 96
      %v4884 = vpop.permute.xlu0 %4883
      %4885 = vrot.lane.b32.xlu0 %v4864, 96
      %v4886 = vpop.permute.xlu0 %4885
      %4887 = vrot.lane.b32.xlu0 %v4867, 96
      %v4888 = vpop.permute.xlu0 %4887
      %4889 = vrot.lane.b32.xlu0 %v4870, 96
      %v4890 = vpop.permute.xlu0 %4889
      %4891 = vrot.lane.b32.xlu0 %v4872, 96
      %v4892 = vpop.permute.xlu0 %4891
      %4893 = vrot.lane.b32.xlu0 %v4874, 96
      %v4894 = vpop.permute.xlu0 %4893
      %4895 = vrot.lane.b32.xlu0 %v4876, 96
      %v4896 = vpop.permute.xlu0 %4895
      %4897 = vrot.lane.b32.xlu0 %v4878, 96
      %v4898 = vpop.permute.xlu0 %4897
      %4899 = vrot.lane.b32.xlu0 %v4880, 96
      %v4900 = vpop.permute.xlu0 %4899
      %v4901 = vsel %vm301, %v4882, %v4884
      %v4902 = vsel %vm301, %v4884, %v4886
      %v4903 = vsel %vm301, %v4886, %v4888
      %v4904 = vsel %vm301, %v4888, %v4890
      %v4905 = vsel %vm301, %v4892, %v4894
      %v4906 = vsel %vm301, %v4894, %v4896
      %v4907 = vsel %vm301, %v4896, %v4898
      %v4908 = vsel %vm301, %v4898, %v4900
      %v4919 = vadd.f32 %v4781, %v4901
      %v4920 = vadd.f32 %v4782, %v4902
      %v4921 = vadd.f32 %v4783, %v4903
      %v4922 = vadd.f32 %v4784, %v4904
      %v4923 = vadd.f32 %v4785, %v4890
      %v4924 = vadd.f32 %v4786, %v4905
      %v4925 = vadd.f32 %v4787, %v4906
      %v4926 = vadd.f32 %v4788, %v4907
      %v4927 = vadd.f32 %v4789, %v4908
      %v4928 = vadd.f32 %v4790, %v4900
      %s4929 = scalar_lea.vmem %s3, 129
      %v4930 = vld [vmem:[%s4929] ss:$8 sm:$0xf]
      %v4932 = vlaneseq
      %v4933 = vshrl.u32 %v4932, 7
      %v4934 = vsub.s32 0, %v4933
      %v4935 = vrot.slane %v4930, %v4934
      %v4936 = vlaneseq
      %v4937 = vshrl.u32 %v4936, 7
      %v4938 = vsub.s32 1, %v4937
      %v4939 = vrot.slane %v4930, %v4938
      %v4940 = vlaneseq
      %v4941 = vshrl.u32 %v4940, 7
      %v4942 = vsub.s32 2, %v4941
      %v4943 = vrot.slane %v4930, %v4942
      %v4944 = vlaneseq
      %v4945 = vshrl.u32 %v4944, 7
      %v4946 = vsub.s32 3, %v4945
      %v4947 = vrot.slane %v4930, %v4946
      %4948 = vrot.lane.b32.xlu0 %v4935, 64
      %v4949 = vpop.permute.xlu0 %4948
      %4950 = vrot.lane.b32.xlu0 %v4939, 64
      %v4951 = vpop.permute.xlu0 %4950
      %4952 = vrot.lane.b32.xlu0 %v4943, 64
      %v4953 = vpop.permute.xlu0 %4952
      %4954 = vrot.lane.b32.xlu0 %v4947, 64
      %v4955 = vpop.permute.xlu0 %4954
      %v4956 = vsel %vm1123, %v4949, %v4951
      %v4957 = vsel %vm1123, %v4951, %v4953
      %v4958 = vsel %vm1123, %v4953, %v4955
      %v4964 = vmul.f32 %v362, %v4949
      %v4965 = vmul.f32 %v363, %v4956
      %v4966 = vmul.f32 %v364, %v4957
      %v4967 = vmul.f32 %v365, %v4958
      %v4968 = vmul.f32 %v3694, %v4955
      %v4969 = vmul.f32 %v367, %v4949
      %v4970 = vmul.f32 %v368, %v4956
      %v4971 = vmul.f32 %v369, %v4957
      %v4972 = vmul.f32 %v370, %v4958
      %v4973 = vmul.f32 %v3695, %v4955
      %v4974 = vmul.f32 %v372, %v4949
      %v4975 = vmul.f32 %v373, %v4956
      %v4976 = vmul.f32 %v374, %v4957
      %v4977 = vmul.f32 %v375, %v4958
      %v4978 = vmul.f32 %v3696, %v4955
      %v4994 = vrot.slane %v4964, 4
      %v4995 = vrot.slane %v4969, 4
      %v4996 = vsel %vm829, %v4994, %v4995
      %v4997 = vrot.slane %v4965, 4
      %v4998 = vrot.slane %v4970, 4
      %v4999 = vsel %vm829, %v4997, %v4998
      %v5000 = vrot.slane %v4966, 4
      %v5001 = vrot.slane %v4971, 4
      %v5002 = vsel %vm829, %v5000, %v5001
      %v5003 = vrot.slane %v4967, 4
      %v5004 = vrot.slane %v4972, 4
      %v5005 = vsel %vm829, %v5003, %v5004
      %v5006 = vrot.slane %v4968, 4
      %v5007 = vrot.slane %v4973, 4
      %v5008 = vsel %vm829, %v5006, %v5007
      %v5009 = vrot.slane %v4974, 4
      %v5010 = vsel %vm829, %v4995, %v5009
      %v5011 = vrot.slane %v4975, 4
      %v5012 = vsel %vm829, %v4998, %v5011
      %v5013 = vrot.slane %v4976, 4
      %v5014 = vsel %vm829, %v5001, %v5013
      %v5015 = vrot.slane %v4977, 4
      %v5016 = vsel %vm829, %v5004, %v5015
      %v5017 = vrot.slane %v4978, 4
      %v5018 = vsel %vm829, %v5007, %v5017
      %5019 = vrot.lane.b32.xlu0 %v4996, 96
      %v5020 = vpop.permute.xlu0 %5019
      %5021 = vrot.lane.b32.xlu0 %v4999, 96
      %v5022 = vpop.permute.xlu0 %5021
      %5023 = vrot.lane.b32.xlu0 %v5002, 96
      %v5024 = vpop.permute.xlu0 %5023
      %5025 = vrot.lane.b32.xlu0 %v5005, 96
      %v5026 = vpop.permute.xlu0 %5025
      %5027 = vrot.lane.b32.xlu0 %v5008, 96
      %v5028 = vpop.permute.xlu0 %5027
      %5029 = vrot.lane.b32.xlu0 %v5010, 96
      %v5030 = vpop.permute.xlu0 %5029
      %5031 = vrot.lane.b32.xlu0 %v5012, 96
      %v5032 = vpop.permute.xlu0 %5031
      %5033 = vrot.lane.b32.xlu0 %v5014, 96
      %v5034 = vpop.permute.xlu0 %5033
      %5035 = vrot.lane.b32.xlu0 %v5016, 96
      %v5036 = vpop.permute.xlu0 %5035
      %5037 = vrot.lane.b32.xlu0 %v5018, 96
      %v5038 = vpop.permute.xlu0 %5037
      %v5039 = vsel %vm301, %v5020, %v5022
      %v5040 = vsel %vm301, %v5022, %v5024
      %v5041 = vsel %vm301, %v5024, %v5026
      %v5042 = vsel %vm301, %v5026, %v5028
      %v5043 = vsel %vm301, %v5030, %v5032
      %v5044 = vsel %vm301, %v5032, %v5034
      %v5045 = vsel %vm301, %v5034, %v5036
      %v5046 = vsel %vm301, %v5036, %v5038
      %v5057 = vadd.f32 %v4919, %v5039
      %v5058 = vadd.f32 %v4920, %v5040
      %v5059 = vadd.f32 %v4921, %v5041
      %v5060 = vadd.f32 %v4922, %v5042
      %v5061 = vadd.f32 %v4923, %v5028
      %v5062 = vadd.f32 %v4924, %v5043
      %v5063 = vadd.f32 %v4925, %v5044
      %v5064 = vadd.f32 %v4926, %v5045
      %v5065 = vadd.f32 %v4927, %v5046
      %v5066 = vadd.f32 %v4928, %v5038
      %s5067 = scalar_lea.vmem %s3, 160
      %v5068 = vld [vmem:[%s5067] ss:$8 sm:$0xf]
      %v5070 = vlaneseq
      %v5071 = vshrl.u32 %v5070, 7
      %v5072 = vsub.s32 0, %v5071
      %v5073 = vrot.slane %v5068, %v5072
      %v5074 = vlaneseq
      %v5075 = vshrl.u32 %v5074, 7
      %v5076 = vsub.s32 1, %v5075
      %v5077 = vrot.slane %v5068, %v5076
      %v5078 = vlaneseq
      %v5079 = vshrl.u32 %v5078, 7
      %v5080 = vsub.s32 2, %v5079
      %v5081 = vrot.slane %v5068, %v5080
      %v5082 = vlaneseq
      %v5083 = vshrl.u32 %v5082, 7
      %v5084 = vsub.s32 3, %v5083
      %v5085 = vrot.slane %v5068, %v5084
      %5086 = vrot.lane.b32.xlu0 %v5073, 64
      %v5087 = vpop.permute.xlu0 %5086
      %5088 = vrot.lane.b32.xlu0 %v5077, 64
      %v5089 = vpop.permute.xlu0 %5088
      %5090 = vrot.lane.b32.xlu0 %v5081, 64
      %v5091 = vpop.permute.xlu0 %5090
      %5092 = vrot.lane.b32.xlu0 %v5085, 64
      %v5093 = vpop.permute.xlu0 %5092
      %v5094 = vsel %vm1123, %v5087, %v5089
      %v5095 = vsel %vm1123, %v5089, %v5091
      %v5096 = vsel %vm1123, %v5091, %v5093
      %v5102 = vmul.f32 %v362, %v5087
      %v5103 = vmul.f32 %v363, %v5094
      %v5104 = vmul.f32 %v364, %v5095
      %v5105 = vmul.f32 %v365, %v5096
      %v5106 = vmul.f32 %v3694, %v5093
      %v5107 = vmul.f32 %v367, %v5087
      %v5108 = vmul.f32 %v368, %v5094
      %v5109 = vmul.f32 %v369, %v5095
      %v5110 = vmul.f32 %v370, %v5096
      %v5111 = vmul.f32 %v3695, %v5093
      %v5112 = vmul.f32 %v372, %v5087
      %v5113 = vmul.f32 %v373, %v5094
      %v5114 = vmul.f32 %v374, %v5095
      %v5115 = vmul.f32 %v375, %v5096
      %v5116 = vmul.f32 %v3696, %v5093
      %v5132 = vrot.slane %v5102, 5
      %v5133 = vrot.slane %v5107, 5
      %v5134 = vsel %vm324, %v5132, %v5133
      %v5135 = vrot.slane %v5103, 5
      %v5136 = vrot.slane %v5108, 5
      %v5137 = vsel %vm324, %v5135, %v5136
      %v5138 = vrot.slane %v5104, 5
      %v5139 = vrot.slane %v5109, 5
      %v5140 = vsel %vm324, %v5138, %v5139
      %v5141 = vrot.slane %v5105, 5
      %v5142 = vrot.slane %v5110, 5
      %v5143 = vsel %vm324, %v5141, %v5142
      %v5144 = vrot.slane %v5106, 5
      %v5145 = vrot.slane %v5111, 5
      %v5146 = vsel %vm324, %v5144, %v5145
      %v5147 = vrot.slane %v5112, 5
      %v5148 = vsel %vm324, %v5133, %v5147
      %v5149 = vrot.slane %v5113, 5
      %v5150 = vsel %vm324, %v5136, %v5149
      %v5151 = vrot.slane %v5114, 5
      %v5152 = vsel %vm324, %v5139, %v5151
      %v5153 = vrot.slane %v5115, 5
      %v5154 = vsel %vm324, %v5142, %v5153
      %v5155 = vrot.slane %v5116, 5
      %v5156 = vsel %vm324, %v5145, %v5155
      %5157 = vrot.lane.b32.xlu0 %v5134, 96
      %v5158 = vpop.permute.xlu0 %5157
      %5159 = vrot.lane.b32.xlu0 %v5137, 96
      %v5160 = vpop.permute.xlu0 %5159
      %5161 = vrot.lane.b32.xlu0 %v5140, 96
      %v5162 = vpop.permute.xlu0 %5161
      %5163 = vrot.lane.b32.xlu0 %v5143, 96
      %v5164 = vpop.permute.xlu0 %5163
      %5165 = vrot.lane.b32.xlu0 %v5146, 96
      %v5166 = vpop.permute.xlu0 %5165
      %5167 = vrot.lane.b32.xlu0 %v5148, 96
      %v5168 = vpop.permute.xlu0 %5167
      %5169 = vrot.lane.b32.xlu0 %v5150, 96
      %v5170 = vpop.permute.xlu0 %5169
      %5171 = vrot.lane.b32.xlu0 %v5152, 96
      %v5172 = vpop.permute.xlu0 %5171
      %5173 = vrot.lane.b32.xlu0 %v5154, 96
      %v5174 = vpop.permute.xlu0 %5173
      %5175 = vrot.lane.b32.xlu0 %v5156, 96
      %v5176 = vpop.permute.xlu0 %5175
      %v5177 = vsel %vm301, %v5158, %v5160
      %v5178 = vsel %vm301, %v5160, %v5162
      %v5179 = vsel %vm301, %v5162, %v5164
      %v5180 = vsel %vm301, %v5164, %v5166
      %v5181 = vsel %vm301, %v5168, %v5170
      %v5182 = vsel %vm301, %v5170, %v5172
      %v5183 = vsel %vm301, %v5172, %v5174
      %v5184 = vsel %vm301, %v5174, %v5176
      %v5195 = vadd.f32 %v5057, %v5177
      %v5196 = vadd.f32 %v5058, %v5178
      %v5197 = vadd.f32 %v5059, %v5179
      %v5198 = vadd.f32 %v5060, %v5180
      %v5199 = vadd.f32 %v5061, %v5166
      %v5200 = vadd.f32 %v5062, %v5181
      %v5201 = vadd.f32 %v5063, %v5182
      %v5202 = vadd.f32 %v5064, %v5183
      %v5203 = vadd.f32 %v5065, %v5184
      %v5204 = vadd.f32 %v5066, %v5176
      %s5205 = scalar_lea.vmem %s3, 167
      %v5206 = vld [vmem:[%s5205] ss:$8 sm:$0xf]
      %v5208 = vlaneseq
      %v5209 = vshrl.u32 %v5208, 7
      %v5210 = vsub.s32 0, %v5209
      %v5211 = vrot.slane %v5206, %v5210
      %v5212 = vlaneseq
      %v5213 = vshrl.u32 %v5212, 7
      %v5214 = vsub.s32 1, %v5213
      %v5215 = vrot.slane %v5206, %v5214
      %v5216 = vlaneseq
      %v5217 = vshrl.u32 %v5216, 7
      %v5218 = vsub.s32 2, %v5217
      %v5219 = vrot.slane %v5206, %v5218
      %v5220 = vlaneseq
      %v5221 = vshrl.u32 %v5220, 7
      %v5222 = vsub.s32 3, %v5221
      %v5223 = vrot.slane %v5206, %v5222
      %5224 = vrot.lane.b32.xlu0 %v5211, 64
      %v5225 = vpop.permute.xlu0 %5224
      %5226 = vrot.lane.b32.xlu0 %v5215, 64
      %v5227 = vpop.permute.xlu0 %5226
      %5228 = vrot.lane.b32.xlu0 %v5219, 64
      %v5229 = vpop.permute.xlu0 %5228
      %5230 = vrot.lane.b32.xlu0 %v5223, 64
      %v5231 = vpop.permute.xlu0 %5230
      %v5232 = vsel %vm1123, %v5225, %v5227
      %v5233 = vsel %vm1123, %v5227, %v5229
      %v5234 = vsel %vm1123, %v5229, %v5231
      %v5240 = vmul.f32 %v362, %v5225
      %v5241 = vmul.f32 %v363, %v5232
      %v5242 = vmul.f32 %v364, %v5233
      %v5243 = vmul.f32 %v365, %v5234
      %v5244 = vmul.f32 %v3694, %v5231
      %v5245 = vmul.f32 %v367, %v5225
      %v5246 = vmul.f32 %v368, %v5232
      %v5247 = vmul.f32 %v369, %v5233
      %v5248 = vmul.f32 %v370, %v5234
      %v5249 = vmul.f32 %v3695, %v5231
      %v5250 = vmul.f32 %v372, %v5225
      %v5251 = vmul.f32 %v373, %v5232
      %v5252 = vmul.f32 %v374, %v5233
      %v5253 = vmul.f32 %v375, %v5234
      %v5254 = vmul.f32 %v3696, %v5231
      %v5270 = vrot.slane %v5240, 6
      %v5271 = vrot.slane %v5245, 6
      %v5272 = vsel %vm1050, %v5270, %v5271
      %v5273 = vrot.slane %v5241, 6
      %v5274 = vrot.slane %v5246, 6
      %v5275 = vsel %vm1050, %v5273, %v5274
      %v5276 = vrot.slane %v5242, 6
      %v5277 = vrot.slane %v5247, 6
      %v5278 = vsel %vm1050, %v5276, %v5277
      %v5279 = vrot.slane %v5243, 6
      %v5280 = vrot.slane %v5248, 6
      %v5281 = vsel %vm1050, %v5279, %v5280
      %v5282 = vrot.slane %v5244, 6
      %v5283 = vrot.slane %v5249, 6
      %v5284 = vsel %vm1050, %v5282, %v5283
      %v5285 = vrot.slane %v5250, 6
      %v5286 = vsel %vm1050, %v5271, %v5285
      %v5287 = vrot.slane %v5251, 6
      %v5288 = vsel %vm1050, %v5274, %v5287
      %v5289 = vrot.slane %v5252, 6
      %v5290 = vsel %vm1050, %v5277, %v5289
      %v5291 = vrot.slane %v5253, 6
      %v5292 = vsel %vm1050, %v5280, %v5291
      %v5293 = vrot.slane %v5254, 6
      %v5294 = vsel %vm1050, %v5283, %v5293
      %5295 = vrot.lane.b32.xlu0 %v5272, 96
      %v5296 = vpop.permute.xlu0 %5295
      %5297 = vrot.lane.b32.xlu0 %v5275, 96
      %v5298 = vpop.permute.xlu0 %5297
      %5299 = vrot.lane.b32.xlu0 %v5278, 96
      %v5300 = vpop.permute.xlu0 %5299
      %5301 = vrot.lane.b32.xlu0 %v5281, 96
      %v5302 = vpop.permute.xlu0 %5301
      %5303 = vrot.lane.b32.xlu0 %v5284, 96
      %v5304 = vpop.permute.xlu0 %5303
      %5305 = vrot.lane.b32.xlu0 %v5286, 96
      %v5306 = vpop.permute.xlu0 %5305
      %5307 = vrot.lane.b32.xlu0 %v5288, 96
      %v5308 = vpop.permute.xlu0 %5307
      %5309 = vrot.lane.b32.xlu0 %v5290, 96
      %v5310 = vpop.permute.xlu0 %5309
      %5311 = vrot.lane.b32.xlu0 %v5292, 96
      %v5312 = vpop.permute.xlu0 %5311
      %5313 = vrot.lane.b32.xlu0 %v5294, 96
      %v5314 = vpop.permute.xlu0 %5313
      %v5315 = vsel %vm301, %v5296, %v5298
      %v5316 = vsel %vm301, %v5298, %v5300
      %v5317 = vsel %vm301, %v5300, %v5302
      %v5318 = vsel %vm301, %v5302, %v5304
      %v5319 = vsel %vm301, %v5306, %v5308
      %v5320 = vsel %vm301, %v5308, %v5310
      %v5321 = vsel %vm301, %v5310, %v5312
      %v5322 = vsel %vm301, %v5312, %v5314
      %v5333 = vadd.f32 %v5195, %v5315
      %v5334 = vadd.f32 %v5196, %v5316
      %v5335 = vadd.f32 %v5197, %v5317
      %v5336 = vadd.f32 %v5198, %v5318
      %v5337 = vadd.f32 %v5199, %v5304
      %v5338 = vadd.f32 %v5200, %v5319
      %v5339 = vadd.f32 %v5201, %v5320
      %v5340 = vadd.f32 %v5202, %v5321
      %v5341 = vadd.f32 %v5203, %v5322
      %v5342 = vadd.f32 %v5204, %v5314
      %s5343 = scalar_lea.vmem %s3, 6
      %v5344 = vld [vmem:[%s5343] ss:$8 sm:$0xf]
      %v5346 = vlaneseq
      %v5347 = vshrl.u32 %v5346, 7
      %v5348 = vsub.s32 0, %v5347
      %v5349 = vrot.slane %v5344, %v5348
      %v5350 = vlaneseq
      %v5351 = vshrl.u32 %v5350, 7
      %v5352 = vsub.s32 1, %v5351
      %v5353 = vrot.slane %v5344, %v5352
      %v5354 = vlaneseq
      %v5355 = vshrl.u32 %v5354, 7
      %v5356 = vsub.s32 2, %v5355
      %v5357 = vrot.slane %v5344, %v5356
      %v5358 = vlaneseq
      %v5359 = vshrl.u32 %v5358, 7
      %v5360 = vsub.s32 3, %v5359
      %v5361 = vrot.slane %v5344, %v5360
      %5362 = vrot.lane.b32.xlu0 %v5349, 96
      %v5363 = vpop.permute.xlu0 %5362
      %5364 = vrot.lane.b32.xlu0 %v5353, 96
      %v5365 = vpop.permute.xlu0 %5364
      %5366 = vrot.lane.b32.xlu0 %v5357, 96
      %v5367 = vpop.permute.xlu0 %5366
      %5368 = vrot.lane.b32.xlu0 %v5361, 96
      %v5369 = vpop.permute.xlu0 %5368
      %v5370 = vsel %vm301, %v5363, %v5365
      %v5371 = vsel %vm301, %v5365, %v5367
      %v5372 = vsel %vm301, %v5367, %v5369
      %v5378 = vmul.f32 %v362, %v5363
      %v5379 = vmul.f32 %v363, %v5370
      %v5380 = vmul.f32 %v364, %v5371
      %v5381 = vmul.f32 %v365, %v5372
      %v5382 = vmul.f32 %v3694, %v5369
      %v5383 = vmul.f32 %v367, %v5363
      %v5384 = vmul.f32 %v368, %v5370
      %v5385 = vmul.f32 %v369, %v5371
      %v5386 = vmul.f32 %v370, %v5372
      %v5387 = vmul.f32 %v3695, %v5369
      %5398 = vrot.lane.b32.xlu0 %v5378, 64
      %v5399 = vpop.permute.xlu0 %5398
      %5400 = vrot.lane.b32.xlu0 %v5379, 64
      %v5401 = vpop.permute.xlu0 %5400
      %5402 = vrot.lane.b32.xlu0 %v5380, 64
      %v5403 = vpop.permute.xlu0 %5402
      %5404 = vrot.lane.b32.xlu0 %v5381, 64
      %v5405 = vpop.permute.xlu0 %5404
      %5406 = vrot.lane.b32.xlu0 %v5382, 64
      %v5407 = vpop.permute.xlu0 %5406
      %5408 = vrot.lane.b32.xlu0 %v5383, 64
      %v5409 = vpop.permute.xlu0 %5408
      %5410 = vrot.lane.b32.xlu0 %v5384, 64
      %v5411 = vpop.permute.xlu0 %5410
      %5412 = vrot.lane.b32.xlu0 %v5385, 64
      %v5413 = vpop.permute.xlu0 %5412
      %5414 = vrot.lane.b32.xlu0 %v5386, 64
      %v5415 = vpop.permute.xlu0 %5414
      %5416 = vrot.lane.b32.xlu0 %v5387, 64
      %v5417 = vpop.permute.xlu0 %5416
      %v5418 = vsel %vm1123, %v5399, %v5401
      %v5419 = vsel %vm1123, %v5401, %v5403
      %v5420 = vsel %vm1123, %v5403, %v5405
      %v5421 = vsel %vm1123, %v5405, %v5407
      %v5422 = vsel %vm1123, %v5409, %v5411
      %v5423 = vsel %vm1123, %v5411, %v5413
      %v5424 = vsel %vm1123, %v5413, %v5415
      %v5425 = vsel %vm1123, %v5415, %v5417
      %v5436 = vadd.f32 %v5333, %v5418
      %v5437 = vadd.f32 %v5334, %v5419
      %v5438 = vadd.f32 %v5335, %v5420
      %v5439 = vadd.f32 %v5336, %v5421
      %v5440 = vadd.f32 %v5337, %v5407
      %v5441 = vadd.f32 %v5338, %v5422
      %v5442 = vadd.f32 %v5339, %v5423
      %v5443 = vadd.f32 %v5340, %v5424
      %v5444 = vadd.f32 %v5341, %v5425
      %v5445 = vadd.f32 %v5342, %v5417
      %s5446 = scalar_lea.vmem %s3, 37
      %v5447 = vld [vmem:[%s5446] ss:$8 sm:$0xf]
      %v5449 = vlaneseq
      %v5450 = vshrl.u32 %v5449, 7
      %v5451 = vsub.s32 0, %v5450
      %v5452 = vrot.slane %v5447, %v5451
      %v5453 = vlaneseq
      %v5454 = vshrl.u32 %v5453, 7
      %v5455 = vsub.s32 1, %v5454
      %v5456 = vrot.slane %v5447, %v5455
      %v5457 = vlaneseq
      %v5458 = vshrl.u32 %v5457, 7
      %v5459 = vsub.s32 2, %v5458
      %v5460 = vrot.slane %v5447, %v5459
      %v5461 = vlaneseq
      %v5462 = vshrl.u32 %v5461, 7
      %v5463 = vsub.s32 3, %v5462
      %v5464 = vrot.slane %v5447, %v5463
      %5465 = vrot.lane.b32.xlu0 %v5452, 96
      %v5466 = vpop.permute.xlu0 %5465
      %5467 = vrot.lane.b32.xlu0 %v5456, 96
      %v5468 = vpop.permute.xlu0 %5467
      %5469 = vrot.lane.b32.xlu0 %v5460, 96
      %v5470 = vpop.permute.xlu0 %5469
      %5471 = vrot.lane.b32.xlu0 %v5464, 96
      %v5472 = vpop.permute.xlu0 %5471
      %v5473 = vsel %vm301, %v5466, %v5468
      %v5474 = vsel %vm301, %v5468, %v5470
      %v5475 = vsel %vm301, %v5470, %v5472
      %v5481 = vmul.f32 %v362, %v5466
      %v5482 = vmul.f32 %v363, %v5473
      %v5483 = vmul.f32 %v364, %v5474
      %v5484 = vmul.f32 %v365, %v5475
      %v5485 = vmul.f32 %v3694, %v5472
      %v5486 = vmul.f32 %v367, %v5466
      %v5487 = vmul.f32 %v368, %v5473
      %v5488 = vmul.f32 %v369, %v5474
      %v5489 = vmul.f32 %v370, %v5475
      %v5490 = vmul.f32 %v3695, %v5472
      %v5491 = vmul.f32 %v372, %v5466
      %v5492 = vmul.f32 %v373, %v5473
      %v5493 = vmul.f32 %v374, %v5474
      %v5494 = vmul.f32 %v375, %v5475
      %v5495 = vmul.f32 %v3696, %v5472
      %v5511 = vrot.slane %v5481, 1
      %v5512 = vrot.slane %v5486, 1
      %v5513 = vsel %vm496, %v5511, %v5512
      %v5514 = vrot.slane %v5482, 1
      %v5515 = vrot.slane %v5487, 1
      %v5516 = vsel %vm496, %v5514, %v5515
      %v5517 = vrot.slane %v5483, 1
      %v5518 = vrot.slane %v5488, 1
      %v5519 = vsel %vm496, %v5517, %v5518
      %v5520 = vrot.slane %v5484, 1
      %v5521 = vrot.slane %v5489, 1
      %v5522 = vsel %vm496, %v5520, %v5521
      %v5523 = vrot.slane %v5485, 1
      %v5524 = vrot.slane %v5490, 1
      %v5525 = vsel %vm496, %v5523, %v5524
      %v5526 = vrot.slane %v5491, 1
      %v5527 = vsel %vm496, %v5512, %v5526
      %v5528 = vrot.slane %v5492, 1
      %v5529 = vsel %vm496, %v5515, %v5528
      %v5530 = vrot.slane %v5493, 1
      %v5531 = vsel %vm496, %v5518, %v5530
      %v5532 = vrot.slane %v5494, 1
      %v5533 = vsel %vm496, %v5521, %v5532
      %v5534 = vrot.slane %v5495, 1
      %v5535 = vsel %vm496, %v5524, %v5534
      %5536 = vrot.lane.b32.xlu0 %v5513, 64
      %v5537 = vpop.permute.xlu0 %5536
      %5538 = vrot.lane.b32.xlu0 %v5516, 64
      %v5539 = vpop.permute.xlu0 %5538
      %5540 = vrot.lane.b32.xlu0 %v5519, 64
      %v5541 = vpop.permute.xlu0 %5540
      %5542 = vrot.lane.b32.xlu0 %v5522, 64
      %v5543 = vpop.permute.xlu0 %5542
      %5544 = vrot.lane.b32.xlu0 %v5525, 64
      %v5545 = vpop.permute.xlu0 %5544
      %5546 = vrot.lane.b32.xlu0 %v5527, 64
      %v5547 = vpop.permute.xlu0 %5546
      %5548 = vrot.lane.b32.xlu0 %v5529, 64
      %v5549 = vpop.permute.xlu0 %5548
      %5550 = vrot.lane.b32.xlu0 %v5531, 64
      %v5551 = vpop.permute.xlu0 %5550
      %5552 = vrot.lane.b32.xlu0 %v5533, 64
      %v5553 = vpop.permute.xlu0 %5552
      %5554 = vrot.lane.b32.xlu0 %v5535, 64
      %v5555 = vpop.permute.xlu0 %5554
      %v5556 = vsel %vm1123, %v5537, %v5539
      %v5557 = vsel %vm1123, %v5539, %v5541
      %v5558 = vsel %vm1123, %v5541, %v5543
      %v5559 = vsel %vm1123, %v5543, %v5545
      %v5560 = vsel %vm1123, %v5547, %v5549
      %v5561 = vsel %vm1123, %v5549, %v5551
      %v5562 = vsel %vm1123, %v5551, %v5553
      %v5563 = vsel %vm1123, %v5553, %v5555
      %v5574 = vadd.f32 %v5436, %v5556
      %v5575 = vadd.f32 %v5437, %v5557
      %v5576 = vadd.f32 %v5438, %v5558
      %v5577 = vadd.f32 %v5439, %v5559
      %v5578 = vadd.f32 %v5440, %v5545
      %v5579 = vadd.f32 %v5441, %v5560
      %v5580 = vadd.f32 %v5442, %v5561
      %v5581 = vadd.f32 %v5443, %v5562
      %v5582 = vadd.f32 %v5444, %v5563
      %v5583 = vadd.f32 %v5445, %v5555
      %s5584 = scalar_lea.vmem %s3, 68
      %v5585 = vld [vmem:[%s5584] ss:$8 sm:$0xf]
      %v5587 = vlaneseq
      %v5588 = vshrl.u32 %v5587, 7
      %v5589 = vsub.s32 0, %v5588
      %v5590 = vrot.slane %v5585, %v5589
      %v5591 = vlaneseq
      %v5592 = vshrl.u32 %v5591, 7
      %v5593 = vsub.s32 1, %v5592
      %v5594 = vrot.slane %v5585, %v5593
      %v5595 = vlaneseq
      %v5596 = vshrl.u32 %v5595, 7
      %v5597 = vsub.s32 2, %v5596
      %v5598 = vrot.slane %v5585, %v5597
      %v5599 = vlaneseq
      %v5600 = vshrl.u32 %v5599, 7
      %v5601 = vsub.s32 3, %v5600
      %v5602 = vrot.slane %v5585, %v5601
      %5603 = vrot.lane.b32.xlu0 %v5590, 96
      %v5604 = vpop.permute.xlu0 %5603
      %5605 = vrot.lane.b32.xlu0 %v5594, 96
      %v5606 = vpop.permute.xlu0 %5605
      %5607 = vrot.lane.b32.xlu0 %v5598, 96
      %v5608 = vpop.permute.xlu0 %5607
      %5609 = vrot.lane.b32.xlu0 %v5602, 96
      %v5610 = vpop.permute.xlu0 %5609
      %v5611 = vsel %vm301, %v5604, %v5606
      %v5612 = vsel %vm301, %v5606, %v5608
      %v5613 = vsel %vm301, %v5608, %v5610
      %v5619 = vmul.f32 %v362, %v5604
      %v5620 = vmul.f32 %v363, %v5611
      %v5621 = vmul.f32 %v364, %v5612
      %v5622 = vmul.f32 %v365, %v5613
      %v5623 = vmul.f32 %v3694, %v5610
      %v5624 = vmul.f32 %v367, %v5604
      %v5625 = vmul.f32 %v368, %v5611
      %v5626 = vmul.f32 %v369, %v5612
      %v5627 = vmul.f32 %v370, %v5613
      %v5628 = vmul.f32 %v3695, %v5610
      %v5629 = vmul.f32 %v372, %v5604
      %v5630 = vmul.f32 %v373, %v5611
      %v5631 = vmul.f32 %v374, %v5612
      %v5632 = vmul.f32 %v375, %v5613
      %v5633 = vmul.f32 %v3696, %v5610
      %v5649 = vrot.slane %v5619, 2
      %v5650 = vrot.slane %v5624, 2
      %v5651 = vsel %vm607, %v5649, %v5650
      %v5652 = vrot.slane %v5620, 2
      %v5653 = vrot.slane %v5625, 2
      %v5654 = vsel %vm607, %v5652, %v5653
      %v5655 = vrot.slane %v5621, 2
      %v5656 = vrot.slane %v5626, 2
      %v5657 = vsel %vm607, %v5655, %v5656
      %v5658 = vrot.slane %v5622, 2
      %v5659 = vrot.slane %v5627, 2
      %v5660 = vsel %vm607, %v5658, %v5659
      %v5661 = vrot.slane %v5623, 2
      %v5662 = vrot.slane %v5628, 2
      %v5663 = vsel %vm607, %v5661, %v5662
      %v5664 = vrot.slane %v5629, 2
      %v5665 = vsel %vm607, %v5650, %v5664
      %v5666 = vrot.slane %v5630, 2
      %v5667 = vsel %vm607, %v5653, %v5666
      %v5668 = vrot.slane %v5631, 2
      %v5669 = vsel %vm607, %v5656, %v5668
      %v5670 = vrot.slane %v5632, 2
      %v5671 = vsel %vm607, %v5659, %v5670
      %v5672 = vrot.slane %v5633, 2
      %v5673 = vsel %vm607, %v5662, %v5672
      %5674 = vrot.lane.b32.xlu0 %v5651, 64
      %v5675 = vpop.permute.xlu0 %5674
      %5676 = vrot.lane.b32.xlu0 %v5654, 64
      %v5677 = vpop.permute.xlu0 %5676
      %5678 = vrot.lane.b32.xlu0 %v5657, 64
      %v5679 = vpop.permute.xlu0 %5678
      %5680 = vrot.lane.b32.xlu0 %v5660, 64
      %v5681 = vpop.permute.xlu0 %5680
      %5682 = vrot.lane.b32.xlu0 %v5663, 64
      %v5683 = vpop.permute.xlu0 %5682
      %5684 = vrot.lane.b32.xlu0 %v5665, 64
      %v5685 = vpop.permute.xlu0 %5684
      %5686 = vrot.lane.b32.xlu0 %v5667, 64
      %v5687 = vpop.permute.xlu0 %5686
      %5688 = vrot.lane.b32.xlu0 %v5669, 64
      %v5689 = vpop.permute.xlu0 %5688
      %5690 = vrot.lane.b32.xlu0 %v5671, 64
      %v5691 = vpop.permute.xlu0 %5690
      %5692 = vrot.lane.b32.xlu0 %v5673, 64
      %v5693 = vpop.permute.xlu0 %5692
      %v5694 = vsel %vm1123, %v5675, %v5677
      %v5695 = vsel %vm1123, %v5677, %v5679
      %v5696 = vsel %vm1123, %v5679, %v5681
      %v5697 = vsel %vm1123, %v5681, %v5683
      %v5698 = vsel %vm1123, %v5685, %v5687
      %v5699 = vsel %vm1123, %v5687, %v5689
      %v5700 = vsel %vm1123, %v5689, %v5691
      %v5701 = vsel %vm1123, %v5691, %v5693
      %v5712 = vadd.f32 %v5574, %v5694
      %v5713 = vadd.f32 %v5575, %v5695
      %v5714 = vadd.f32 %v5576, %v5696
      %v5715 = vadd.f32 %v5577, %v5697
      %v5716 = vadd.f32 %v5578, %v5683
      %v5717 = vadd.f32 %v5579, %v5698
      %v5718 = vadd.f32 %v5580, %v5699
      %v5719 = vadd.f32 %v5581, %v5700
      %v5720 = vadd.f32 %v5582, %v5701
      %v5721 = vadd.f32 %v5583, %v5693
      %s5722 = scalar_lea.vmem %s3, 99
      %v5723 = vld [vmem:[%s5722] ss:$8 sm:$0xf]
      %v5725 = vlaneseq
      %v5726 = vshrl.u32 %v5725, 7
      %v5727 = vsub.s32 0, %v5726
      %v5728 = vrot.slane %v5723, %v5727
      %v5729 = vlaneseq
      %v5730 = vshrl.u32 %v5729, 7
      %v5731 = vsub.s32 1, %v5730
      %v5732 = vrot.slane %v5723, %v5731
      %v5733 = vlaneseq
      %v5734 = vshrl.u32 %v5733, 7
      %v5735 = vsub.s32 2, %v5734
      %v5736 = vrot.slane %v5723, %v5735
      %v5737 = vlaneseq
      %v5738 = vshrl.u32 %v5737, 7
      %v5739 = vsub.s32 3, %v5738
      %v5740 = vrot.slane %v5723, %v5739
      %5741 = vrot.lane.b32.xlu0 %v5728, 96
      %v5742 = vpop.permute.xlu0 %5741
      %5743 = vrot.lane.b32.xlu0 %v5732, 96
      %v5744 = vpop.permute.xlu0 %5743
      %5745 = vrot.lane.b32.xlu0 %v5736, 96
      %v5746 = vpop.permute.xlu0 %5745
      %5747 = vrot.lane.b32.xlu0 %v5740, 96
      %v5748 = vpop.permute.xlu0 %5747
      %v5749 = vsel %vm301, %v5742, %v5744
      %v5750 = vsel %vm301, %v5744, %v5746
      %v5751 = vsel %vm301, %v5746, %v5748
      %v5757 = vmul.f32 %v362, %v5742
      %v5758 = vmul.f32 %v363, %v5749
      %v5759 = vmul.f32 %v364, %v5750
      %v5760 = vmul.f32 %v365, %v5751
      %v5761 = vmul.f32 %v3694, %v5748
      %v5762 = vmul.f32 %v367, %v5742
      %v5763 = vmul.f32 %v368, %v5749
      %v5764 = vmul.f32 %v369, %v5750
      %v5765 = vmul.f32 %v370, %v5751
      %v5766 = vmul.f32 %v3695, %v5748
      %v5767 = vmul.f32 %v372, %v5742
      %v5768 = vmul.f32 %v373, %v5749
      %v5769 = vmul.f32 %v374, %v5750
      %v5770 = vmul.f32 %v375, %v5751
      %v5771 = vmul.f32 %v3696, %v5748
      %v5787 = vrot.slane %v5757, 3
      %v5788 = vrot.slane %v5762, 3
      %v5789 = vsel %vm718, %v5787, %v5788
      %v5790 = vrot.slane %v5758, 3
      %v5791 = vrot.slane %v5763, 3
      %v5792 = vsel %vm718, %v5790, %v5791
      %v5793 = vrot.slane %v5759, 3
      %v5794 = vrot.slane %v5764, 3
      %v5795 = vsel %vm718, %v5793, %v5794
      %v5796 = vrot.slane %v5760, 3
      %v5797 = vrot.slane %v5765, 3
      %v5798 = vsel %vm718, %v5796, %v5797
      %v5799 = vrot.slane %v5761, 3
      %v5800 = vrot.slane %v5766, 3
      %v5801 = vsel %vm718, %v5799, %v5800
      %v5802 = vrot.slane %v5767, 3
      %v5803 = vsel %vm718, %v5788, %v5802
      %v5804 = vrot.slane %v5768, 3
      %v5805 = vsel %vm718, %v5791, %v5804
      %v5806 = vrot.slane %v5769, 3
      %v5807 = vsel %vm718, %v5794, %v5806
      %v5808 = vrot.slane %v5770, 3
      %v5809 = vsel %vm718, %v5797, %v5808
      %v5810 = vrot.slane %v5771, 3
      %v5811 = vsel %vm718, %v5800, %v5810
      %5812 = vrot.lane.b32.xlu0 %v5789, 64
      %v5813 = vpop.permute.xlu0 %5812
      %5814 = vrot.lane.b32.xlu0 %v5792, 64
      %v5815 = vpop.permute.xlu0 %5814
      %5816 = vrot.lane.b32.xlu0 %v5795, 64
      %v5817 = vpop.permute.xlu0 %5816
      %5818 = vrot.lane.b32.xlu0 %v5798, 64
      %v5819 = vpop.permute.xlu0 %5818
      %5820 = vrot.lane.b32.xlu0 %v5801, 64
      %v5821 = vpop.permute.xlu0 %5820
      %5822 = vrot.lane.b32.xlu0 %v5803, 64
      %v5823 = vpop.permute.xlu0 %5822
      %5824 = vrot.lane.b32.xlu0 %v5805, 64
      %v5825 = vpop.permute.xlu0 %5824
      %5826 = vrot.lane.b32.xlu0 %v5807, 64
      %v5827 = vpop.permute.xlu0 %5826
      %5828 = vrot.lane.b32.xlu0 %v5809, 64
      %v5829 = vpop.permute.xlu0 %5828
      %5830 = vrot.lane.b32.xlu0 %v5811, 64
      %v5831 = vpop.permute.xlu0 %5830
      %v5832 = vsel %vm1123, %v5813, %v5815
      %v5833 = vsel %vm1123, %v5815, %v5817
      %v5834 = vsel %vm1123, %v5817, %v5819
      %v5835 = vsel %vm1123, %v5819, %v5821
      %v5836 = vsel %vm1123, %v5823, %v5825
      %v5837 = vsel %vm1123, %v5825, %v5827
      %v5838 = vsel %vm1123, %v5827, %v5829
      %v5839 = vsel %vm1123, %v5829, %v5831
      %v5850 = vadd.f32 %v5712, %v5832
      %v5851 = vadd.f32 %v5713, %v5833
      %v5852 = vadd.f32 %v5714, %v5834
      %v5853 = vadd.f32 %v5715, %v5835
      %v5854 = vadd.f32 %v5716, %v5821
      %v5855 = vadd.f32 %v5717, %v5836
      %v5856 = vadd.f32 %v5718, %v5837
      %v5857 = vadd.f32 %v5719, %v5838
      %v5858 = vadd.f32 %v5720, %v5839
      %v5859 = vadd.f32 %v5721, %v5831
      %s5860 = scalar_lea.vmem %s3, 130
      %v5861 = vld [vmem:[%s5860] ss:$8 sm:$0xf]
      %v5863 = vlaneseq
      %v5864 = vshrl.u32 %v5863, 7
      %v5865 = vsub.s32 0, %v5864
      %v5866 = vrot.slane %v5861, %v5865
      %v5867 = vlaneseq
      %v5868 = vshrl.u32 %v5867, 7
      %v5869 = vsub.s32 1, %v5868
      %v5870 = vrot.slane %v5861, %v5869
      %v5871 = vlaneseq
      %v5872 = vshrl.u32 %v5871, 7
      %v5873 = vsub.s32 2, %v5872
      %v5874 = vrot.slane %v5861, %v5873
      %v5875 = vlaneseq
      %v5876 = vshrl.u32 %v5875, 7
      %v5877 = vsub.s32 3, %v5876
      %v5878 = vrot.slane %v5861, %v5877
      %5879 = vrot.lane.b32.xlu0 %v5866, 96
      %v5880 = vpop.permute.xlu0 %5879
      %5881 = vrot.lane.b32.xlu0 %v5870, 96
      %v5882 = vpop.permute.xlu0 %5881
      %5883 = vrot.lane.b32.xlu0 %v5874, 96
      %v5884 = vpop.permute.xlu0 %5883
      %5885 = vrot.lane.b32.xlu0 %v5878, 96
      %v5886 = vpop.permute.xlu0 %5885
      %v5887 = vsel %vm301, %v5880, %v5882
      %v5888 = vsel %vm301, %v5882, %v5884
      %v5889 = vsel %vm301, %v5884, %v5886
      %v5895 = vmul.f32 %v362, %v5880
      %v5896 = vmul.f32 %v363, %v5887
      %v5897 = vmul.f32 %v364, %v5888
      %v5898 = vmul.f32 %v365, %v5889
      %v5899 = vmul.f32 %v3694, %v5886
      %v5900 = vmul.f32 %v367, %v5880
      %v5901 = vmul.f32 %v368, %v5887
      %v5902 = vmul.f32 %v369, %v5888
      %v5903 = vmul.f32 %v370, %v5889
      %v5904 = vmul.f32 %v3695, %v5886
      %v5905 = vmul.f32 %v372, %v5880
      %v5906 = vmul.f32 %v373, %v5887
      %v5907 = vmul.f32 %v374, %v5888
      %v5908 = vmul.f32 %v375, %v5889
      %v5909 = vmul.f32 %v3696, %v5886
      %v5925 = vrot.slane %v5895, 4
      %v5926 = vrot.slane %v5900, 4
      %v5927 = vsel %vm829, %v5925, %v5926
      %v5928 = vrot.slane %v5896, 4
      %v5929 = vrot.slane %v5901, 4
      %v5930 = vsel %vm829, %v5928, %v5929
      %v5931 = vrot.slane %v5897, 4
      %v5932 = vrot.slane %v5902, 4
      %v5933 = vsel %vm829, %v5931, %v5932
      %v5934 = vrot.slane %v5898, 4
      %v5935 = vrot.slane %v5903, 4
      %v5936 = vsel %vm829, %v5934, %v5935
      %v5937 = vrot.slane %v5899, 4
      %v5938 = vrot.slane %v5904, 4
      %v5939 = vsel %vm829, %v5937, %v5938
      %v5940 = vrot.slane %v5905, 4
      %v5941 = vsel %vm829, %v5926, %v5940
      %v5942 = vrot.slane %v5906, 4
      %v5943 = vsel %vm829, %v5929, %v5942
      %v5944 = vrot.slane %v5907, 4
      %v5945 = vsel %vm829, %v5932, %v5944
      %v5946 = vrot.slane %v5908, 4
      %v5947 = vsel %vm829, %v5935, %v5946
      %v5948 = vrot.slane %v5909, 4
      %v5949 = vsel %vm829, %v5938, %v5948
      %5950 = vrot.lane.b32.xlu0 %v5927, 64
      %v5951 = vpop.permute.xlu0 %5950
      %5952 = vrot.lane.b32.xlu0 %v5930, 64
      %v5953 = vpop.permute.xlu0 %5952
      %5954 = vrot.lane.b32.xlu0 %v5933, 64
      %v5955 = vpop.permute.xlu0 %5954
      %5956 = vrot.lane.b32.xlu0 %v5936, 64
      %v5957 = vpop.permute.xlu0 %5956
      %5958 = vrot.lane.b32.xlu0 %v5939, 64
      %v5959 = vpop.permute.xlu0 %5958
      %5960 = vrot.lane.b32.xlu0 %v5941, 64
      %v5961 = vpop.permute.xlu0 %5960
      %5962 = vrot.lane.b32.xlu0 %v5943, 64
      %v5963 = vpop.permute.xlu0 %5962
      %5964 = vrot.lane.b32.xlu0 %v5945, 64
      %v5965 = vpop.permute.xlu0 %5964
      %5966 = vrot.lane.b32.xlu0 %v5947, 64
      %v5967 = vpop.permute.xlu0 %5966
      %5968 = vrot.lane.b32.xlu0 %v5949, 64
      %v5969 = vpop.permute.xlu0 %5968
      %v5970 = vsel %vm1123, %v5951, %v5953
      %v5971 = vsel %vm1123, %v5953, %v5955
      %v5972 = vsel %vm1123, %v5955, %v5957
      %v5973 = vsel %vm1123, %v5957, %v5959
      %v5974 = vsel %vm1123, %v5961, %v5963
      %v5975 = vsel %vm1123, %v5963, %v5965
      %v5976 = vsel %vm1123, %v5965, %v5967
      %v5977 = vsel %vm1123, %v5967, %v5969
      %v5988 = vadd.f32 %v5850, %v5970
      %v5989 = vadd.f32 %v5851, %v5971
      %v5990 = vadd.f32 %v5852, %v5972
      %v5991 = vadd.f32 %v5853, %v5973
      %v5992 = vadd.f32 %v5854, %v5959
      %v5993 = vadd.f32 %v5855, %v5974
      %v5994 = vadd.f32 %v5856, %v5975
      %v5995 = vadd.f32 %v5857, %v5976
      %v5996 = vadd.f32 %v5858, %v5977
      %v5997 = vadd.f32 %v5859, %v5969
      %s5998 = scalar_lea.vmem %s3, 161
      %v5999 = vld [vmem:[%s5998] ss:$8 sm:$0xf]
      %v6001 = vlaneseq
      %v6002 = vshrl.u32 %v6001, 7
      %v6003 = vsub.s32 0, %v6002
      %v6004 = vrot.slane %v5999, %v6003
      %v6005 = vlaneseq
      %v6006 = vshrl.u32 %v6005, 7
      %v6007 = vsub.s32 1, %v6006
      %v6008 = vrot.slane %v5999, %v6007
      %v6009 = vlaneseq
      %v6010 = vshrl.u32 %v6009, 7
      %v6011 = vsub.s32 2, %v6010
      %v6012 = vrot.slane %v5999, %v6011
      %v6013 = vlaneseq
      %v6014 = vshrl.u32 %v6013, 7
      %v6015 = vsub.s32 3, %v6014
      %v6016 = vrot.slane %v5999, %v6015
      %6017 = vrot.lane.b32.xlu0 %v6004, 96
      %v6018 = vpop.permute.xlu0 %6017
      %6019 = vrot.lane.b32.xlu0 %v6008, 96
      %v6020 = vpop.permute.xlu0 %6019
      %6021 = vrot.lane.b32.xlu0 %v6012, 96
      %v6022 = vpop.permute.xlu0 %6021
      %6023 = vrot.lane.b32.xlu0 %v6016, 96
      %v6024 = vpop.permute.xlu0 %6023
      %v6025 = vsel %vm301, %v6018, %v6020
      %v6026 = vsel %vm301, %v6020, %v6022
      %v6027 = vsel %vm301, %v6022, %v6024
      %v6033 = vmul.f32 %v362, %v6018
      %v6034 = vmul.f32 %v363, %v6025
      %v6035 = vmul.f32 %v364, %v6026
      %v6036 = vmul.f32 %v365, %v6027
      %v6037 = vmul.f32 %v3694, %v6024
      %v6038 = vmul.f32 %v367, %v6018
      %v6039 = vmul.f32 %v368, %v6025
      %v6040 = vmul.f32 %v369, %v6026
      %v6041 = vmul.f32 %v370, %v6027
      %v6042 = vmul.f32 %v3695, %v6024
      %v6043 = vmul.f32 %v372, %v6018
      %v6044 = vmul.f32 %v373, %v6025
      %v6045 = vmul.f32 %v374, %v6026
      %v6046 = vmul.f32 %v375, %v6027
      %v6047 = vmul.f32 %v3696, %v6024
      %v6063 = vrot.slane %v6033, 5
      %v6064 = vrot.slane %v6038, 5
      %v6065 = vsel %vm324, %v6063, %v6064
      %v6066 = vrot.slane %v6034, 5
      %v6067 = vrot.slane %v6039, 5
      %v6068 = vsel %vm324, %v6066, %v6067
      %v6069 = vrot.slane %v6035, 5
      %v6070 = vrot.slane %v6040, 5
      %v6071 = vsel %vm324, %v6069, %v6070
      %v6072 = vrot.slane %v6036, 5
      %v6073 = vrot.slane %v6041, 5
      %v6074 = vsel %vm324, %v6072, %v6073
      %v6075 = vrot.slane %v6037, 5
      %v6076 = vrot.slane %v6042, 5
      %v6077 = vsel %vm324, %v6075, %v6076
      %v6078 = vrot.slane %v6043, 5
      %v6079 = vsel %vm324, %v6064, %v6078
      %v6080 = vrot.slane %v6044, 5
      %v6081 = vsel %vm324, %v6067, %v6080
      %v6082 = vrot.slane %v6045, 5
      %v6083 = vsel %vm324, %v6070, %v6082
      %v6084 = vrot.slane %v6046, 5
      %v6085 = vsel %vm324, %v6073, %v6084
      %v6086 = vrot.slane %v6047, 5
      %v6087 = vsel %vm324, %v6076, %v6086
      %6088 = vrot.lane.b32.xlu0 %v6065, 64
      %v6089 = vpop.permute.xlu0 %6088
      %6090 = vrot.lane.b32.xlu0 %v6068, 64
      %v6091 = vpop.permute.xlu0 %6090
      %6092 = vrot.lane.b32.xlu0 %v6071, 64
      %v6093 = vpop.permute.xlu0 %6092
      %6094 = vrot.lane.b32.xlu0 %v6074, 64
      %v6095 = vpop.permute.xlu0 %6094
      %6096 = vrot.lane.b32.xlu0 %v6077, 64
      %v6097 = vpop.permute.xlu0 %6096
      %6098 = vrot.lane.b32.xlu0 %v6079, 64
      %v6099 = vpop.permute.xlu0 %6098
      %6100 = vrot.lane.b32.xlu0 %v6081, 64
      %v6101 = vpop.permute.xlu0 %6100
      %6102 = vrot.lane.b32.xlu0 %v6083, 64
      %v6103 = vpop.permute.xlu0 %6102
      %6104 = vrot.lane.b32.xlu0 %v6085, 64
      %v6105 = vpop.permute.xlu0 %6104
      %6106 = vrot.lane.b32.xlu0 %v6087, 64
      %v6107 = vpop.permute.xlu0 %6106
      %v6108 = vsel %vm1123, %v6089, %v6091
      %v6109 = vsel %vm1123, %v6091, %v6093
      %v6110 = vsel %vm1123, %v6093, %v6095
      %v6111 = vsel %vm1123, %v6095, %v6097
      %v6112 = vsel %vm1123, %v6099, %v6101
      %v6113 = vsel %vm1123, %v6101, %v6103
      %v6114 = vsel %vm1123, %v6103, %v6105
      %v6115 = vsel %vm1123, %v6105, %v6107
      %v6126 = vadd.f32 %v5988, %v6108
      %v6127 = vadd.f32 %v5989, %v6109
      %v6128 = vadd.f32 %v5990, %v6110
      %v6129 = vadd.f32 %v5991, %v6111
      %v6130 = vadd.f32 %v5992, %v6097
      %v6131 = vadd.f32 %v5993, %v6112
      %v6132 = vadd.f32 %v5994, %v6113
      %v6133 = vadd.f32 %v5995, %v6114
      %v6134 = vadd.f32 %v5996, %v6115
      %v6135 = vadd.f32 %v5997, %v6107
      %s6136 = scalar_lea.vmem %s3, 192
      %v6137 = vld [vmem:[%s6136] ss:$8 sm:$0xf]
      %v6139 = vlaneseq
      %v6140 = vshrl.u32 %v6139, 7
      %v6141 = vsub.s32 0, %v6140
      %v6142 = vrot.slane %v6137, %v6141
      %v6143 = vlaneseq
      %v6144 = vshrl.u32 %v6143, 7
      %v6145 = vsub.s32 1, %v6144
      %v6146 = vrot.slane %v6137, %v6145
      %v6147 = vlaneseq
      %v6148 = vshrl.u32 %v6147, 7
      %v6149 = vsub.s32 2, %v6148
      %v6150 = vrot.slane %v6137, %v6149
      %v6151 = vlaneseq
      %v6152 = vshrl.u32 %v6151, 7
      %v6153 = vsub.s32 3, %v6152
      %v6154 = vrot.slane %v6137, %v6153
      %6155 = vrot.lane.b32.xlu0 %v6142, 96
      %v6156 = vpop.permute.xlu0 %6155
      %6157 = vrot.lane.b32.xlu0 %v6146, 96
      %v6158 = vpop.permute.xlu0 %6157
      %6159 = vrot.lane.b32.xlu0 %v6150, 96
      %v6160 = vpop.permute.xlu0 %6159
      %6161 = vrot.lane.b32.xlu0 %v6154, 96
      %v6162 = vpop.permute.xlu0 %6161
      %v6163 = vsel %vm301, %v6156, %v6158
      %v6164 = vsel %vm301, %v6158, %v6160
      %v6165 = vsel %vm301, %v6160, %v6162
      %v6171 = vmul.f32 %v362, %v6156
      %v6172 = vmul.f32 %v363, %v6163
      %v6173 = vmul.f32 %v364, %v6164
      %v6174 = vmul.f32 %v365, %v6165
      %v6175 = vmul.f32 %v3694, %v6162
      %v6176 = vmul.f32 %v367, %v6156
      %v6177 = vmul.f32 %v368, %v6163
      %v6178 = vmul.f32 %v369, %v6164
      %v6179 = vmul.f32 %v370, %v6165
      %v6180 = vmul.f32 %v3695, %v6162
      %v6181 = vmul.f32 %v372, %v6156
      %v6182 = vmul.f32 %v373, %v6163
      %v6183 = vmul.f32 %v374, %v6164
      %v6184 = vmul.f32 %v375, %v6165
      %v6185 = vmul.f32 %v3696, %v6162
      %v6201 = vrot.slane %v6171, 6
      %v6202 = vrot.slane %v6176, 6
      %v6203 = vsel %vm1050, %v6201, %v6202
      %v6204 = vrot.slane %v6172, 6
      %v6205 = vrot.slane %v6177, 6
      %v6206 = vsel %vm1050, %v6204, %v6205
      %v6207 = vrot.slane %v6173, 6
      %v6208 = vrot.slane %v6178, 6
      %v6209 = vsel %vm1050, %v6207, %v6208
      %v6210 = vrot.slane %v6174, 6
      %v6211 = vrot.slane %v6179, 6
      %v6212 = vsel %vm1050, %v6210, %v6211
      %v6213 = vrot.slane %v6175, 6
      %v6214 = vrot.slane %v6180, 6
      %v6215 = vsel %vm1050, %v6213, %v6214
      %v6216 = vrot.slane %v6181, 6
      %v6217 = vsel %vm1050, %v6202, %v6216
      %v6218 = vrot.slane %v6182, 6
      %v6219 = vsel %vm1050, %v6205, %v6218
      %v6220 = vrot.slane %v6183, 6
      %v6221 = vsel %vm1050, %v6208, %v6220
      %v6222 = vrot.slane %v6184, 6
      %v6223 = vsel %vm1050, %v6211, %v6222
      %v6224 = vrot.slane %v6185, 6
      %v6225 = vsel %vm1050, %v6214, %v6224
      %6226 = vrot.lane.b32.xlu0 %v6203, 64
      %v6227 = vpop.permute.xlu0 %6226
      %6228 = vrot.lane.b32.xlu0 %v6206, 64
      %v6229 = vpop.permute.xlu0 %6228
      %6230 = vrot.lane.b32.xlu0 %v6209, 64
      %v6231 = vpop.permute.xlu0 %6230
      %6232 = vrot.lane.b32.xlu0 %v6212, 64
      %v6233 = vpop.permute.xlu0 %6232
      %6234 = vrot.lane.b32.xlu0 %v6215, 64
      %v6235 = vpop.permute.xlu0 %6234
      %6236 = vrot.lane.b32.xlu0 %v6217, 64
      %v6237 = vpop.permute.xlu0 %6236
      %6238 = vrot.lane.b32.xlu0 %v6219, 64
      %v6239 = vpop.permute.xlu0 %6238
      %6240 = vrot.lane.b32.xlu0 %v6221, 64
      %v6241 = vpop.permute.xlu0 %6240
      %6242 = vrot.lane.b32.xlu0 %v6223, 64
      %v6243 = vpop.permute.xlu0 %6242
      %6244 = vrot.lane.b32.xlu0 %v6225, 64
      %v6245 = vpop.permute.xlu0 %6244
      %v6246 = vsel %vm1123, %v6227, %v6229
      %v6247 = vsel %vm1123, %v6229, %v6231
      %v6248 = vsel %vm1123, %v6231, %v6233
      %v6249 = vsel %vm1123, %v6233, %v6235
      %v6250 = vsel %vm1123, %v6237, %v6239
      %v6251 = vsel %vm1123, %v6239, %v6241
      %v6252 = vsel %vm1123, %v6241, %v6243
      %v6253 = vsel %vm1123, %v6243, %v6245
      %v6264 = vadd.f32 %v6126, %v6246
      %v6265 = vadd.f32 %v6127, %v6247
      %v6266 = vadd.f32 %v6128, %v6248
      %v6267 = vadd.f32 %v6129, %v6249
      %v6268 = vadd.f32 %v6130, %v6235
      %v6269 = vadd.f32 %v6131, %v6250
      %v6270 = vadd.f32 %v6132, %v6251
      %v6271 = vadd.f32 %v6133, %v6252
      %v6272 = vadd.f32 %v6134, %v6253
      %v6273 = vadd.f32 %v6135, %v6245
      %v6274 = vld [vmem:[%s4] sm:$0xff]
      %v6275 = vld [vmem:[%s4 + $0x8] sm:$0xff]
      %v6276 = vld [vmem:[%s4 + $0x10] sm:$0xff]
      %v6277 = vld [vmem:[%s4 + $0x18] sm:$0xff]
      %v6278 = vld [vmem:[%s4 + $0x20] sm:$0xff]
      %v6279 = vld [vmem:[%s4 + $0x28] sm:$0xff]
      %v6280 = vld [vmem:[%s4 + $0x30] sm:$0xff]
      %v6281 = vld [vmem:[%s4 + $0x38] sm:$0xff]
      %v6282 = vld [vmem:[%s4 + $0x40] sm:$0xff]
      %v6283 = vld [vmem:[%s4 + $0x48] sm:$0xff]
      %v6284 = vld [vmem:[%s4 + $0x50] sm:$0xff]
      %v6285 = vld [vmem:[%s4 + $0x58] sm:$0xff]
      %v6286 = vld [vmem:[%s4 + $0x60] sm:$0xff]
      %v6287 = vld [vmem:[%s4 + $0x68] sm:$0xff]
      %v6288 = vld [vmem:[%s4 + $0x70] sm:$0xff]
      %v6289 = vld [vmem:[%s4 + $0x78] sm:$0xff]
      %v6290 = vld [vmem:[%s4 + $0x80] sm:$0xff]
      %v6291 = vld [vmem:[%s4 + $0x88] sm:$0xff]
      %v6292 = vld [vmem:[%s4 + $0x90] sm:$0xff]
      %v6293 = vld [vmem:[%s4 + $0x98] sm:$0xff]
      %v6294 = vld [vmem:[%s4 + $0xa0] sm:$0xff]
      %v6295 = vld [vmem:[%s4 + $0xa8] sm:$0xff]
      %v6296 = vld [vmem:[%s4 + $0xb0] sm:$0xff]
      %v6297 = vld [vmem:[%s4 + $0xb8] sm:$0xff]
      %v6298 = vld [vmem:[%s4 + $0xc0] sm:$0xff]
      %v6299 = vld [vmem:[%s4 + $0xc8] sm:$0xff]
      %v6300 = vld [vmem:[%s4 + $0xd0] sm:$0xff]
      %v6301 = vld [vmem:[%s4 + $0xd8] sm:$0xff]
      %v6302 = vld [vmem:[%s4 + $0xe0] sm:$0xff]
      %v6303 = vld [vmem:[%s4 + $0xe8] sm:$0xff]
      %v6304 = vld [vmem:[%s4 + $0xf0] sm:$0xff]
      %v6305 = vld [vmem:[%s4 + $0xf8] sm:$0xff]
      %v6306 = vld [vmem:[%s4 + $0x100] sm:$0xff]
      %v6307 = vld [vmem:[%s4 + $0x108] sm:$0xff]
      %v6308 = vld [vmem:[%s4 + $0x110] sm:$0xff]
      %v6309 = vld [vmem:[%s4 + $0x118] sm:$0xff]
      %v6310 = vld [vmem:[%s4 + $0x120] sm:$0xff]
      %v6311 = vld [vmem:[%s4 + $0x128] sm:$0xff]
      %v6312 = vld [vmem:[%s4 + $0x130] sm:$0xff]
      %v6313 = vld [vmem:[%s4 + $0x138] sm:$0xff]
      %v6314 = vld [vmem:[%s4 + $0x140] sm:$0xff]
      %v6315 = vld [vmem:[%s4 + $0x148] sm:$0xff]
      %v6316 = vld [vmem:[%s4 + $0x150] sm:$0xff]
      %v6317 = vld [vmem:[%s4 + $0x158] sm:$0xff]
      %v6318 = vld [vmem:[%s4 + $0x160] sm:$0xff]
      %v6319 = vld [vmem:[%s4 + $0x168] sm:$0xff]
      %v6320 = vld [vmem:[%s4 + $0x170] sm:$0xff]
      %v6321 = vld [vmem:[%s4 + $0x178] sm:$0xff]
      %v6322 = vld [vmem:[%s4 + $0x180] sm:$0xff]
      %v6323 = vld [vmem:[%s4 + $0x188] sm:$0xff]
      %v6324 = vld [vmem:[%s4 + $0x190] sm:$0xff]
      %v6325 = vld [vmem:[%s4 + $0x198] sm:$0xff]
      %v6326 = vld [vmem:[%s4 + $0x1a0] sm:$0xff]
      %v6327 = vld [vmem:[%s4 + $0x1a8] sm:$0xff]
      %v6328 = vld [vmem:[%s4 + $0x1b0] sm:$0xff]
      %v6329 = vld [vmem:[%s4 + $0x1b8] sm:$0xff]
      %v6330 = vld [vmem:[%s4 + $0x1c0] sm:$0xff]
      %v6331 = vld [vmem:[%s4 + $0x1c8] sm:$0xff]
      %v6332 = vld [vmem:[%s4 + $0x1d0] sm:$0xff]
      %v6333 = vld [vmem:[%s4 + $0x1d8] sm:$0xff]
      %v6334 = vld [vmem:[%s4 + $0x1e0] sm:$0xff]
      %v6335 = vld [vmem:[%s4 + $0x1e8] sm:$0xff]
      %v6336 = vld [vmem:[%s4 + $0x1f0] sm:$0xff]
      %v6337 = vld [vmem:[%s4 + $0x1f8] sm:$0xff]
      %s6338 = sld [smem:[#allocation4]]
      %v6339 = vstv %s6338
      %6350 = vrot.lane.b32.xlu0 %v6264, 96
      %v6351 = vpop.permute.xlu0 %6350
      %6352 = vrot.lane.b32.xlu0 %v6265, 96
      %v6353 = vpop.permute.xlu0 %6352
      %6354 = vrot.lane.b32.xlu0 %v6266, 96
      %v6355 = vpop.permute.xlu0 %6354
      %6356 = vrot.lane.b32.xlu0 %v6267, 96
      %v6357 = vpop.permute.xlu0 %6356
      %6358 = vrot.lane.b32.xlu0 %v6268, 96
      %v6359 = vpop.permute.xlu0 %6358
      %6360 = vrot.lane.b32.xlu0 %v6269, 96
      %v6361 = vpop.permute.xlu0 %6360
      %6362 = vrot.lane.b32.xlu0 %v6270, 96
      %v6363 = vpop.permute.xlu0 %6362
      %6364 = vrot.lane.b32.xlu0 %v6271, 96
      %v6365 = vpop.permute.xlu0 %6364
      %6366 = vrot.lane.b32.xlu0 %v6272, 96
      %v6367 = vpop.permute.xlu0 %6366
      %6368 = vrot.lane.b32.xlu0 %v6273, 96
      %v6369 = vpop.permute.xlu0 %6368
      %v6370 = vsel %vm301, %v6351, %v6353
      %v6371 = vsel %vm301, %v6353, %v6355
      %v6372 = vsel %vm301, %v6355, %v6357
      %v6373 = vsel %vm301, %v6357, %v6359
      %v6374 = vsel %vm301, %v6361, %v6363
      %v6375 = vsel %vm301, %v6363, %v6365
      %v6376 = vsel %vm301, %v6365, %v6367
      %v6377 = vsel %vm301, %v6367, %v6369
      %6386 = vmatprep.subr.mxu0 0.0
      %6387 = vmatpush1.msra.mxu0 %v6274
      %6388 = vmatprep.subr.mxu0 0.0
      %6389 = vmatpush1.msra.mxu0 %v6275
      %6390 = vmatprep.subr.mxu0 0.0
      %6391 = vmatpush1.msra.mxu0 %v6276
      %6392 = vmatprep.subr.mxu0 0.0
      %6393 = vmatpush1.msra.mxu0 %v6277
      %6394 = vmatprep.subr.mxu0 0.0
      %6395 = vmatpush1.msra.mxu0 %v6278
      %6396 = vmatprep.subr.mxu0 0.0
      %6397 = vmatpush1.msra.mxu0 %v6279
      %6398 = vmatprep.subr.mxu0 0.0
      %6399 = vmatpush1.msra.mxu0 %v6280
      %6400 = vmatprep.subr.mxu0 0.0
      %6401 = vmatpush1.msra.mxu0 %v6281
      %6402 = vmatprep.subr.mxu0 0.0
      %6403 = vmatpush1.msra.mxu0 %v6282
      %6404 = vmatprep.subr.mxu0 0.0
      %6405 = vmatpush1.msra.mxu0 %v6283
      %6406 = vmatprep.subr.mxu0 0.0
      %6407 = vmatpush1.msra.mxu0 %v6284
      %6408 = vmatprep.subr.mxu0 0.0
      %6409 = vmatpush1.msra.mxu0 %v6285
      %6410 = vmatprep.subr.mxu0 0.0
      %6411 = vmatpush1.msra.mxu0 %v6286
      %6412 = vmatprep.subr.mxu0 0.0
      %6413 = vmatpush1.msra.mxu0 %v6287
      %6414 = vmatprep.subr.mxu0 0.0
      %6415 = vmatpush1.msra.mxu0 %v6288
      %6416 = vmatprep.subr.mxu0 0.0
      %6417 = vmatpush1.msra.mxu0 %v6289
      %6418 = vmatprep.subr.mxu0 0.0
      %6419 = vmatpush1.msra.mxu0 %v6290
      %6420 = vmatprep.subr.mxu0 0.0
      %6421 = vmatpush1.msra.mxu0 %v6291
      %6422 = vmatprep.subr.mxu0 0.0
      %6423 = vmatpush1.msra.mxu0 %v6292
      %6424 = vmatprep.subr.mxu0 0.0
      %6425 = vmatpush1.msra.mxu0 %v6293
      %6426 = vmatprep.subr.mxu0 0.0
      %6427 = vmatpush1.msra.mxu0 %v6294
      %6428 = vmatprep.subr.mxu0 0.0
      %6429 = vmatpush1.msra.mxu0 %v6295
      %6430 = vmatprep.subr.mxu0 0.0
      %6431 = vmatpush1.msra.mxu0 %v6296
      %6432 = vmatprep.subr.mxu0 0.0
      %6433 = vmatpush1.msra.mxu0 %v6297
      %6434 = vmatprep.subr.mxu0 0.0
      %6435 = vmatpush1.msra.mxu0 %v6298
      %6436 = vmatprep.subr.mxu0 0.0
      %6437 = vmatpush1.msra.mxu0 %v6299
      %6438 = vmatprep.subr.mxu0 0.0
      %6439 = vmatpush1.msra.mxu0 %v6300
      %6440 = vmatprep.subr.mxu0 0.0
      %6441 = vmatpush1.msra.mxu0 %v6301
      %6442 = vmatprep.subr.mxu0 0.0
      %6443 = vmatpush1.msra.mxu0 %v6302
      %6444 = vmatprep.subr.mxu0 0.0
      %6445 = vmatpush1.msra.mxu0 %v6303
      %6446 = vmatprep.subr.mxu0 0.0
      %6447 = vmatpush1.msra.mxu0 %v6304
      %6448 = vmatprep.subr.mxu0 0.0
      %6449 = vmatpush1.msra.mxu0 %v6305
      %6450 = vmatprep.mubr.f32.mxu0 %v6371
      %6451 = vmatmul.mubr.f32.gmra.mrb[0].mxu0 %v6370
      %v6452 = vpop.f32.mrb[0].mxu0
      %v6453 = vadd.f32 %v6339, %v6452
      %v6454 = vpop.f32.mrb[0].mxu0
      %6455 = vmatprep.mubr.f32.mxu0 %v6375
      %6456 = vmatmul.mubr.f32.gmra.mrb[0].mxu0 %v6374
      %v6457 = vpop.f32.mrb[0].mxu0
      %v6458 = vadd.f32 %v6339, %v6457
      %v6459 = vpop.f32.mrb[0].mxu0
      %6460 = vdwg.mxu0
      %6461 = vmatprep.subr.mxu0 0.0
      %6462 = vmatpush1.msra.mxu0 %v6306
      %6463 = vmatprep.subr.mxu0 0.0
      %6464 = vmatpush1.msra.mxu0 %v6307
      %6465 = vmatprep.subr.mxu0 0.0
      %6466 = vmatpush1.msra.mxu0 %v6308
      %6467 = vmatprep.subr.mxu0 0.0
      %6468 = vmatpush1.msra.mxu0 %v6309
      %6469 = vmatprep.subr.mxu0 0.0
      %6470 = vmatpush1.msra.mxu0 %v6310
      %6471 = vmatprep.subr.mxu0 0.0
      %6472 = vmatpush1.msra.mxu0 %v6311
      %6473 = vmatprep.subr.mxu0 0.0
      %6474 = vmatpush1.msra.mxu0 %v6312
      %6475 = vmatprep.subr.mxu0 0.0
      %6476 = vmatpush1.msra.mxu0 %v6313
      %6477 = vmatprep.subr.mxu0 0.0
      %6478 = vmatpush1.msra.mxu0 %v6314
      %6479 = vmatprep.subr.mxu0 0.0
      %6480 = vmatpush1.msra.mxu0 %v6315
      %6481 = vmatprep.subr.mxu0 0.0
      %6482 = vmatpush1.msra.mxu0 %v6316
      %6483 = vmatprep.subr.mxu0 0.0
      %6484 = vmatpush1.msra.mxu0 %v6317
      %6485 = vmatprep.subr.mxu0 0.0
      %6486 = vmatpush1.msra.mxu0 %v6318
      %6487 = vmatprep.subr.mxu0 0.0
      %6488 = vmatpush1.msra.mxu0 %v6319
      %6489 = vmatprep.subr.mxu0 0.0
      %6490 = vmatpush1.msra.mxu0 %v6320
      %6491 = vmatprep.subr.mxu0 0.0
      %6492 = vmatpush1.msra.mxu0 %v6321
      %6493 = vmatprep.subr.mxu0 0.0
      %6494 = vmatpush1.msra.mxu0 %v6322
      %6495 = vmatprep.subr.mxu0 0.0
      %6496 = vmatpush1.msra.mxu0 %v6323
      %6497 = vmatprep.subr.mxu0 0.0
      %6498 = vmatpush1.msra.mxu0 %v6324
      %6499 = vmatprep.subr.mxu0 0.0
      %6500 = vmatpush1.msra.mxu0 %v6325
      %6501 = vmatprep.subr.mxu0 0.0
      %6502 = vmatpush1.msra.mxu0 %v6326
      %6503 = vmatprep.subr.mxu0 0.0
      %6504 = vmatpush1.msra.mxu0 %v6327
      %6505 = vmatprep.subr.mxu0 0.0
      %6506 = vmatpush1.msra.mxu0 %v6328
      %6507 = vmatprep.subr.mxu0 0.0
      %6508 = vmatpush1.msra.mxu0 %v6329
      %6509 = vmatprep.subr.mxu0 0.0
      %6510 = vmatpush1.msra.mxu0 %v6330
      %6511 = vmatprep.subr.mxu0 0.0
      %6512 = vmatpush1.msra.mxu0 %v6331
      %6513 = vmatprep.subr.mxu0 0.0
      %6514 = vmatpush1.msra.mxu0 %v6332
      %6515 = vmatprep.subr.mxu0 0.0
      %6516 = vmatpush1.msra.mxu0 %v6333
      %6517 = vmatprep.subr.mxu0 0.0
      %6518 = vmatpush1.msra.mxu0 %v6334
      %6519 = vmatprep.subr.mxu0 0.0
      %6520 = vmatpush1.msra.mxu0 %v6335
      %6521 = vmatprep.subr.mxu0 0.0
      %6522 = vmatpush1.msra.mxu0 %v6336
      %6523 = vmatprep.subr.mxu0 0.0
      %6524 = vmatpush1.msra.mxu0 %v6337
      %6525 = vmatprep.mubr.f32.mxu0 %v6373
      %6526 = vmatmul.mubr.f32.gmra.mrb[0].mxu0 %v6372
      %v6527 = vpop.f32.mrb[0].mxu0
      %v6528 = vadd.f32 %v6453, %v6527
      %v6529 = vpop.f32.mrb[0].mxu0
      %6530 = vmatprep.mubr.f32.mxu0 %v6377
      %6531 = vmatmul.mubr.f32.gmra.mrb[0].mxu0 %v6376
      %v6532 = vpop.f32.mrb[0].mxu0
      %v6533 = vadd.f32 %v6458, %v6532
      %v6534 = vpop.f32.mrb[0].mxu0
      %6535 = vdwg.mxu0
      %v6536 = vxor.u32 %v6528, 2147483648
      %v6537 = vxor.u32 %v6533, 2147483648
      %v6538 = vmul.f32 %v6536, 1.442695
      %v6539 = vpow.pop %v6538
      %v6540 = vmul.f32 %v6537, 1.442695
      %v6541 = vpow.pop %v6540
      %v6542 = vadd.f32 %v6539, 1.0
      %v6543 = vadd.f32 %v6541, 1.0
      %v6544 = vrcp.pop %v6542
      %v6545 = vmul.f32 1.0, %v6544
      %v6546 = vrcp.pop %v6543
      %v6547 = vmul.f32 1.0, %v6546
      %v6548 = vld [vmem:[%s5] sm:$0xff]
      %v6549 = vld [vmem:[%s5 + $0x8] sm:$0xff]
      %v6550 = vld [vmem:[%s5 + $0x10] sm:$0xff]
      %v6551 = vld [vmem:[%s5 + $0x18] sm:$0xff]
      %v6552 = vld [vmem:[%s5 + $0x20] sm:$0xff]
      %v6553 = vld [vmem:[%s5 + $0x28] sm:$0xff]
      %v6554 = vld [vmem:[%s5 + $0x30] sm:$0xff]
      %v6555 = vld [vmem:[%s5 + $0x38] sm:$0xff]
      %vm6556 = vcmask 130048
      %v6558 = vsel %vm6556, %v6545, 0
      %v6561 = vsel %vm6556, %v6547, 0
      %6563 = vmatprep.subr.mxu0 %v6549
      %6564 = vmatpush1.msra.mxu0 %v6548
      %6565 = vmatprep.subr.mxu0 %v6553
      %6566 = vmatpush1.msra.mxu0 %v6552
      %6567 = vmatprep.subr.mxu0 0.0
      %6568 = vmatpush1.msra.mxu0 0.0
      %6569 = vmatprep.subr.mxu0 0.0
      %6570 = vmatpush1.msra.mxu0 0.0
      %6571 = vmatprep.subr.mxu0 0.0
      %6572 = vmatpush1.msra.mxu0 0.0
      %6573 = vmatprep.subr.mxu0 0.0
      %6574 = vmatpush1.msra.mxu0 0.0
      %6575 = vmatprep.subr.mxu0 0.0
      %6576 = vmatpush1.msra.mxu0 0.0
      %6577 = vmatprep.subr.mxu0 0.0
      %6578 = vmatpush1.msra.mxu0 0.0
      %6579 = vmatprep.subr.mxu0 0.0
      %6580 = vmatpush1.msra.mxu0 0.0
      %6581 = vmatprep.subr.mxu0 0.0
      %6582 = vmatpush1.msra.mxu0 0.0
      %6583 = vmatprep.subr.mxu0 0.0
      %6584 = vmatpush1.msra.mxu0 0.0
      %6585 = vmatprep.subr.mxu0 0.0
      %6586 = vmatpush1.msra.mxu0 0.0
      %6587 = vmatprep.subr.mxu0 0.0
      %6588 = vmatpush1.msra.mxu0 0.0
      %6589 = vmatprep.subr.mxu0 0.0
      %6590 = vmatpush1.msra.mxu0 0.0
      %6591 = vmatprep.subr.mxu0 0.0
      %6592 = vmatpush1.msra.mxu0 0.0
      %6593 = vmatprep.subr.mxu0 0.0
      %6594 = vmatpush1.msra.mxu0 0.0
      %6595 = vmatprep.subr.mxu0 0.0
      %6596 = vmatpush1.msra.mxu0 0.0
      %6597 = vmatprep.subr.mxu0 0.0
      %6598 = vmatpush1.msra.mxu0 0.0
      %6599 = vmatprep.subr.mxu0 0.0
      %6600 = vmatpush1.msra.mxu0 0.0
      %6601 = vmatprep.subr.mxu0 0.0
      %6602 = vmatpush1.msra.mxu0 0.0
      %6603 = vmatprep.subr.mxu0 0.0
      %6604 = vmatpush1.msra.mxu0 0.0
      %6605 = vmatprep.subr.mxu0 0.0
      %6606 = vmatpush1.msra.mxu0 0.0
      %6607 = vmatprep.subr.mxu0 0.0
      %6608 = vmatpush1.msra.mxu0 0.0
      %6609 = vmatprep.subr.mxu0 0.0
      %6610 = vmatpush1.msra.mxu0 0.0
      %6611 = vmatprep.subr.mxu0 0.0
      %6612 = vmatpush1.msra.mxu0 0.0
      %6613 = vmatprep.subr.mxu0 0.0
      %6614 = vmatpush1.msra.mxu0 0.0
      %6615 = vmatprep.subr.mxu0 0.0
      %6616 = vmatpush1.msra.mxu0 0.0
      %6617 = vmatprep.subr.mxu0 0.0
      %6618 = vmatpush1.msra.mxu0 0.0
      %6619 = vmatprep.subr.mxu0 0.0
      %6620 = vmatpush1.msra.mxu0 0.0
      %6621 = vmatprep.subr.mxu0 0.0
      %6622 = vmatpush1.msra.mxu0 0.0
      %6623 = vmatprep.subr.mxu0 0.0
      %6624 = vmatpush1.msra.mxu0 0.0
      %6625 = vmatprep.subr.mxu0 0.0
      %6626 = vmatpush1.msra.mxu0 0.0
      %6627 = vmatprep.mubr.f32.mxu0 0.0
      %6628 = vmatmul.mubr.f32.gmra.mrb[0].mxu0 %v6558
      %v6629 = vpop.f32.mrb[0].mxu0
      %v6630 = vadd.f32 0.0, %v6629
      %v6631 = vpop.f32.mrb[0].mxu0
      %v6632 = vadd.f32 0.0, %v6631
      %6633 = vmatprep.mubr.f32.mxu0 0.0
      %6634 = vmatmul.mubr.f32.gmra.mrb[0].mxu0 %v6561
      %v6635 = vpop.f32.mrb[0].mxu0
      %v6636 = vadd.f32 0.0, %v6635
      %v6637 = vpop.f32.mrb[0].mxu0
      %v6638 = vadd.f32 0.0, %v6637
      %6639 = vdwg.mxu0
      %6640 = vmatprep.subr.mxu0 %v6551
      %6641 = vmatpush1.msra.mxu0 %v6550
      %6642 = vmatprep.subr.mxu0 %v6555
      %6643 = vmatpush1.msra.mxu0 %v6554
      %6644 = vmatprep.subr.mxu0 0.0
      %6645 = vmatpush1.msra.mxu0 0.0
      %6646 = vmatprep.subr.mxu0 0.0
      %6647 = vmatpush1.msra.mxu0 0.0
      %6648 = vmatprep.subr.mxu0 0.0
      %6649 = vmatpush1.msra.mxu0 0.0
      %6650 = vmatprep.subr.mxu0 0.0
      %6651 = vmatpush1.msra.mxu0 0.0
      %6652 = vmatprep.subr.mxu0 0.0
      %6653 = vmatpush1.msra.mxu0 0.0
      %6654 = vmatprep.subr.mxu0 0.0
      %6655 = vmatpush1.msra.mxu0 0.0
      %6656 = vmatprep.subr.mxu0 0.0
      %6657 = vmatpush1.msra.mxu0 0.0
      %6658 = vmatprep.subr.mxu0 0.0
      %6659 = vmatpush1.msra.mxu0 0.0
      %6660 = vmatprep.subr.mxu0 0.0
      %6661 = vmatpush1.msra.mxu0 0.0
      %6662 = vmatprep.subr.mxu0 0.0
      %6663 = vmatpush1.msra.mxu0 0.0
      %6664 = vmatprep.subr.mxu0 0.0
      %6665 = vmatpush1.msra.mxu0 0.0
      %6666 = vmatprep.subr.mxu0 0.0
      %6667 = vmatpush1.msra.mxu0 0.0
      %6668 = vmatprep.subr.mxu0 0.0
      %6669 = vmatpush1.msra.mxu0 0.0
      %6670 = vmatprep.subr.mxu0 0.0
      %6671 = vmatpush1.msra.mxu0 0.0
      %6672 = vmatprep.subr.mxu0 0.0
      %6673 = vmatpush1.msra.mxu0 0.0
      %6674 = vmatprep.subr.mxu0 0.0
      %6675 = vmatpush1.msra.mxu0 0.0
      %6676 = vmatprep.subr.mxu0 0.0
      %6677 = vmatpush1.msra.mxu0 0.0
      %6678 = vmatprep.subr.mxu0 0.0
      %6679 = vmatpush1.msra.mxu0 0.0
      %6680 = vmatprep.subr.mxu0 0.0
      %6681 = vmatpush1.msra.mxu0 0.0
      %6682 = vmatprep.subr.mxu0 0.0
      %6683 = vmatpush1.msra.mxu0 0.0
      %6684 = vmatprep.subr.mxu0 0.0
      %6685 = vmatpush1.msra.mxu0 0.0
      %6686 = vmatprep.subr.mxu0 0.0
      %6687 = vmatpush1.msra.mxu0 0.0
      %6688 = vmatprep.subr.mxu0 0.0
      %6689 = vmatpush1.msra.mxu0 0.0
      %6690 = vmatprep.subr.mxu0 0.0
      %6691 = vmatpush1.msra.mxu0 0.0
      %6692 = vmatprep.subr.mxu0 0.0
      %6693 = vmatpush1.msra.mxu0 0.0
      %6694 = vmatprep.subr.mxu0 0.0
      %6695 = vmatpush1.msra.mxu0 0.0
      %6696 = vmatprep.subr.mxu0 0.0
      %6697 = vmatpush1.msra.mxu0 0.0
      %6698 = vmatprep.subr.mxu0 0.0
      %6699 = vmatpush1.msra.mxu0 0.0
      %6700 = vmatprep.subr.mxu0 0.0
      %6701 = vmatpush1.msra.mxu0 0.0
      %6702 = vmatprep.subr.mxu0 0.0
      %6703 = vmatpush1.msra.mxu0 0.0
      %6704 = vmatprep.mubr.f32.mxu0 0.0
      %6705 = vmatmul.mubr.f32.gmra.mrb[0].mxu0 %v6558
      %v6706 = vpop.f32.mrb[0].mxu0
      %v6707 = vadd.f32 0.0, %v6706
      %v6708 = vpop.f32.mrb[0].mxu0
      %v6709 = vadd.f32 0.0, %v6708
      %6710 = vmatprep.mubr.f32.mxu0 0.0
      %6711 = vmatmul.mubr.f32.gmra.mrb[0].mxu0 %v6561
      %v6712 = vpop.f32.mrb[0].mxu0
      %v6713 = vadd.f32 0.0, %v6712
      %v6714 = vpop.f32.mrb[0].mxu0
      %v6715 = vadd.f32 0.0, %v6714
      %6716 = vdwg.mxu0
      %v6717 = vld [vmem:[%s8] sm:$0xf]
      %v6718 = vld [vmem:[%s6] ss:$2 sm:$0xf]
      %v6720 = vlaneseq
      %v6721 = vshrl.u32 %v6720, 7
      %v6722 = vsub.s32 0, %v6721
      %v6723 = vrot.slane %v6718, %v6722
      %v6724 = vlaneseq
      %v6725 = vshrl.u32 %v6724, 7
      %v6726 = vsub.s32 1, %v6725
      %v6727 = vrot.slane %v6718, %v6726
      %v6728 = vlaneseq
      %v6729 = vshrl.u32 %v6728, 7
      %v6730 = vsub.s32 2, %v6729
      %v6731 = vrot.slane %v6718, %v6730
      %v6732 = vlaneseq
      %v6733 = vshrl.u32 %v6732, 7
      %v6734 = vsub.s32 3, %v6733
      %v6735 = vrot.slane %v6718, %v6734
      %v6740 = vmul.f32 %v288, %v6723
      %v6741 = vmul.f32 %v289, %v6727
      %v6742 = vmul.f32 %v290, %v6731
      %v6743 = vmul.f32 %v291, %v6735
      %v6744 = vmul.f32 %v292, %v6723
      %v6745 = vmul.f32 %v293, %v6727
      %v6746 = vmul.f32 %v294, %v6731
      %v6747 = vmul.f32 %v295, %v6735
      %v6748 = vadd.f32 %v6740, %v6741
      %v6749 = vadd.f32 %v6748, %v6742
      %v6750 = vadd.f32 %v6749, %v6743
      %v6751 = vadd.f32 %v6750, %v6744
      %v6752 = vadd.f32 %v6751, %v6745
      %v6753 = vadd.f32 %v6752, %v6746
      %v6754 = vadd.f32 %v6753, %v6747
      %6755 = vadd.xlane.f32.xlu0 %v6754
      %v6756 = vpop.xlane.xlu0 %6755
      %v6757 = vrot.slane %v6756, 4
      %v6758 = vadd.f32 %v6756, %v6757
      %v6759 = vrot.slane %v6758, 2
      %v6760 = vadd.f32 %v6758, %v6759
      %v6761 = vrot.slane %v6760, 1
      %v6762 = vadd.f32 %v6760, %v6761
      %s6763 = vtos %v6762
      %s6764 = smul.f32 %s6763, 0.00390625
      %s6765 = sld [smem:[#allocation5]]
      %s6766 = sadd.f32 %s6764, %s6765
      %s6767 = smax.f32 %s6766, 0.0
      %v6768 = vld [vmem:[%s7] ss:$2 sm:$0xf]
      %v6769 = vstv %s6767
      %v6770 = vmul.f32 %v6769, %v6768
      %v6771 = vadd.f32 %v6717, %v6770
      %s6772 = scalar_lea.vmem %s6, 1
      %v6773 = vld [vmem:[%s6772] ss:$2 sm:$0xf]
      %v6775 = vlaneseq
      %v6776 = vshrl.u32 %v6775, 7
      %v6777 = vsub.s32 0, %v6776
      %v6778 = vrot.slane %v6773, %v6777
      %v6779 = vlaneseq
      %v6780 = vshrl.u32 %v6779, 7
      %v6781 = vsub.s32 1, %v6780
      %v6782 = vrot.slane %v6773, %v6781
      %v6783 = vlaneseq
      %v6784 = vshrl.u32 %v6783, 7
      %v6785 = vsub.s32 2, %v6784
      %v6786 = vrot.slane %v6773, %v6785
      %v6787 = vlaneseq
      %v6788 = vshrl.u32 %v6787, 7
      %v6789 = vsub.s32 3, %v6788
      %v6790 = vrot.slane %v6773, %v6789
      %v6795 = vmul.f32 %v288, %v6778
      %v6796 = vmul.f32 %v289, %v6782
      %v6797 = vmul.f32 %v290, %v6786
      %v6798 = vmul.f32 %v291, %v6790
      %v6799 = vmul.f32 %v292, %v6778
      %v6800 = vmul.f32 %v293, %v6782
      %v6801 = vmul.f32 %v294, %v6786
      %v6802 = vmul.f32 %v295, %v6790
      %v6803 = vadd.f32 %v6795, %v6796
      %v6804 = vadd.f32 %v6803, %v6797
      %v6805 = vadd.f32 %v6804, %v6798
      %v6806 = vadd.f32 %v6805, %v6799
      %v6807 = vadd.f32 %v6806, %v6800
      %v6808 = vadd.f32 %v6807, %v6801
      %v6809 = vadd.f32 %v6808, %v6802
      %6810 = vadd.xlane.f32.xlu0 %v6809
      %v6811 = vpop.xlane.xlu0 %6810
      %v6812 = vrot.slane %v6811, 4
      %v6813 = vadd.f32 %v6811, %v6812
      %v6814 = vrot.slane %v6813, 2
      %v6815 = vadd.f32 %v6813, %v6814
      %v6816 = vrot.slane %v6815, 1
      %v6817 = vadd.f32 %v6815, %v6816
      %s6818 = vtos %v6817
      %s6819 = smul.f32 %s6818, 0.00390625
      %s6820 = sld [smem:[#allocation5 + $0x1]]
      %s6821 = sadd.f32 %s6819, %s6820
      %s6822 = smax.f32 %s6821, 0.0
      %s6823 = scalar_lea.vmem %s7, 1
      %v6824 = vld [vmem:[%s6823] ss:$2 sm:$0xf]
      %v6825 = vstv %s6822
      %v6826 = vmul.f32 %v6825, %v6824
      %v6827 = vadd.f32 %v6771, %v6826
      %v6828 = vxor.u32 %v6827, 2147483648
      %v6829 = vmul.f32 %v6828, 1.442695
      %v6830 = vpow.pop %v6829
      %v6831 = vadd.f32 %v6830, 1.0
      %v6832 = vrcp.pop %v6831
      %v6833 = vmul.f32 1.0, %v6832
      %v6834 = vmul.f32 %v288, %v6630
      %v6835 = vmul.f32 %v289, %v6632
      %v6836 = vmul.f32 %v290, %v6707
      %v6837 = vmul.f32 %v291, %v6709
      %v6838 = vmul.f32 %v292, %v6636
      %v6839 = vmul.f32 %v293, %v6638
      %v6840 = vmul.f32 %v294, %v6713
      %v6841 = vmul.f32 %v295, %v6715
      %v6843 = vlaneseq
      %v6844 = vshrl.u32 %v6843, 7
      %v6845 = vsub.s32 0, %v6844
      %v6846 = vrot.slane %v6833, %v6845
      %v6847 = vlaneseq
      %v6848 = vshrl.u32 %v6847, 7
      %v6849 = vsub.s32 1, %v6848
      %v6850 = vrot.slane %v6833, %v6849
      %v6851 = vlaneseq
      %v6852 = vshrl.u32 %v6851, 7
      %v6853 = vsub.s32 2, %v6852
      %v6854 = vrot.slane %v6833, %v6853
      %v6855 = vlaneseq
      %v6856 = vshrl.u32 %v6855, 7
      %v6857 = vsub.s32 3, %v6856
      %v6858 = vrot.slane %v6833, %v6857
      %v6863 = vmul.f32 %v6834, %v6846
      %v6864 = vmul.f32 %v6835, %v6850
      %v6865 = vmul.f32 %v6836, %v6854
      %v6866 = vmul.f32 %v6837, %v6858
      %v6867 = vmul.f32 %v6838, %v6846
      %v6868 = vmul.f32 %v6839, %v6850
      %v6869 = vmul.f32 %v6840, %v6854
      %v6870 = vmul.f32 %v6841, %v6858
      %6871 = vst [vmem:[%s287] sm:$0xff] %v6863
      %6872 = vst [vmem:[%s287 + $0x8] sm:$0xff] %v6864
      %6873 = vst [vmem:[%s287 + $0x10] sm:$0xff] %v6865
      %6874 = vst [vmem:[%s287 + $0x18] sm:$0xff] %v6866
      %6875 = vst [vmem:[%s287 + $0x20] sm:$0xff] %v6867
      %6876 = vst [vmem:[%s287 + $0x28] sm:$0xff] %v6868
      %6877 = vst [vmem:[%s287 + $0x30] sm:$0xff] %v6869
      %6878 = vst [vmem:[%s287 + $0x38] sm:$0xff] %v6870
      %p6879 = scmp.lt.s32.totalorder %s27, 1
      %s6880 = scalar_select %p6879, %s27, 1
      %s6881 = smul.addr %s6880, 8
      %s6882 = smul.addr %s6881, 8
      %s6883 = scalar_lea.vmem %s9, %s6882
      // Predicated region
      $region49: #{multimodal_feature_fuser.1} parent=47 // pred_check
        %p6884 = pneg %p197
      $region50: #{multimodal_feature_fuser.1} parent=47 // pred_check_branch
        %6886 = sbr.rel (%p6884) target = $region52
      $region51: #{multimodal_feature_fuser.1} parent=47 // pred_region
        _
      $region52: #{multimodal_feature_fuser.1} parent=47 // pred_fallthru
        _
    $region48: #{multimodal_feature_fuser.1} parent=5 // pred_fallthru
      _
    %p6887 = scmp.le.s32.totalorder 2, %s22
    // Predicated region
    $region53: #{multimodal_feature_fuser.1} parent=5 // pred_check
      %p6888 = pneg %p6887
    $region54: #{multimodal_feature_fuser.1} parent=5 // pred_check_branch
      %6890 = sbr.rel (%p6888) target = $region56
    $region55: #{multimodal_feature_fuser.1} parent=5 // pred_region
      %s6891 = ssub.s32 %s22, 2
      // Predicated region
      $region57: #{multimodal_feature_fuser.1} parent=55 // pred_check
        %p6892 = pneg %p203
      $region58: #{multimodal_feature_fuser.1} parent=55 // pred_check_branch
        %6894 = sbr.rel (%p6892) target = $region60
      $region59: #{multimodal_feature_fuser.1} parent=55 // pred_region
        %p6895 = scmp.lt.s32.totalorder %s28, 1
        %s6896 = scalar_select %p6895, %s28, 1
        %s6897 = smul.addr %s6896, 8
        %s6898 = smul.addr %s6897, 8
        %s6899 = scalar_lea.vmem %s9, %s6898
      $region60: #{multimodal_feature_fuser.1} parent=55 // pred_fallthru
        _
    $region56: #{multimodal_feature_fuser.1} parent=5 // pred_fallthru
      _
  $region6: #{multimodal_feature_fuser.1} parent=0 // loop_footer
    %s26 = sadd.s32 1, %s22
  $region7: #{multimodal_feature_fuser.1} parent=0 // loop_footer_branch
    %21 = sbr.rel target = $region3
  $region8: #{multimodal_feature_fuser.1} parent=0 // loop_exit
    _

</llo_original>
